<compile_context>
chip_gen: v5e
topology: v5e:2x2
jax: 0.10.0
libtpu: 0.0.40
codegen_flags: <defaults>
</compile_context>

<pallas_src>
import math
import jax
import jax.numpy as jnp
from jax import lax
from jax.experimental import pallas as pl
from jax.experimental.pallas import tpu as pltpu

# ---------------- configuration ----------------------------------------------
N_VOCAB = 512
D_EMBED = 128
SEQ_LEN = 16
N_HEADS = 4
N_LAYERS = 2
BATCH = 2
HEAD_DIM = D_EMBED // N_HEADS
LN_EPS = 1e-5
COMPUTE_DT = jnp.bfloat16          # MXU input dtype; accumulation stays f32


# ---------------- in-kernel helpers ------------------------------------------
def _layernorm(x, g, b):
    # x: (M, D) f32; g, b: (D,) f32
    mean = jnp.mean(x, axis=-1, keepdims=True)
    var = jnp.mean((x - mean) ** 2, axis=-1, keepdims=True)
    return (x - mean) * lax.rsqrt(var + LN_EPS) * g + b


# ---------------- fused transformer kernel -----------------------------------
def clip_fused_kernel(x_ref, mask_ref,
                      ln1g_ref, ln1b_ref, wqkv_ref, bqkv_ref, wo_ref, bo_ref,
                      ln2g_ref, ln2b_ref, w1_ref, b1_ref, w2_ref, b2_ref,
                      lnfg_ref, lnfb_ref,
                      o_ref, state_ref):
    l = pl.program_id(1)
    n_layers = pl.num_programs(1)
    Bt, S, D = x_ref.shape
    M = Bt * S
    H = N_HEADS
    Hd = D // H

    # Load the embedding output into the resident f32 residual-stream scratch
    # only on the first layer of each batch tile.
    @pl.when(l == 0)
    def _():
        state_ref[...] = x_ref[...].reshape(M, D).astype(jnp.float32)

    x = state_ref[...]                                   # (M, D) f32 residual stream

    # ---- LayerNorm 1 (f32) ----
    h = _layernorm(x, ln1g_ref[0, 0], ln1b_ref[0, 0])

    # ---- fused QKV projection: one (M, D) x (D, 3D) bf16 matmul ----
    qkv = jnp.dot(h.astype(COMPUTE_DT), wqkv_ref[0],
                  preferred_element_type=jnp.float32) + bqkv_ref[0, 0]
    scale = 1.0 / math.sqrt(Hd)
    q = qkv[:, 0 * D:1 * D] * scale                      # fold 1/sqrt(Hd) into q
    k = qkv[:, 1 * D:2 * D]
    v = qkv[:, 2 * D:3 * D]

    # Rearrange (M, D) -> (Bt*H, S, Hd) with lane-aligned head slices + cheap
    # major-dim reshapes/concat (no lane-splitting reshape, no transpose).
    def to_heads(t):
        parts = [t[:, hh * Hd:(hh + 1) * Hd].reshape(Bt, 1, S, Hd)
                 for hh in range(H)]
        return jnp.concatenate(parts, axis=1).reshape(Bt * H, S, Hd)

    q3 = to_heads(q).astype(COMPUTE_DT)
    k3 = to_heads(k).astype(COMPUTE_DT)
    v3 = to_heads(v).astype(COMPUTE_DT)

    # ---- batched causal attention (single MXU batched matmul per stage) ----
    s = jnp.einsum('bqd,bkd->bqk', q3, k3,
                   preferred_element_type=jnp.float32)   # (Bt*H, S, S) f32
    s = s + mask_ref[...]                                # additive causal mask (f32)
    s = s - jnp.max(s, axis=-1, keepdims=True)
    e = jnp.exp(s)
    p = e * pl.reciprocal(jnp.sum(e, axis=-1, keepdims=True), approx=True)

    a = jnp.einsum('bqk,bkd->bqd', p.astype(COMPUTE_DT), v3,
                   preferred_element_type=jnp.float32)   # (Bt*H, S, Hd)

    # merge heads back to (M, D) with a single lane concat, then one (M,D)x(D,D)
    a4 = a.reshape(Bt, H, S, Hd)
    merged = jnp.concatenate([a4[:, hh].reshape(M, Hd) for hh in range(H)],
                             axis=-1)                    # (M, D)
    attn = jnp.dot(merged.astype(COMPUTE_DT), wo_ref[0],
                   preferred_element_type=jnp.float32) + bo_ref[0, 0]

    # ---- LayerNorm 2 then residual add (order exactly as in the torch module) ----
    h2 = _layernorm(attn, ln2g_ref[0, 0], ln2b_ref[0, 0])
    xr = h2 + x

    # ---- MLP with quick-GELU: m * sigmoid(1.782 * m) ----
    m = jnp.dot(xr.astype(COMPUTE_DT), w1_ref[0],
                preferred_element_type=jnp.float32) + b1_ref[0, 0]
    m = m * jax.nn.sigmoid(1.782 * m)
    m = jnp.dot(m.astype(COMPUTE_DT), w2_ref[0],
                preferred_element_type=jnp.float32) + b2_ref[0, 0]

    new_state = m + xr
    state_ref[...] = new_state

    # ---- final LayerNorm folded into the last layer step ----
    @pl.when(l == n_layers - 1)
    def _():
        y = _layernorm(new_state, lnfg_ref[0], lnfb_ref[0])
        o_ref[...] = y.reshape(Bt, S, D).astype(o_ref.dtype)


def _pick_batch_tile(B, S):
    # Largest divisor of B such that Bt*S stays around the 128-row MXU sweet spot.
    target = max(1, 128 // S)
    for bt in range(min(B, target), 0, -1):
        if B % bt == 0:
            return bt
    return 1


def clip_encoder(x, params):
    B, S, D = x.shape
    L = params["w_qkv"].shape[0]
    Bt = _pick_batch_tile(B, S)
    nbt = B // Bt

    per_layer = lambda b, l: (l, 0, 0)
    per_batch = lambda b, l: (b, 0, 0)
    const2d = lambda b, l: (0, 0)

    return pl.pallas_call(
        clip_fused_kernel,
        out_shape=jax.ShapeDtypeStruct((B, S, D), jnp.float32),
        grid=(nbt, L),                                   # layer axis innermost
        in_specs=[
            pl.BlockSpec((Bt, S, D), per_batch),         # x (embedding output)
            pl.BlockSpec((S, S), const2d),               # additive causal mask
            pl.BlockSpec((1, 1, D), per_layer),          # ln1 gamma
            pl.BlockSpec((1, 1, D), per_layer),          # ln1 beta
            pl.BlockSpec((1, D, 3 * D), per_layer),      # qkv weight (bf16)
            pl.BlockSpec((1, 1, 3 * D), per_layer),      # qkv bias
            pl.BlockSpec((1, D, D), per_layer),          # out-proj weight (bf16)
            pl.BlockSpec((1, 1, D), per_layer),          # out-proj bias
            pl.BlockSpec((1, 1, D), per_layer),          # ln2 gamma
            pl.BlockSpec((1, 1, D), per_layer),          # ln2 beta
            pl.BlockSpec((1, D, 4 * D), per_layer),      # fc1 weight (bf16)
            pl.BlockSpec((1, 1, 4 * D), per_layer),      # fc1 bias
            pl.BlockSpec((1, 4 * D, D), per_layer),      # fc2 weight (bf16)
            pl.BlockSpec((1, 1, D), per_layer),          # fc2 bias
            pl.BlockSpec((1, D), const2d),               # final LN gamma
            pl.BlockSpec((1, D), const2d),               # final LN beta
        ],
        out_specs=pl.BlockSpec((Bt, S, D), per_batch),   # resident across layer axis
        scratch_shapes=[pltpu.VMEM((Bt * S, D), jnp.float32)],
        compiler_params=pltpu.CompilerParams(
            dimension_semantics=("parallel", "arbitrary"),
            vmem_limit_bytes=48 * 1024 * 1024),
    )(x, params["causal_mask"],
      params["ln1_g"], params["ln1_b"], params["w_qkv"], params["b_qkv"],
      params["w_o"], params["b_o"], params["ln2_g"], params["ln2_b"],
      params["w_fc1"], params["b_fc1"], params["w_fc2"], params["b_fc2"],
      params["final_ln_g"], params["final_ln_b"])


# ---------------- parameter init (deterministic, synthetic) ------------------
def init_params(key):
    def normal(k, shape, scale, dtype):
        return (scale * jax.random.normal(k, shape, dtype=jnp.float32)).astype(dtype)

    D, L = D_EMBED, N_LAYERS
    k_tok, k_pos, k_layers = jax.random.split(key, 3)
    s_in = 1.0 / math.sqrt(D)
    s_mid = 1.0 / math.sqrt(4 * D)

    w_qkv, w_o, w_fc1, w_fc2 = [], [], [], []
    for i in range(L):
        lk = jax.random.fold_in(k_layers, i)
        sk = jax.random.split(lk, 4)
        w_qkv.append(normal(sk[0], (D, 3 * D), s_in, COMPUTE_DT))
        w_o.append(normal(sk[1], (D, D), s_in, COMPUTE_DT))
        w_fc1.append(normal(sk[2], (D, 4 * D), s_in, COMPUTE_DT))
        w_fc2.append(normal(sk[3], (4 * D, D), s_mid, COMPUTE_DT))

    row = jnp.arange(SEQ_LEN)[:, None]
    col = jnp.arange(SEQ_LEN)[None, :]
    causal_mask = jnp.where(col > row, jnp.float32(-1e30), jnp.float32(0.0))

    return {
        "tok_emb": normal(k_tok, (N_VOCAB, D), 0.02, jnp.float32),
        "pos_emb": normal(k_pos, (SEQ_LEN, D), 0.01, jnp.float32),
        "causal_mask": causal_mask,
        "ln1_g": jnp.ones((L, 1, D), jnp.float32),
        "ln1_b": jnp.zeros((L, 1, D), jnp.float32),
        "w_qkv": jnp.stack(w_qkv),
        "b_qkv": jnp.zeros((L, 1, 3 * D), jnp.float32),
        "w_o": jnp.stack(w_o),
        "b_o": jnp.zeros((L, 1, D), jnp.float32),
        "ln2_g": jnp.ones((L, 1, D), jnp.float32),
        "ln2_b": jnp.zeros((L, 1, D), jnp.float32),
        "w_fc1": jnp.stack(w_fc1),
        "b_fc1": jnp.zeros((L, 1, 4 * D), jnp.float32),
        "w_fc2": jnp.stack(w_fc2),
        "b_fc2": jnp.zeros((L, 1, D), jnp.float32),
        "final_ln_g": jnp.ones((1, D), jnp.float32),
        "final_ln_b": jnp.zeros((1, D), jnp.float32),
    }


# ---------------- full CLIP forward -------------------------------------------
def clip_forward(tokens, params):
    tokens = tokens.astype(jnp.int32)                    # torch: .dtype(torch.long)
    # TODO(synk): embedding table gather stays in plain JAX (no clean tiled
    # Pallas form at this size); everything downstream is a single fused kernel.
    state = jnp.take(params["tok_emb"], tokens, axis=0) + params["pos_emb"][None]
    return clip_encoder(state.astype(jnp.float32), params)


if __name__ == "__main__":
    key = jax.random.PRNGKey(0)
    pkey, tkey = jax.random.split(key)
    params = init_params(pkey)
    tokens = jax.random.randint(tkey, (BATCH, SEQ_LEN), 0, N_VOCAB, dtype=jnp.int32)

    out = jax.jit(clip_forward)(tokens, params)
    jax.block_until_ready(out)
    assert out.shape == (BATCH, SEQ_LEN, D_EMBED)
    assert out.dtype == jnp.float32
    assert bool(jnp.all(jnp.isfinite(out)))
    print("KERNEL_OK")
</pallas_src>

<mosaic_0001>
module attributes {stable_mosaic.version = 11 : i64} {
  func.func @clip_fused_kernel(%arg0: i32, %arg1: i32, %arg2: memref<2x16x128xf32, #tpu.memory_space<vmem>>, %arg3: memref<16x16xf32, #tpu.memory_space<vmem>>, %arg4: memref<1x1x128xf32, #tpu.memory_space<vmem>>, %arg5: memref<1x1x128xf32, #tpu.memory_space<vmem>>, %arg6: memref<1x128x384xbf16, #tpu.memory_space<vmem>>, %arg7: memref<1x1x384xf32, #tpu.memory_space<vmem>>, %arg8: memref<1x128x128xbf16, #tpu.memory_space<vmem>>, %arg9: memref<1x1x128xf32, #tpu.memory_space<vmem>>, %arg10: memref<1x1x128xf32, #tpu.memory_space<vmem>>, %arg11: memref<1x1x128xf32, #tpu.memory_space<vmem>>, %arg12: memref<1x128x512xbf16, #tpu.memory_space<vmem>>, %arg13: memref<1x1x512xf32, #tpu.memory_space<vmem>>, %arg14: memref<1x512x128xbf16, #tpu.memory_space<vmem>>, %arg15: memref<1x1x128xf32, #tpu.memory_space<vmem>>, %arg16: memref<1x128xf32, #tpu.memory_space<vmem>>, %arg17: memref<1x128xf32, #tpu.memory_space<vmem>>, %arg18: memref<2x16x128xf32, #tpu.memory_space<vmem>>, %arg19: memref<32x128xf32, #tpu.memory_space<vmem>>) attributes {dimension_semantics = [#tpu.dimension_semantics<parallel>, #tpu.dimension_semantics<arbitrary>], iteration_bounds = array<i64: 1, 2>, scalar_prefetch = 0 : i64, scratch_operands = 1 : i64, tpu.core_type = #tpu.core_type<tc>, window_params = [{transform_indices = @transform_0, window_bounds = array<i64: 2, 16, 128>}, {pipeline_mode = #tpu.pipeline_mode<synchronous>, transform_indices = @transform_1, window_bounds = array<i64: 16, 16>}, {transform_indices = @transform_2, window_bounds = array<i64: 1, 1, 128>}, {transform_indices = @transform_3, window_bounds = array<i64: 1, 1, 128>}, {transform_indices = @transform_4, window_bounds = array<i64: 1, 128, 384>}, {transform_indices = @transform_5, window_bounds = array<i64: 1, 1, 384>}, {transform_indices = @transform_6, window_bounds = array<i64: 1, 128, 128>}, {transform_indices = @transform_7, window_bounds = array<i64: 1, 1, 128>}, {transform_indices = @transform_8, window_bounds = array<i64: 1, 1, 128>}, {transform_indices = @transform_9, window_bounds = array<i64: 1, 1, 128>}, {transform_indices = @transform_10, window_bounds = array<i64: 1, 128, 512>}, {transform_indices = @transform_11, window_bounds = array<i64: 1, 1, 512>}, {transform_indices = @transform_12, window_bounds = array<i64: 1, 512, 128>}, {transform_indices = @transform_13, window_bounds = array<i64: 1, 1, 128>}, {pipeline_mode = #tpu.pipeline_mode<synchronous>, transform_indices = @transform_14, window_bounds = array<i64: 1, 128>}, {pipeline_mode = #tpu.pipeline_mode<synchronous>, transform_indices = @transform_15, window_bounds = array<i64: 1, 128>}, {transform_indices = @transform_16, window_bounds = array<i64: 2, 16, 128>}]} {
    %c0_i32 = arith.constant 0 : i32
    %0 = arith.cmpi eq, %arg1, %c0_i32 : i32
    %1 = arith.extui %0 : i1 to i32
    %c0_i32_0 = arith.constant 0 : i32
    %2 = arith.cmpi ne, %1, %c0_i32_0 : i32
    scf.if %2 {
      %c0_63 = arith.constant 0 : index
      %c0_64 = arith.constant 0 : index
      %c0_65 = arith.constant 0 : index
      %179 = vector.load %arg2[%c0_63, %c0_64, %c0_65] : memref<2x16x128xf32, #tpu.memory_space<vmem>>, vector<2x16x128xf32>
      %180 = vector.shape_cast %179 : vector<2x16x128xf32> to vector<32x128xf32>
      %c0_66 = arith.constant 0 : index
      %c0_67 = arith.constant 0 : index
      %181 = vector.load %arg19[%c0_66, %c0_67] : memref<32x128xf32, #tpu.memory_space<vmem>>, vector<32x128xf32>
      tpu.vector_store %arg19[%c0_66, %c0_67], %180 {strides = array<i32>} : memref<32x128xf32, #tpu.memory_space<vmem>>, vector<32x128xf32>,
    } else {
    }
    %c0 = arith.constant 0 : index
    %c0_1 = arith.constant 0 : index
    %3 = vector.load %arg19[%c0, %c0_1] : memref<32x128xf32, #tpu.memory_space<vmem>>, vector<32x128xf32>
    %c0_2 = arith.constant 0 : index
    %c0_3 = arith.constant 0 : index
    %c0_4 = arith.constant 0 : index
    %4 = vector.load %arg4[%c0_2, %c0_3, %c0_4] : memref<1x1x128xf32, #tpu.memory_space<vmem>>, vector<1x1x128xf32>
    %5 = vector.shape_cast %4 : vector<1x1x128xf32> to vector<128xf32>
    %c0_5 = arith.constant 0 : index
    %c0_6 = arith.constant 0 : index
    %c0_7 = arith.constant 0 : index
    %6 = vector.load %arg5[%c0_5, %c0_6, %c0_7] : memref<1x1x128xf32, #tpu.memory_space<vmem>>, vector<1x1x128xf32>
    %7 = vector.shape_cast %6 : vector<1x1x128xf32> to vector<128xf32>
    %cst = arith.constant dense<0.000000e+00> : vector<32xf32>
    %8 = vector.multi_reduction <add>, %3, %cst [1] : vector<32x128xf32> to vector<32xf32>
    %9 = vector.shape_cast %8 : vector<32xf32> to vector<32x1xf32>
    %cst_8 = arith.constant 1.280000e+02 : f32
    %10 = vector.broadcast %cst_8 : f32 to vector<32x1xf32>
    %11 = arith.divf %9, %10 : vector<32x1xf32>
    %12 = vector.broadcast %11 : vector<32x1xf32> to vector<32x128xf32>
    %13 = arith.subf %3, %12 : vector<32x128xf32>
    %14 = arith.mulf %13, %13 : vector<32x128xf32>
    %cst_9 = arith.constant dense<0.000000e+00> : vector<32xf32>
    %15 = vector.multi_reduction <add>, %14, %cst_9 [1] : vector<32x128xf32> to vector<32xf32>
    %16 = vector.shape_cast %15 : vector<32xf32> to vector<32x1xf32>
    %cst_10 = arith.constant 1.280000e+02 : f32
    %17 = vector.broadcast %cst_10 : f32 to vector<32x1xf32>
    %18 = arith.divf %16, %17 : vector<32x1xf32>
    %19 = vector.broadcast %11 : vector<32x1xf32> to vector<32x128xf32>
    %20 = arith.subf %3, %19 : vector<32x128xf32>
    %cst_11 = arith.constant 9.99999974E-6 : f32
    %21 = vector.broadcast %cst_11 : f32 to vector<32x1xf32>
    %22 = arith.addf %18, %21 : vector<32x1xf32>
    %23 = math.rsqrt %22 : vector<32x1xf32>
    %24 = vector.broadcast %23 : vector<32x1xf32> to vector<32x128xf32>
    %25 = arith.mulf %20, %24 : vector<32x128xf32>
    %26 = vector.shape_cast %5 : vector<128xf32> to vector<1x128xf32>
    %27 = vector.broadcast %26 : vector<1x128xf32> to vector<32x128xf32>
    %28 = arith.mulf %25, %27 : vector<32x128xf32>
    %29 = vector.shape_cast %7 : vector<128xf32> to vector<1x128xf32>
    %30 = vector.broadcast %29 : vector<1x128xf32> to vector<32x128xf32>
    %31 = arith.addf %28, %30 : vector<32x128xf32>
    %32 = arith.truncf %31 : vector<32x128xf32> to vector<32x128xbf16>
    %c0_12 = arith.constant 0 : index
    %c0_13 = arith.constant 0 : index
    %c0_14 = arith.constant 0 : index
    %33 = vector.load %arg6[%c0_12, %c0_13, %c0_14] : memref<1x128x384xbf16, #tpu.memory_space<vmem>>, vector<1x128x384xbf16>
    %34 = vector.shape_cast %33 : vector<1x128x384xbf16> to vector<128x384xbf16>
    %cst_15 = arith.constant dense<0.000000e+00> : vector<32x384xf32>
    %35 = tpu.matmul %32, %34, %cst_15 {dimension_numbers = #tpu.dot_dimension_numbers<[1], [0], [0], [1], [0, 0, 1, 1], [], []>} : vector<32x128xbf16>, vector<128x384xbf16>, vector<32x384xf32> -> vector<32x384xf32>
    %c0_16 = arith.constant 0 : index
    %c0_17 = arith.constant 0 : index
    %c0_18 = arith.constant 0 : index
    %36 = vector.load %arg7[%c0_16, %c0_17, %c0_18] : memref<1x1x384xf32, #tpu.memory_space<vmem>>, vector<1x1x384xf32>
    %37 = vector.shape_cast %36 : vector<1x1x384xf32> to vector<384xf32>
    %38 = vector.shape_cast %37 : vector<384xf32> to vector<1x384xf32>
    %39 = vector.broadcast %38 : vector<1x384xf32> to vector<32x384xf32>
    %40 = arith.addf %35, %39 : vector<32x384xf32>
    %41 = vector.extract_strided_slice %40 {offsets = [0, 0], sizes = [32, 128], strides = [1, 1]} : vector<32x384xf32> to vector<32x128xf32>
    %cst_19 = arith.constant 0.176776692 : f32
    %42 = vector.broadcast %cst_19 : f32 to vector<32x128xf32>
    %43 = arith.mulf %41, %42 : vector<32x128xf32>
    %44 = vector.extract_strided_slice %40 {offsets = [0, 128], sizes = [32, 128], strides = [1, 1]} : vector<32x384xf32> to vector<32x128xf32>
    %45 = vector.extract_strided_slice %40 {offsets = [0, 256], sizes = [32, 128], strides = [1, 1]} : vector<32x384xf32> to vector<32x128xf32>
    %46 = vector.extract_strided_slice %43 {offsets = [0, 0], sizes = [32, 32], strides = [1, 1]} : vector<32x128xf32> to vector<32x32xf32>
    %47 = vector.shape_cast %46 : vector<32x32xf32> to vector<2x1x16x32xf32>
    %48 = vector.extract_strided_slice %43 {offsets = [0, 32], sizes = [32, 32], strides = [1, 1]} : vector<32x128xf32> to vector<32x32xf32>
    %49 = vector.shape_cast %48 : vector<32x32xf32> to vector<2x1x16x32xf32>
    %50 = vector.extract_strided_slice %43 {offsets = [0, 64], sizes = [32, 32], strides = [1, 1]} : vector<32x128xf32> to vector<32x32xf32>
    %51 = vector.shape_cast %50 : vector<32x32xf32> to vector<2x1x16x32xf32>
    %52 = vector.extract_strided_slice %43 {offsets = [0, 96], sizes = [32, 32], strides = [1, 1]} : vector<32x128xf32> to vector<32x32xf32>
    %53 = vector.shape_cast %52 : vector<32x32xf32> to vector<2x1x16x32xf32>
    %54 = tpu.concatenate %47, %49, %51, %53 in 1 : vector<2x1x16x32xf32>, vector<2x1x16x32xf32>, vector<2x1x16x32xf32>, vector<2x1x16x32xf32> -> vector<2x4x16x32xf32>
    %55 = vector.shape_cast %54 : vector<2x4x16x32xf32> to vector<8x16x32xf32>
    %56 = arith.truncf %55 : vector<8x16x32xf32> to vector<8x16x32xbf16>
    %57 = vector.extract_strided_slice %44 {offsets = [0, 0], sizes = [32, 32], strides = [1, 1]} : vector<32x128xf32> to vector<32x32xf32>
    %58 = vector.shape_cast %57 : vector<32x32xf32> to vector<2x1x16x32xf32>
    %59 = vector.extract_strided_slice %44 {offsets = [0, 32], sizes = [32, 32], strides = [1, 1]} : vector<32x128xf32> to vector<32x32xf32>
    %60 = vector.shape_cast %59 : vector<32x32xf32> to vector<2x1x16x32xf32>
    %61 = vector.extract_strided_slice %44 {offsets = [0, 64], sizes = [32, 32], strides = [1, 1]} : vector<32x128xf32> to vector<32x32xf32>
    %62 = vector.shape_cast %61 : vector<32x32xf32> to vector<2x1x16x32xf32>
    %63 = vector.extract_strided_slice %44 {offsets = [0, 96], sizes = [32, 32], strides = [1, 1]} : vector<32x128xf32> to vector<32x32xf32>
    %64 = vector.shape_cast %63 : vector<32x32xf32> to vector<2x1x16x32xf32>
    %65 = tpu.concatenate %58, %60, %62, %64 in 1 : vector<2x1x16x32xf32>, vector<2x1x16x32xf32>, vector<2x1x16x32xf32>, vector<2x1x16x32xf32> -> vector<2x4x16x32xf32>
    %66 = vector.shape_cast %65 : vector<2x4x16x32xf32> to vector<8x16x32xf32>
    %67 = arith.truncf %66 : vector<8x16x32xf32> to vector<8x16x32xbf16>
    %68 = vector.extract_strided_slice %45 {offsets = [0, 0], sizes = [32, 32], strides = [1, 1]} : vector<32x128xf32> to vector<32x32xf32>
    %69 = vector.shape_cast %68 : vector<32x32xf32> to vector<2x1x16x32xf32>
    %70 = vector.extract_strided_slice %45 {offsets = [0, 32], sizes = [32, 32], strides = [1, 1]} : vector<32x128xf32> to vector<32x32xf32>
    %71 = vector.shape_cast %70 : vector<32x32xf32> to vector<2x1x16x32xf32>
    %72 = vector.extract_strided_slice %45 {offsets = [0, 64], sizes = [32, 32], strides = [1, 1]} : vector<32x128xf32> to vector<32x32xf32>
    %73 = vector.shape_cast %72 : vector<32x32xf32> to vector<2x1x16x32xf32>
    %74 = vector.extract_strided_slice %45 {offsets = [0, 96], sizes = [32, 32], strides = [1, 1]} : vector<32x128xf32> to vector<32x32xf32>
    %75 = vector.shape_cast %74 : vector<32x32xf32> to vector<2x1x16x32xf32>
    %76 = tpu.concatenate %69, %71, %73, %75 in 1 : vector<2x1x16x32xf32>, vector<2x1x16x32xf32>, vector<2x1x16x32xf32>, vector<2x1x16x32xf32> -> vector<2x4x16x32xf32>
    %77 = vector.shape_cast %76 : vector<2x4x16x32xf32> to vector<8x16x32xf32>
    %78 = arith.truncf %77 : vector<8x16x32xf32> to vector<8x16x32xbf16>
    "tpu.trace_start"() <{level = 10 : i32, message = "bqd,bkd->bqk"}> : () -> ()
    %cst_20 = arith.constant dense<0.000000e+00> : vector<8x16x16xf32>
    %79 = tpu.matmul %56, %67, %cst_20 {dimension_numbers = #tpu.dot_dimension_numbers<[2], [2], [1], [1], [0, 0, 0, 1, 1, 1], [0], [0]>} : vector<8x16x32xbf16>, vector<8x16x32xbf16>, vector<8x16x16xf32> -> vector<8x16x16xf32>
    "tpu.trace_stop"() : () -> ()
    %c0_21 = arith.constant 0 : index
    %c0_22 = arith.constant 0 : index
    %80 = vector.load %arg3[%c0_21, %c0_22] : memref<16x16xf32, #tpu.memory_space<vmem>>, vector<16x16xf32>
    %81 = vector.shape_cast %80 : vector<16x16xf32> to vector<1x16x16xf32>
    %82 = vector.broadcast %81 : vector<1x16x16xf32> to vector<8x16x16xf32>
    %83 = arith.addf %79, %82 : vector<8x16x16xf32>
    %cst_23 = arith.constant dense<0xFF800000> : vector<8x16xf32>
    %84 = vector.multi_reduction <maximumf>, %83, %cst_23 [2] : vector<8x16x16xf32> to vector<8x16xf32>
    %85 = vector.shape_cast %84 : vector<8x16xf32> to vector<8x16x1xf32>
    %86 = vector.broadcast %85 : vector<8x16x1xf32> to vector<8x16x16xf32>
    %87 = arith.subf %83, %86 : vector<8x16x16xf32>
    %88 = math.exp %87 : vector<8x16x16xf32>
    %cst_24 = arith.constant dense<0.000000e+00> : vector<8x16xf32>
    %89 = vector.multi_reduction <add>, %88, %cst_24 [2] : vector<8x16x16xf32> to vector<8x16xf32>
    %90 = vector.shape_cast %89 : vector<8x16xf32> to vector<8x16x1xf32>
    %91 = tpu.reciprocal %90 {approx = true} : vector<8x16x1xf32> -> vector<8x16x1xf32>
    %92 = vector.broadcast %91 : vector<8x16x1xf32> to vector<8x16x16xf32>
    %93 = arith.mulf %88, %92 : vector<8x16x16xf32>
    %94 = arith.truncf %93 : vector<8x16x16xf32> to vector<8x16x16xbf16>
    "tpu.trace_start"() <{level = 10 : i32, message = "bqk,bkd->bqd"}> : () -> ()
    %cst_25 = arith.constant dense<0.000000e+00> : vector<8x16x32xf32>
    %95 = tpu.matmul %94, %78, %cst_25 {dimension_numbers = #tpu.dot_dimension_numbers<[2], [1], [1], [2], [0, 0, 0, 1, 1, 2], [0], [0]>} : vector<8x16x16xbf16>, vector<8x16x32xbf16>, vector<8x16x32xf32> -> vector<8x16x32xf32>
    "tpu.trace_stop"() : () -> ()
    %96 = vector.shape_cast %95 : vector<8x16x32xf32> to vector<2x4x16x32xf32>
    %97 = vector.extract_strided_slice %96 {offsets = [0, 0, 0, 0], sizes = [2, 1, 16, 32], strides = [1, 1, 1, 1]} : vector<2x4x16x32xf32> to vector<2x1x16x32xf32>
    %98 = vector.shape_cast %97 : vector<2x1x16x32xf32> to vector<2x16x32xf32>
    %99 = vector.shape_cast %98 : vector<2x16x32xf32> to vector<32x32xf32>
    %100 = vector.extract_strided_slice %96 {offsets = [0, 1, 0, 0], sizes = [2, 1, 16, 32], strides = [1, 1, 1, 1]} : vector<2x4x16x32xf32> to vector<2x1x16x32xf32>
    %101 = vector.shape_cast %100 : vector<2x1x16x32xf32> to vector<2x16x32xf32>
    %102 = vector.shape_cast %101 : vector<2x16x32xf32> to vector<32x32xf32>
    %103 = vector.extract_strided_slice %96 {offsets = [0, 2, 0, 0], sizes = [2, 1, 16, 32], strides = [1, 1, 1, 1]} : vector<2x4x16x32xf32> to vector<2x1x16x32xf32>
    %104 = vector.shape_cast %103 : vector<2x1x16x32xf32> to vector<2x16x32xf32>
    %105 = vector.shape_cast %104 : vector<2x16x32xf32> to vector<32x32xf32>
    %106 = vector.extract_strided_slice %96 {offsets = [0, 3, 0, 0], sizes = [2, 1, 16, 32], strides = [1, 1, 1, 1]} : vector<2x4x16x32xf32> to vector<2x1x16x32xf32>
    %107 = vector.shape_cast %106 : vector<2x1x16x32xf32> to vector<2x16x32xf32>
    %108 = vector.shape_cast %107 : vector<2x16x32xf32> to vector<32x32xf32>
    %109 = tpu.concatenate %99, %102, %105, %108 in 1 : vector<32x32xf32>, vector<32x32xf32>, vector<32x32xf32>, vector<32x32xf32> -> vector<32x128xf32>
    %110 = arith.truncf %109 : vector<32x128xf32> to vector<32x128xbf16>
    %c0_26 = arith.constant 0 : index
    %c0_27 = arith.constant 0 : index
    %c0_28 = arith.constant 0 : index
    %111 = vector.load %arg8[%c0_26, %c0_27, %c0_28] : memref<1x128x128xbf16, #tpu.memory_space<vmem>>, vector<1x128x128xbf16>
    %112 = vector.shape_cast %111 : vector<1x128x128xbf16> to vector<128x128xbf16>
    %cst_29 = arith.constant dense<0.000000e+00> : vector<32x128xf32>
    %113 = tpu.matmul %110, %112, %cst_29 {dimension_numbers = #tpu.dot_dimension_numbers<[1], [0], [0], [1], [0, 0, 1, 1], [], []>} : vector<32x128xbf16>, vector<128x128xbf16>, vector<32x128xf32> -> vector<32x128xf32>
    %c0_30 = arith.constant 0 : index
    %c0_31 = arith.constant 0 : index
    %c0_32 = arith.constant 0 : index
    %114 = vector.load %arg9[%c0_30, %c0_31, %c0_32] : memref<1x1x128xf32, #tpu.memory_space<vmem>>, vector<1x1x128xf32>
    %115 = vector.shape_cast %114 : vector<1x1x128xf32> to vector<128xf32>
    %116 = vector.shape_cast %115 : vector<128xf32> to vector<1x128xf32>
    %117 = vector.broadcast %116 : vector<1x128xf32> to vector<32x128xf32>
    %118 = arith.addf %113, %117 : vector<32x128xf32>
    %c0_33 = arith.constant 0 : index
    %c0_34 = arith.constant 0 : index
    %c0_35 = arith.constant 0 : index
    %119 = vector.load %arg10[%c0_33, %c0_34, %c0_35] : memref<1x1x128xf32, #tpu.memory_space<vmem>>, vector<1x1x128xf32>
    %120 = vector.shape_cast %119 : vector<1x1x128xf32> to vector<128xf32>
    %c0_36 = arith.constant 0 : index
    %c0_37 = arith.constant 0 : index
    %c0_38 = arith.constant 0 : index
    %121 = vector.load %arg11[%c0_36, %c0_37, %c0_38] : memref<1x1x128xf32, #tpu.memory_space<vmem>>, vector<1x1x128xf32>
    %122 = vector.shape_cast %121 : vector<1x1x128xf32> to vector<128xf32>
    %cst_39 = arith.constant dense<0.000000e+00> : vector<32xf32>
    %123 = vector.multi_reduction <add>, %118, %cst_39 [1] : vector<32x128xf32> to vector<32xf32>
    %124 = vector.shape_cast %123 : vector<32xf32> to vector<32x1xf32>
    %cst_40 = arith.constant 1.280000e+02 : f32
    %125 = vector.broadcast %cst_40 : f32 to vector<32x1xf32>
    %126 = arith.divf %124, %125 : vector<32x1xf32>
    %127 = vector.broadcast %126 : vector<32x1xf32> to vector<32x128xf32>
    %128 = arith.subf %118, %127 : vector<32x128xf32>
    %129 = arith.mulf %128, %128 : vector<32x128xf32>
    %cst_41 = arith.constant dense<0.000000e+00> : vector<32xf32>
    %130 = vector.multi_reduction <add>, %129, %cst_41 [1] : vector<32x128xf32> to vector<32xf32>
    %131 = vector.shape_cast %130 : vector<32xf32> to vector<32x1xf32>
    %cst_42 = arith.constant 1.280000e+02 : f32
    %132 = vector.broadcast %cst_42 : f32 to vector<32x1xf32>
    %133 = arith.divf %131, %132 : vector<32x1xf32>
    %134 = vector.broadcast %126 : vector<32x1xf32> to vector<32x128xf32>
    %135 = arith.subf %118, %134 : vector<32x128xf32>
    %cst_43 = arith.constant 9.99999974E-6 : f32
    %136 = vector.broadcast %cst_43 : f32 to vector<32x1xf32>
    %137 = arith.addf %133, %136 : vector<32x1xf32>
    %138 = math.rsqrt %137 : vector<32x1xf32>
    %139 = vector.broadcast %138 : vector<32x1xf32> to vector<32x128xf32>
    %140 = arith.mulf %135, %139 : vector<32x128xf32>
    %141 = vector.shape_cast %120 : vector<128xf32> to vector<1x128xf32>
    %142 = vector.broadcast %141 : vector<1x128xf32> to vector<32x128xf32>
    %143 = arith.mulf %140, %142 : vector<32x128xf32>
    %144 = vector.shape_cast %122 : vector<128xf32> to vector<1x128xf32>
    %145 = vector.broadcast %144 : vector<1x128xf32> to vector<32x128xf32>
    %146 = arith.addf %143, %145 : vector<32x128xf32>
    %147 = arith.addf %146, %3 : vector<32x128xf32>
    %148 = arith.truncf %147 : vector<32x128xf32> to vector<32x128xbf16>
    %c0_44 = arith.constant 0 : index
    %c0_45 = arith.constant 0 : index
    %c0_46 = arith.constant 0 : index
    %149 = vector.load %arg12[%c0_44, %c0_45, %c0_46] : memref<1x128x512xbf16, #tpu.memory_space<vmem>>, vector<1x128x512xbf16>
    %150 = vector.shape_cast %149 : vector<1x128x512xbf16> to vector<128x512xbf16>
    %cst_47 = arith.constant dense<0.000000e+00> : vector<32x512xf32>
    %151 = tpu.matmul %148, %150, %cst_47 {dimension_numbers = #tpu.dot_dimension_numbers<[1], [0], [0], [1], [0, 0, 1, 1], [], []>} : vector<32x128xbf16>, vector<128x512xbf16>, vector<32x512xf32> -> vector<32x512xf32>
    %c0_48 = arith.constant 0 : index
    %c0_49 = arith.constant 0 : index
    %c0_50 = arith.constant 0 : index
    %152 = vector.load %arg13[%c0_48, %c0_49, %c0_50] : memref<1x1x512xf32, #tpu.memory_space<vmem>>, vector<1x1x512xf32>
    %153 = vector.shape_cast %152 : vector<1x1x512xf32> to vector<512xf32>
    %154 = vector.shape_cast %153 : vector<512xf32> to vector<1x512xf32>
    %155 = vector.broadcast %154 : vector<1x512xf32> to vector<32x512xf32>
    %156 = arith.addf %151, %155 : vector<32x512xf32>
    %cst_51 = arith.constant 1.782000e+00 : f32
    %157 = vector.broadcast %cst_51 : f32 to vector<32x512xf32>
    %158 = arith.mulf %157, %156 : vector<32x512xf32>
    %159 = arith.negf %158 : vector<32x512xf32>
    %160 = math.exp %159 : vector<32x512xf32>
    %cst_52 = arith.constant 1.000000e+00 : f32
    %161 = vector.broadcast %cst_52 : f32 to vector<32x512xf32>
    %162 = arith.addf %161, %160 : vector<32x512xf32>
    %163 = arith.divf %161, %162 : vector<32x512xf32>
    %164 = arith.mulf %156, %163 : vector<32x512xf32>
    %165 = arith.truncf %164 : vector<32x512xf32> to vector<32x512xbf16>
    %c0_53 = arith.constant 0 : index
    %c0_54 = arith.constant 0 : index
    %c0_55 = arith.constant 0 : index
    %166 = vector.load %arg14[%c0_53, %c0_54, %c0_55] : memref<1x512x128xbf16, #tpu.memory_space<vmem>>, vector<1x512x128xbf16>
    %167 = vector.shape_cast %166 : vector<1x512x128xbf16> to vector<512x128xbf16>
    %cst_56 = arith.constant dense<0.000000e+00> : vector<32x128xf32>
    %168 = tpu.matmul %165, %167, %cst_56 {dimension_numbers = #tpu.dot_dimension_numbers<[1], [0], [0], [1], [0, 0, 1, 1], [], []>} : vector<32x512xbf16>, vector<512x128xbf16>, vector<32x128xf32> -> vector<32x128xf32>
    %c0_57 = arith.constant 0 : index
    %c0_58 = arith.constant 0 : index
    %c0_59 = arith.constant 0 : index
    %169 = vector.load %arg15[%c0_57, %c0_58, %c0_59] : memref<1x1x128xf32, #tpu.memory_space<vmem>>, vector<1x1x128xf32>
    %170 = vector.shape_cast %169 : vector<1x1x128xf32> to vector<128xf32>
    %171 = vector.shape_cast %170 : vector<128xf32> to vector<1x128xf32>
    %172 = vector.broadcast %171 : vector<1x128xf32> to vector<32x128xf32>
    %173 = arith.addf %168, %172 : vector<32x128xf32>
    %174 = arith.addf %173, %147 : vector<32x128xf32>
    %c0_60 = arith.constant 0 : index
    %c0_61 = arith.constant 0 : index
    %175 = vector.load %arg19[%c0_60, %c0_61] : memref<32x128xf32, #tpu.memory_space<vmem>>, vector<32x128xf32>
    tpu.vector_store %arg19[%c0_60, %c0_61], %174 {strides = array<i32>} : memref<32x128xf32, #tpu.memory_space<vmem>>, vector<32x128xf32>,
    %c1_i32 = arith.constant 1 : i32
    %176 = arith.cmpi eq, %arg1, %c1_i32 : i32
    %177 = arith.extui %176 : i1 to i32
    %c0_i32_62 = arith.constant 0 : i32
    %178 = arith.cmpi ne, %177, %c0_i32_62 : i32
    scf.if %178 {
      %c0_63 = arith.constant 0 : index
      %c0_64 = arith.constant 0 : index
      %179 = vector.load %arg16[%c0_63, %c0_64] : memref<1x128xf32, #tpu.memory_space<vmem>>, vector<1x128xf32>
      %180 = vector.shape_cast %179 : vector<1x128xf32> to vector<128xf32>
      %c0_65 = arith.constant 0 : index
      %c0_66 = arith.constant 0 : index
      %181 = vector.load %arg17[%c0_65, %c0_66] : memref<1x128xf32, #tpu.memory_space<vmem>>, vector<1x128xf32>
      %182 = vector.shape_cast %181 : vector<1x128xf32> to vector<128xf32>
      %cst_67 = arith.constant dense<0.000000e+00> : vector<32xf32>
      %183 = vector.multi_reduction <add>, %174, %cst_67 [1] : vector<32x128xf32> to vector<32xf32>
      %184 = vector.shape_cast %183 : vector<32xf32> to vector<32x1xf32>
      %cst_68 = arith.constant 1.280000e+02 : f32
      %185 = vector.broadcast %cst_68 : f32 to vector<32x1xf32>
      %186 = arith.divf %184, %185 : vector<32x1xf32>
      %187 = vector.broadcast %186 : vector<32x1xf32> to vector<32x128xf32>
      %188 = arith.subf %174, %187 : vector<32x128xf32>
      %189 = arith.mulf %188, %188 : vector<32x128xf32>
      %cst_69 = arith.constant dense<0.000000e+00> : vector<32xf32>
      %190 = vector.multi_reduction <add>, %189, %cst_69 [1] : vector<32x128xf32> to vector<32xf32>
      %191 = vector.shape_cast %190 : vector<32xf32> to vector<32x1xf32>
      %cst_70 = arith.constant 1.280000e+02 : f32
      %192 = vector.broadcast %cst_70 : f32 to vector<32x1xf32>
      %193 = arith.divf %191, %192 : vector<32x1xf32>
      %194 = vector.broadcast %186 : vector<32x1xf32> to vector<32x128xf32>
      %195 = arith.subf %174, %194 : vector<32x128xf32>
      %cst_71 = arith.constant 9.99999974E-6 : f32
      %196 = vector.broadcast %cst_71 : f32 to vector<32x1xf32>
      %197 = arith.addf %193, %196 : vector<32x1xf32>
      %198 = math.rsqrt %197 : vector<32x1xf32>
      %199 = vector.broadcast %198 : vector<32x1xf32> to vector<32x128xf32>
      %200 = arith.mulf %195, %199 : vector<32x128xf32>
      %201 = vector.shape_cast %180 : vector<128xf32> to vector<1x128xf32>
      %202 = vector.broadcast %201 : vector<1x128xf32> to vector<32x128xf32>
      %203 = arith.mulf %200, %202 : vector<32x128xf32>
      %204 = vector.shape_cast %182 : vector<128xf32> to vector<1x128xf32>
      %205 = vector.broadcast %204 : vector<1x128xf32> to vector<32x128xf32>
      %206 = arith.addf %203, %205 : vector<32x128xf32>
      %207 = vector.shape_cast %206 : vector<32x128xf32> to vector<2x16x128xf32>
      %c0_72 = arith.constant 0 : index
      %c0_73 = arith.constant 0 : index
      %c0_74 = arith.constant 0 : index
      %208 = vector.load %arg18[%c0_72, %c0_73, %c0_74] : memref<2x16x128xf32, #tpu.memory_space<vmem>>, vector<2x16x128xf32>
      tpu.vector_store %arg18[%c0_72, %c0_73, %c0_74], %207 {strides = array<i32>} : memref<2x16x128xf32, #tpu.memory_space<vmem>>, vector<2x16x128xf32>,
    } else {
    }
    return
  }
  func.func @transform_0(%arg0: i32, %arg1: i32) -> (i32, i32, i32) {
    %c0_i32 = arith.constant 0 : i32
    %c0_i32_0 = arith.constant 0 : i32
    %c0_i32_1 = arith.constant 0 : i32
    return %arg0, %c0_i32, %c0_i32_0 : i32, i32, i32
  }
  func.func @transform_1(%arg0: i32, %arg1: i32) -> (i32, i32) {
    %c0_i32 = arith.constant 0 : i32
    %c0_i32_0 = arith.constant 0 : i32
    %c0_i32_1 = arith.constant 0 : i32
    return %c0_i32, %c0_i32_0 : i32, i32
  }
  func.func @transform_2(%arg0: i32, %arg1: i32) -> (i32, i32, i32) {
    %c0_i32 = arith.constant 0 : i32
    %c0_i32_0 = arith.constant 0 : i32
    %c0_i32_1 = arith.constant 0 : i32
    return %arg1, %c0_i32, %c0_i32_0 : i32, i32, i32
  }
  func.func @transform_3(%arg0: i32, %arg1: i32) -> (i32, i32, i32) {
    %c0_i32 = arith.constant 0 : i32
    %c0_i32_0 = arith.constant 0 : i32
    %c0_i32_1 = arith.constant 0 : i32
    return %arg1, %c0_i32, %c0_i32_0 : i32, i32, i32
  }
  func.func @transform_4(%arg0: i32, %arg1: i32) -> (i32, i32, i32) {
    %c0_i32 = arith.constant 0 : i32
    %c0_i32_0 = arith.constant 0 : i32
    %c0_i32_1 = arith.constant 0 : i32
    return %arg1, %c0_i32, %c0_i32_0 : i32, i32, i32
  }
  func.func @transform_5(%arg0: i32, %arg1: i32) -> (i32, i32, i32) {
    %c0_i32 = arith.constant 0 : i32
    %c0_i32_0 = arith.constant 0 : i32
    %c0_i32_1 = arith.constant 0 : i32
    return %arg1, %c0_i32, %c0_i32_0 : i32, i32, i32
  }
  func.func @transform_6(%arg0: i32, %arg1: i32) -> (i32, i32, i32) {
    %c0_i32 = arith.constant 0 : i32
    %c0_i32_0 = arith.constant 0 : i32
    %c0_i32_1 = arith.constant 0 : i32
    return %arg1, %c0_i32, %c0_i32_0 : i32, i32, i32
  }
  func.func @transform_7(%arg0: i32, %arg1: i32) -> (i32, i32, i32) {
    %c0_i32 = arith.constant 0 : i32
    %c0_i32_0 = arith.constant 0 : i32
    %c0_i32_1 = arith.constant 0 : i32
    return %arg1, %c0_i32, %c0_i32_0 : i32, i32, i32
  }
  func.func @transform_8(%arg0: i32, %arg1: i32) -> (i32, i32, i32) {
    %c0_i32 = arith.constant 0 : i32
    %c0_i32_0 = arith.constant 0 : i32
    %c0_i32_1 = arith.constant 0 : i32
    return %arg1, %c0_i32, %c0_i32_0 : i32, i32, i32
  }
  func.func @transform_9(%arg0: i32, %arg1: i32) -> (i32, i32, i32) {
    %c0_i32 = arith.constant 0 : i32
    %c0_i32_0 = arith.constant 0 : i32
    %c0_i32_1 = arith.constant 0 : i32
    return %arg1, %c0_i32, %c0_i32_0 : i32, i32, i32
  }
  func.func @transform_10(%arg0: i32, %arg1: i32) -> (i32, i32, i32) {
    %c0_i32 = arith.constant 0 : i32
    %c0_i32_0 = arith.constant 0 : i32
    %c0_i32_1 = arith.constant 0 : i32
    return %arg1, %c0_i32, %c0_i32_0 : i32, i32, i32
  }
  func.func @transform_11(%arg0: i32, %arg1: i32) -> (i32, i32, i32) {
    %c0_i32 = arith.constant 0 : i32
    %c0_i32_0 = arith.constant 0 : i32
    %c0_i32_1 = arith.constant 0 : i32
    return %arg1, %c0_i32, %c0_i32_0 : i32, i32, i32
  }
  func.func @transform_12(%arg0: i32, %arg1: i32) -> (i32, i32, i32) {
    %c0_i32 = arith.constant 0 : i32
    %c0_i32_0 = arith.constant 0 : i32
    %c0_i32_1 = arith.constant 0 : i32
    return %arg1, %c0_i32, %c0_i32_0 : i32, i32, i32
  }
  func.func @transform_13(%arg0: i32, %arg1: i32) -> (i32, i32, i32) {
    %c0_i32 = arith.constant 0 : i32
    %c0_i32_0 = arith.constant 0 : i32
    %c0_i32_1 = arith.constant 0 : i32
    return %arg1, %c0_i32, %c0_i32_0 : i32, i32, i32
  }
  func.func @transform_14(%arg0: i32, %arg1: i32) -> (i32, i32) {
    %c0_i32 = arith.constant 0 : i32
    %c0_i32_0 = arith.constant 0 : i32
    %c0_i32_1 = arith.constant 0 : i32
    return %c0_i32, %c0_i32_0 : i32, i32
  }
  func.func @transform_15(%arg0: i32, %arg1: i32) -> (i32, i32) {
    %c0_i32 = arith.constant 0 : i32
    %c0_i32_0 = arith.constant 0 : i32
    %c0_i32_1 = arith.constant 0 : i32
    return %c0_i32, %c0_i32_0 : i32, i32
  }
  func.func @transform_16(%arg0: i32, %arg1: i32) -> (i32, i32, i32) {
    %c0_i32 = arith.constant 0 : i32
    %c0_i32_0 = arith.constant 0 : i32
    %c0_i32_1 = arith.constant 0 : i32
    return %arg0, %c0_i32, %c0_i32_0 : i32, i32, i32
  }
}

</mosaic_0001>

<llo_original>
// kernel: clip_forward.1
$region0: #{clip_forward.1}
  #allocation0 [shape = 'u32[]', space=smem, size = 0x4, offset = 0x4, fixed_abs, tag = 'smem constant byte address 0x4 - core index']
  #allocation1 [shape = 'u32[72,128]{1,0:T(1,128)}', space=vmem, size = 0x9000, scoped, tag = 'internal scratch']
  #allocation2 [shape = 'f32[32,128]{1,0:T(8,128)}', space=vmem, size = 0x4000, scoped, tag = 'scratch operand']
  %s0 = inlined_call_operand.vmem [shape: f32[2,16,128], index: 0, kind: input, shape index: {}]
  %s1 = inlined_call_operand.vmem [shape: f32[16,16], index: 1, kind: input, shape index: {}]
  %s2 = inlined_call_operand.vmem [shape: f32[2,1,128], index: 2, kind: input, shape index: {}]
  %s3 = inlined_call_operand.vmem [shape: f32[2,1,128], index: 3, kind: input, shape index: {}]
  %s4 = inlined_call_operand.hbm [shape: bf16[2,128,384], index: 4, kind: input, shape index: {}]
  %s5 = inlined_call_operand.vmem [shape: f32[2,1,384], index: 5, kind: input, shape index: {}]
  %s6 = inlined_call_operand.vmem [shape: bf16[2,128,128], index: 6, kind: input, shape index: {}]
  %s7 = inlined_call_operand.vmem [shape: f32[2,1,128], index: 7, kind: input, shape index: {}]
  %s8 = inlined_call_operand.vmem [shape: f32[2,1,128], index: 8, kind: input, shape index: {}]
  %s9 = inlined_call_operand.vmem [shape: f32[2,1,128], index: 9, kind: input, shape index: {}]
  %s10 = inlined_call_operand.hbm [shape: bf16[2,128,512], index: 10, kind: input, shape index: {}]
  %s11 = inlined_call_operand.vmem [shape: f32[2,1,512], index: 11, kind: input, shape index: {}]
  %s12 = inlined_call_operand.hbm [shape: bf16[2,512,128], index: 12, kind: input, shape index: {}]
  %s13 = inlined_call_operand.vmem [shape: f32[2,1,128], index: 13, kind: input, shape index: {}]
  %s14 = inlined_call_operand.vmem [shape: f32[1,128], index: 14, kind: input, shape index: {}]
  %s15 = inlined_call_operand.vmem [shape: f32[1,128], index: 15, kind: input, shape index: {}]
  %s16 = inlined_call_operand.hbm [shape: f32[2,16,128], index: 16, kind: output, shape index: {}]
  %s17 = sld [smem:[#allocation0]]
  $region117: #{clip_forward.1} parent=0
    _
  %s19 = ssub.s32 1, %s17
  %s20 = scalar_select 0, %s19, %s17
  $region1: #{clip_forward.1} parent=0
    #allocation3 [shape = 'u8[196608]{0}', space=vmem, size = 0x30000, scoped, tag = 'input window, operand 4']
    #allocation4 [shape = 's32[2]{0}', space=sflag, size = 0x8, scoped, tag = 'scoped memory for clip_forward.1']
    #allocation5 [shape = 's32[2]{0}', space=sflag, size = 0x8, scoped, tag = 'scoped memory for clip_forward.1']
    #allocation6 [shape = 'u8[262144]{0}', space=vmem, size = 0x40000, scoped, tag = 'input window, operand 10']
    #allocation7 [shape = 's32[2]{0}', space=sflag, size = 0x8, scoped, tag = 'scoped memory for clip_forward.1']
    #allocation8 [shape = 'u8[262144]{0}', space=vmem, size = 0x40000, scoped, tag = 'input window, operand 12']
    #allocation9 [shape = 'u8[16384]{0}', space=vmem, size = 0x4000, scoped, tag = 'output window, operand 0, single buffered']
    %21 = vsyncpa [#allocation4], 0
    %s22 = scalar_lea.sflag [#allocation4], 1
    %23 = vsyncpa %s22, 0
    %24 = vsyncpa [#allocation7], 0
    %s25 = scalar_lea.sflag [#allocation7], 1
    %26 = vsyncpa %s25, 0
    %27 = vsyncpa [#allocation5], 0
    loop: start=0, step=1, limit=4
    $region2: #{clip_forward.1} parent=1 // loop_pre_header
      _
    $region3: #{clip_forward.1} parent=1 // loop_header
      %s29 = sphi 0, %s33
      %p30 = scmp.ge.s32.totalorder %s29, 4
      %s36 = sphi 0, %s48
      %s37 = sphi 0, %s44
      %s38 = sphi 0, %s36
      %s39 = sphi 0, %s37
      %s40 = sphi 0, %s38
      %s41 = sphi 0, %s39
      %s51 = sphi 0, %s53
      %s54 = sphi 0, %s51
      %s55 = sphi 0, %s54
      %s71 = sphi 0, %s55
      %s75 = sphi 0, %s75
      %s77 = sphi 0, %s75
      %s78 = sphi 0, %s77
      %s92 = sphi 0, %s78
      %s98 = sphi 0, %s100
      %s101 = sphi 0, %s98
      %s102 = sphi 0, %s101
      %s118 = sphi 0, %s102
      %s124 = sphi 0, %s126
      %s127 = sphi 0, %s124
      %s128 = sphi 0, %s127
      %s144 = sphi 0, %s128
      %s150 = sphi 0, %s152
      %s153 = sphi 0, %s150
      %s154 = sphi 0, %s153
      %s170 = sphi 0, %s154
      %s176 = sphi 0, %s178
      %s179 = sphi 0, %s176
      %s180 = sphi 0, %s179
      %s196 = sphi 0, %s180
      %s202 = sphi 0, %s204
      %s205 = sphi 0, %s202
      %s206 = sphi 0, %s205
      %s222 = sphi 0, %s206
      %s228 = sphi 0, %s230
      %s231 = sphi 0, %s228
      %s232 = sphi 0, %s231
      %s248 = sphi 0, %s232
      %s254 = sphi 0, %s256
      %s257 = sphi 0, %s254
      %s258 = sphi 0, %s257
      %s274 = sphi 0, %s258
      %s280 = sphi 0, %s282
      %s283 = sphi 0, %s280
      %s284 = sphi 0, %s283
      %s300 = sphi 0, %s284
      %s306 = sphi 0, %s308
      %s309 = sphi 0, %s306
      %s310 = sphi 0, %s309
      %s326 = sphi 0, %s310
      %s332 = sphi 0, %s334
      %s335 = sphi 0, %s332
      %s336 = sphi 0, %s335
      %s352 = sphi 0, %s336
      %s358 = sphi 0, %s360
      %s361 = sphi 0, %s358
      %s362 = sphi 0, %s361
      %s378 = sphi 0, %s362
      %s384 = sphi 0, %s386
      %s387 = sphi 0, %s384
      %s388 = sphi 0, %s387
      %s404 = sphi 0, %s388
      %s408 = sphi 0, %s408
      %s410 = sphi 0, %s408
      %s411 = sphi 0, %s410
      %s425 = sphi 0, %s411
      %s429 = sphi 0, %s429
      %s431 = sphi 0, %s429
      %s432 = sphi 0, %s431
      %s446 = sphi 0, %s432
      %s452 = sphi 0, %s454
      %s455 = sphi 0, %s452
      %s456 = sphi 0, %s455
      %s472 = sphi 0, %s456
    $region4: #{clip_forward.1} parent=1 // loop_header_branch
      %32 = sbr.rel (%p30) target = $region8
    $region5: #{clip_forward.1} parent=1 // loop_body
      %s34 = ssub.s32 %s29, 1
      %s35 = ssub.s32 %s29, 2
      %s42 = sadd.s32 1, %s37
      %p43 = scmp.ge.s32.totalorder %s42, 2
      %s44 = scalar_select %p43, 0, %s42
      %s45 = sadd.s32 1, %s36
      %s46 = scalar_select %p43, %s45, %s36
      %p47 = scmp.ge.s32.totalorder %s46, 1
      %s48 = scalar_select %p47, 0, %s46
      %s49 = ssub.s32 %s36, %s48
      %p50 = scmp.eq.s32.totalorder %s49, 0
      %s52 = sadd.s32 %s51, 1
      %s53 = scalar_select %p50, %s51, %s52
      %p56 = pneg %p50
      %p57 = scmp.eq.s32.totalorder %s29, 1
      %p58 = por %p56, %p57
      %p59 = scmp.ne.s32.totalorder %s51, %s54
      %p60 = scmp.eq.s32.totalorder %s29, 0
      %p61 = por %p59, %p60
      %p62 = scmp.ne.s32.totalorder %s51, %s54
      %p63 = scmp.eq.s32.totalorder %s34, 1
      %p64 = por %p62, %p63
      %p65 = scmp.ne.s32.totalorder %s54, %s55
      %p66 = scmp.eq.s32.totalorder %s34, 0
      %p67 = por %p65, %p66
      %p68 = scmp.ne.s32.totalorder %s54, %s55
      %p69 = scmp.eq.s32.totalorder %s35, 1
      %p70 = por %p68, %p69
      %p72 = scmp.ne.s32.totalorder %s55, %s71
      %p73 = scmp.eq.s32.totalorder %s35, 0
      %p74 = por %p72, %p73
      %s76 = sadd.s32 %s75, 1
      %p79 = scmp.eq.s32.totalorder %s29, 1
      %p80 = scmp.ne.s32.totalorder %s75, %s77
      %p81 = scmp.eq.s32.totalorder %s29, 0
      %p82 = por %p80, %p81
      %p83 = scmp.ne.s32.totalorder %s75, %s77
      %p84 = scmp.eq.s32.totalorder %s34, 1
      %p85 = por %p83, %p84
      %p86 = scmp.ne.s32.totalorder %s77, %s78
      %p87 = scmp.eq.s32.totalorder %s34, 0
      %p88 = por %p86, %p87
      %p89 = scmp.ne.s32.totalorder %s77, %s78
      %p90 = scmp.eq.s32.totalorder %s35, 1
      %p91 = por %p89, %p90
      %p93 = scmp.ne.s32.totalorder %s78, %s92
      %p94 = scmp.eq.s32.totalorder %s35, 0
      %p95 = por %p93, %p94
      %s96 = ssub.s32 %s37, %s44
      %p97 = scmp.eq.s32.totalorder %s96, 0
      %s99 = sadd.s32 %s98, 1
      %s100 = scalar_select %p97, %s98, %s99
      %p103 = pneg %p97
      %p104 = scmp.eq.s32.totalorder %s29, 1
      %p105 = por %p103, %p104
      %p106 = scmp.ne.s32.totalorder %s98, %s101
      %p107 = scmp.eq.s32.totalorder %s29, 0
      %p108 = por %p106, %p107
      %p109 = scmp.ne.s32.totalorder %s98, %s101
      %p110 = scmp.eq.s32.totalorder %s34, 1
      %p111 = por %p109, %p110
      %p112 = scmp.ne.s32.totalorder %s101, %s102
      %p113 = scmp.eq.s32.totalorder %s34, 0
      %p114 = por %p112, %p113
      %p115 = scmp.ne.s32.totalorder %s101, %s102
      %p116 = scmp.eq.s32.totalorder %s35, 1
      %p117 = por %p115, %p116
      %p119 = scmp.ne.s32.totalorder %s102, %s118
      %p120 = scmp.eq.s32.totalorder %s35, 0
      %p121 = por %p119, %p120
      %s122 = ssub.s32 %s37, %s44
      %p123 = scmp.eq.s32.totalorder %s122, 0
      %s125 = sadd.s32 %s124, 1
      %s126 = scalar_select %p123, %s124, %s125
      %p129 = pneg %p123
      %p130 = scmp.eq.s32.totalorder %s29, 1
      %p131 = por %p129, %p130
      %p132 = scmp.ne.s32.totalorder %s124, %s127
      %p133 = scmp.eq.s32.totalorder %s29, 0
      %p134 = por %p132, %p133
      %p135 = scmp.ne.s32.totalorder %s124, %s127
      %p136 = scmp.eq.s32.totalorder %s34, 1
      %p137 = por %p135, %p136
      %p138 = scmp.ne.s32.totalorder %s127, %s128
      %p139 = scmp.eq.s32.totalorder %s34, 0
      %p140 = por %p138, %p139
      %p141 = scmp.ne.s32.totalorder %s127, %s128
      %p142 = scmp.eq.s32.totalorder %s35, 1
      %p143 = por %p141, %p142
      %p145 = scmp.ne.s32.totalorder %s128, %s144
      %p146 = scmp.eq.s32.totalorder %s35, 0
      %p147 = por %p145, %p146
      %s148 = ssub.s32 %s37, %s44
      %p149 = scmp.eq.s32.totalorder %s148, 0
      %s151 = sadd.s32 %s150, 1
      %s152 = scalar_select %p149, %s150, %s151
      %p155 = pneg %p149
      %p156 = scmp.eq.s32.totalorder %s29, 1
      %p157 = por %p155, %p156
      %p158 = scmp.ne.s32.totalorder %s150, %s153
      %p159 = scmp.eq.s32.totalorder %s29, 0
      %p160 = por %p158, %p159
      %p161 = scmp.ne.s32.totalorder %s150, %s153
      %p162 = scmp.eq.s32.totalorder %s34, 1
      %p163 = por %p161, %p162
      %p164 = scmp.ne.s32.totalorder %s153, %s154
      %p165 = scmp.eq.s32.totalorder %s34, 0
      %p166 = por %p164, %p165
      %p167 = scmp.ne.s32.totalorder %s153, %s154
      %p168 = scmp.eq.s32.totalorder %s35, 1
      %p169 = por %p167, %p168
      %p171 = scmp.ne.s32.totalorder %s154, %s170
      %p172 = scmp.eq.s32.totalorder %s35, 0
      %p173 = por %p171, %p172
      %s174 = ssub.s32 %s37, %s44
      %p175 = scmp.eq.s32.totalorder %s174, 0
      %s177 = sadd.s32 %s176, 1
      %s178 = scalar_select %p175, %s176, %s177
      %p181 = pneg %p175
      %p182 = scmp.eq.s32.totalorder %s29, 1
      %p183 = por %p181, %p182
      %p184 = scmp.ne.s32.totalorder %s176, %s179
      %p185 = scmp.eq.s32.totalorder %s29, 0
      %p186 = por %p184, %p185
      %p187 = scmp.ne.s32.totalorder %s176, %s179
      %p188 = scmp.eq.s32.totalorder %s34, 1
      %p189 = por %p187, %p188
      %p190 = scmp.ne.s32.totalorder %s179, %s180
      %p191 = scmp.eq.s32.totalorder %s34, 0
      %p192 = por %p190, %p191
      %p193 = scmp.ne.s32.totalorder %s179, %s180
      %p194 = scmp.eq.s32.totalorder %s35, 1
      %p195 = por %p193, %p194
      %p197 = scmp.ne.s32.totalorder %s180, %s196
      %p198 = scmp.eq.s32.totalorder %s35, 0
      %p199 = por %p197, %p198
      %s200 = ssub.s32 %s37, %s44
      %p201 = scmp.eq.s32.totalorder %s200, 0
      %s203 = sadd.s32 %s202, 1
      %s204 = scalar_select %p201, %s202, %s203
      %p207 = pneg %p201
      %p208 = scmp.eq.s32.totalorder %s29, 1
      %p209 = por %p207, %p208
      %p210 = scmp.ne.s32.totalorder %s202, %s205
      %p211 = scmp.eq.s32.totalorder %s29, 0
      %p212 = por %p210, %p211
      %p213 = scmp.ne.s32.totalorder %s202, %s205
      %p214 = scmp.eq.s32.totalorder %s34, 1
      %p215 = por %p213, %p214
      %p216 = scmp.ne.s32.totalorder %s205, %s206
      %p217 = scmp.eq.s32.totalorder %s34, 0
      %p218 = por %p216, %p217
      %p219 = scmp.ne.s32.totalorder %s205, %s206
      %p220 = scmp.eq.s32.totalorder %s35, 1
      %p221 = por %p219, %p220
      %p223 = scmp.ne.s32.totalorder %s206, %s222
      %p224 = scmp.eq.s32.totalorder %s35, 0
      %p225 = por %p223, %p224
      %s226 = ssub.s32 %s37, %s44
      %p227 = scmp.eq.s32.totalorder %s226, 0
      %s229 = sadd.s32 %s228, 1
      %s230 = scalar_select %p227, %s228, %s229
      %p233 = pneg %p227
      %p234 = scmp.eq.s32.totalorder %s29, 1
      %p235 = por %p233, %p234
      %p236 = scmp.ne.s32.totalorder %s228, %s231
      %p237 = scmp.eq.s32.totalorder %s29, 0
      %p238 = por %p236, %p237
      %p239 = scmp.ne.s32.totalorder %s228, %s231
      %p240 = scmp.eq.s32.totalorder %s34, 1
      %p241 = por %p239, %p240
      %p242 = scmp.ne.s32.totalorder %s231, %s232
      %p243 = scmp.eq.s32.totalorder %s34, 0
      %p244 = por %p242, %p243
      %p245 = scmp.ne.s32.totalorder %s231, %s232
      %p246 = scmp.eq.s32.totalorder %s35, 1
      %p247 = por %p245, %p246
      %p249 = scmp.ne.s32.totalorder %s232, %s248
      %p250 = scmp.eq.s32.totalorder %s35, 0
      %p251 = por %p249, %p250
      %s252 = ssub.s32 %s37, %s44
      %p253 = scmp.eq.s32.totalorder %s252, 0
      %s255 = sadd.s32 %s254, 1
      %s256 = scalar_select %p253, %s254, %s255
      %p259 = pneg %p253
      %p260 = scmp.eq.s32.totalorder %s29, 1
      %p261 = por %p259, %p260
      %p262 = scmp.ne.s32.totalorder %s254, %s257
      %p263 = scmp.eq.s32.totalorder %s29, 0
      %p264 = por %p262, %p263
      %p265 = scmp.ne.s32.totalorder %s254, %s257
      %p266 = scmp.eq.s32.totalorder %s34, 1
      %p267 = por %p265, %p266
      %p268 = scmp.ne.s32.totalorder %s257, %s258
      %p269 = scmp.eq.s32.totalorder %s34, 0
      %p270 = por %p268, %p269
      %p271 = scmp.ne.s32.totalorder %s257, %s258
      %p272 = scmp.eq.s32.totalorder %s35, 1
      %p273 = por %p271, %p272
      %p275 = scmp.ne.s32.totalorder %s258, %s274
      %p276 = scmp.eq.s32.totalorder %s35, 0
      %p277 = por %p275, %p276
      %s278 = ssub.s32 %s37, %s44
      %p279 = scmp.eq.s32.totalorder %s278, 0
      %s281 = sadd.s32 %s280, 1
      %s282 = scalar_select %p279, %s280, %s281
      %p285 = pneg %p279
      %p286 = scmp.eq.s32.totalorder %s29, 1
      %p287 = por %p285, %p286
      %p288 = scmp.ne.s32.totalorder %s280, %s283
      %p289 = scmp.eq.s32.totalorder %s29, 0
      %p290 = por %p288, %p289
      %p291 = scmp.ne.s32.totalorder %s280, %s283
      %p292 = scmp.eq.s32.totalorder %s34, 1
      %p293 = por %p291, %p292
      %p294 = scmp.ne.s32.totalorder %s283, %s284
      %p295 = scmp.eq.s32.totalorder %s34, 0
      %p296 = por %p294, %p295
      %p297 = scmp.ne.s32.totalorder %s283, %s284
      %p298 = scmp.eq.s32.totalorder %s35, 1
      %p299 = por %p297, %p298
      %p301 = scmp.ne.s32.totalorder %s284, %s300
      %p302 = scmp.eq.s32.totalorder %s35, 0
      %p303 = por %p301, %p302
      %s304 = ssub.s32 %s37, %s44
      %p305 = scmp.eq.s32.totalorder %s304, 0
      %s307 = sadd.s32 %s306, 1
      %s308 = scalar_select %p305, %s306, %s307
      %p311 = pneg %p305
      %p312 = scmp.eq.s32.totalorder %s29, 1
      %p313 = por %p311, %p312
      %p314 = scmp.ne.s32.totalorder %s306, %s309
      %p315 = scmp.eq.s32.totalorder %s29, 0
      %p316 = por %p314, %p315
      %p317 = scmp.ne.s32.totalorder %s306, %s309
      %p318 = scmp.eq.s32.totalorder %s34, 1
      %p319 = por %p317, %p318
      %p320 = scmp.ne.s32.totalorder %s309, %s310
      %p321 = scmp.eq.s32.totalorder %s34, 0
      %p322 = por %p320, %p321
      %p323 = scmp.ne.s32.totalorder %s309, %s310
      %p324 = scmp.eq.s32.totalorder %s35, 1
      %p325 = por %p323, %p324
      %p327 = scmp.ne.s32.totalorder %s310, %s326
      %p328 = scmp.eq.s32.totalorder %s35, 0
      %p329 = por %p327, %p328
      %s330 = ssub.s32 %s37, %s44
      %p331 = scmp.eq.s32.totalorder %s330, 0
      %s333 = sadd.s32 %s332, 1
      %s334 = scalar_select %p331, %s332, %s333
      %p337 = pneg %p331
      %p338 = scmp.eq.s32.totalorder %s29, 1
      %p339 = por %p337, %p338
      %p340 = scmp.ne.s32.totalorder %s332, %s335
      %p341 = scmp.eq.s32.totalorder %s29, 0
      %p342 = por %p340, %p341
      %p343 = scmp.ne.s32.totalorder %s332, %s335
      %p344 = scmp.eq.s32.totalorder %s34, 1
      %p345 = por %p343, %p344
      %p346 = scmp.ne.s32.totalorder %s335, %s336
      %p347 = scmp.eq.s32.totalorder %s34, 0
      %p348 = por %p346, %p347
      %p349 = scmp.ne.s32.totalorder %s335, %s336
      %p350 = scmp.eq.s32.totalorder %s35, 1
      %p351 = por %p349, %p350
      %p353 = scmp.ne.s32.totalorder %s336, %s352
      %p354 = scmp.eq.s32.totalorder %s35, 0
      %p355 = por %p353, %p354
      %s356 = ssub.s32 %s37, %s44
      %p357 = scmp.eq.s32.totalorder %s356, 0
      %s359 = sadd.s32 %s358, 1
      %s360 = scalar_select %p357, %s358, %s359
      %p363 = pneg %p357
      %p364 = scmp.eq.s32.totalorder %s29, 1
      %p365 = por %p363, %p364
      %p366 = scmp.ne.s32.totalorder %s358, %s361
      %p367 = scmp.eq.s32.totalorder %s29, 0
      %p368 = por %p366, %p367
      %p369 = scmp.ne.s32.totalorder %s358, %s361
      %p370 = scmp.eq.s32.totalorder %s34, 1
      %p371 = por %p369, %p370
      %p372 = scmp.ne.s32.totalorder %s361, %s362
      %p373 = scmp.eq.s32.totalorder %s34, 0
      %p374 = por %p372, %p373
      %p375 = scmp.ne.s32.totalorder %s361, %s362
      %p376 = scmp.eq.s32.totalorder %s35, 1
      %p377 = por %p375, %p376
      %p379 = scmp.ne.s32.totalorder %s362, %s378
      %p380 = scmp.eq.s32.totalorder %s35, 0
      %p381 = por %p379, %p380
      %s382 = ssub.s32 %s37, %s44
      %p383 = scmp.eq.s32.totalorder %s382, 0
      %s385 = sadd.s32 %s384, 1
      %s386 = scalar_select %p383, %s384, %s385
      %p389 = pneg %p383
      %p390 = scmp.eq.s32.totalorder %s29, 1
      %p391 = por %p389, %p390
      %p392 = scmp.ne.s32.totalorder %s384, %s387
      %p393 = scmp.eq.s32.totalorder %s29, 0
      %p394 = por %p392, %p393
      %p395 = scmp.ne.s32.totalorder %s384, %s387
      %p396 = scmp.eq.s32.totalorder %s34, 1
      %p397 = por %p395, %p396
      %p398 = scmp.ne.s32.totalorder %s387, %s388
      %p399 = scmp.eq.s32.totalorder %s34, 0
      %p400 = por %p398, %p399
      %p401 = scmp.ne.s32.totalorder %s387, %s388
      %p402 = scmp.eq.s32.totalorder %s35, 1
      %p403 = por %p401, %p402
      %p405 = scmp.ne.s32.totalorder %s388, %s404
      %p406 = scmp.eq.s32.totalorder %s35, 0
      %p407 = por %p405, %p406
      %s409 = sadd.s32 %s408, 1
      %p412 = scmp.eq.s32.totalorder %s29, 1
      %p413 = scmp.ne.s32.totalorder %s408, %s410
      %p414 = scmp.eq.s32.totalorder %s29, 0
      %p415 = por %p413, %p414
      %p416 = scmp.ne.s32.totalorder %s408, %s410
      %p417 = scmp.eq.s32.totalorder %s34, 1
      %p418 = por %p416, %p417
      %p419 = scmp.ne.s32.totalorder %s410, %s411
      %p420 = scmp.eq.s32.totalorder %s34, 0
      %p421 = por %p419, %p420
      %p422 = scmp.ne.s32.totalorder %s410, %s411
      %p423 = scmp.eq.s32.totalorder %s35, 1
      %p424 = por %p422, %p423
      %p426 = scmp.ne.s32.totalorder %s411, %s425
      %p427 = scmp.eq.s32.totalorder %s35, 0
      %p428 = por %p426, %p427
      %s430 = sadd.s32 %s429, 1
      %p433 = scmp.eq.s32.totalorder %s29, 1
      %p434 = scmp.ne.s32.totalorder %s429, %s431
      %p435 = scmp.eq.s32.totalorder %s29, 0
      %p436 = por %p434, %p435
      %p437 = scmp.ne.s32.totalorder %s429, %s431
      %p438 = scmp.eq.s32.totalorder %s34, 1
      %p439 = por %p437, %p438
      %p440 = scmp.ne.s32.totalorder %s431, %s432
      %p441 = scmp.eq.s32.totalorder %s34, 0
      %p442 = por %p440, %p441
      %p443 = scmp.ne.s32.totalorder %s431, %s432
      %p444 = scmp.eq.s32.totalorder %s35, 1
      %p445 = por %p443, %p444
      %p447 = scmp.ne.s32.totalorder %s432, %s446
      %p448 = scmp.eq.s32.totalorder %s35, 0
      %p449 = por %p447, %p448
      %s450 = ssub.s32 %s36, %s48
      %p451 = scmp.eq.s32.totalorder %s450, 0
      %s453 = sadd.s32 %s452, 1
      %s454 = scalar_select %p451, %s452, %s453
      %p457 = pneg %p451
      %p458 = scmp.eq.s32.totalorder %s29, 1
      %p459 = por %p457, %p458
      %p460 = scmp.ne.s32.totalorder %s452, %s455
      %p461 = scmp.eq.s32.totalorder %s29, 0
      %p462 = por %p460, %p461
      %p463 = scmp.ne.s32.totalorder %s452, %s455
      %p464 = scmp.eq.s32.totalorder %s34, 1
      %p465 = por %p463, %p464
      %p466 = scmp.ne.s32.totalorder %s455, %s456
      %p467 = scmp.eq.s32.totalorder %s34, 0
      %p468 = por %p466, %p467
      %p469 = scmp.ne.s32.totalorder %s455, %s456
      %p470 = scmp.eq.s32.totalorder %s35, 1
      %p471 = por %p469, %p470
      %p473 = scmp.ne.s32.totalorder %s456, %s472
      %p474 = scmp.eq.s32.totalorder %s35, 0
      %p475 = por %p473, %p474
      %p476 = scmp.le.s32.totalorder 1, %s29
      %p477 = scmp.lt.s32.totalorder %s29, 3
      %p478 = pnand %p476, %p477
      %p479 = pneg %p478
      // Predicated region
      $region9: #{clip_forward.1} parent=5 // pred_check
        _
      $region10: #{clip_forward.1} parent=5 // pred_check_branch
        %481 = sbr.rel (%p478) target = $region12
      $region11: #{clip_forward.1} parent=5 // pred_region
        %s482 = ssub.s32 %s29, 1
        // Predicated region
        $region13: #{clip_forward.1} parent=11 // pred_check
          %p483 = pneg %p67
        $region14: #{clip_forward.1} parent=11 // pred_check_branch
          %485 = sbr.rel (%p483) target = $region16
        $region15: #{clip_forward.1} parent=11 // pred_region
          %s486 = smul.u32 2, %s38
          %p487 = scmp.lt.s32.totalorder %s486, 1
          %s488 = scalar_select %p487, %s486, 1
          %s489 = smul.addr %s488, 2
          %s490 = smul.addr %s489, 8
          %s491 = scalar_lea.vmem %s0, %s490
          %s492 = smul.u32 2, %s38
        $region16: #{clip_forward.1} parent=11 // pred_fallthru
          _
        // Predicated region
        $region17: #{clip_forward.1} parent=11 // pred_check
          %p493 = pneg %p88
        $region18: #{clip_forward.1} parent=11 // pred_check_branch
          %495 = sbr.rel (%p493) target = $region20
        $region19: #{clip_forward.1} parent=11 // pred_region
          _
        $region20: #{clip_forward.1} parent=11 // pred_fallthru
          _
        // Predicated region
        $region21: #{clip_forward.1} parent=11 // pred_check
          %p496 = pneg %p421
        $region22: #{clip_forward.1} parent=11 // pred_check_branch
          %498 = sbr.rel (%p496) target = $region24
        $region23: #{clip_forward.1} parent=11 // pred_region
          _
        $region24: #{clip_forward.1} parent=11 // pred_fallthru
          _
        // Predicated region
        $region25: #{clip_forward.1} parent=11 // pred_check
          %p499 = pneg %p442
        $region26: #{clip_forward.1} parent=11 // pred_check_branch
          %501 = sbr.rel (%p499) target = $region28
        $region27: #{clip_forward.1} parent=11 // pred_region
          _
        $region28: #{clip_forward.1} parent=11 // pred_fallthru
          _
      $region12: #{clip_forward.1} parent=5 // pred_fallthru
        _
      %p502 = scmp.lt.s32.totalorder %s29, 2
      // Predicated region
      $region29: #{clip_forward.1} parent=5 // pred_check
        %p503 = pneg %p502
      $region30: #{clip_forward.1} parent=5 // pred_check_branch
        %505 = sbr.rel (%p503) target = $region32
      $region31: #{clip_forward.1} parent=5 // pred_region
        // Predicated region
        $region33: #{clip_forward.1} parent=31 // pred_check
          %p506 = pneg %p108
        $region34: #{clip_forward.1} parent=31 // pred_check_branch
          %508 = sbr.rel (%p506) target = $region36
        $region35: #{clip_forward.1} parent=31 // pred_region
          %p509 = scmp.lt.s32.totalorder %s37, 1
          %s510 = scalar_select %p509, %s37, 1
          %s511 = scalar_lea.vmem %s2, %s510
        $region36: #{clip_forward.1} parent=31 // pred_fallthru
          _
        // Predicated region
        $region37: #{clip_forward.1} parent=31 // pred_check
          %p512 = pneg %p134
        $region38: #{clip_forward.1} parent=31 // pred_check_branch
          %514 = sbr.rel (%p512) target = $region40
        $region39: #{clip_forward.1} parent=31 // pred_region
          %p515 = scmp.lt.s32.totalorder %s37, 1
          %s516 = scalar_select %p515, %s37, 1
          %s517 = scalar_lea.vmem %s3, %s516
        $region40: #{clip_forward.1} parent=31 // pred_fallthru
          _
        // Predicated region
        $region41: #{clip_forward.1} parent=31 // pred_check
          %p518 = pneg %p160
        $region42: #{clip_forward.1} parent=31 // pred_check_branch
          %520 = sbr.rel (%p518) target = $region44
        $region43: #{clip_forward.1} parent=31 // pred_region
          %s521 = sand.u32 %s150, 1
          %s522 = scalar_lea.sflag [#allocation4], %s521
          %s523 = sand.u32 %s150, 1
          %s524 = smul.addr %s523, 192
          %s525 = scalar_lea.vmem [#allocation3], %s524
          %527 = vsyncadd %s522, 0
          %s528 = smul.addr %s37, 48
          %s529 = smul.addr %s528, 4
          %s530 = scalar_lea.hbm %s4, %s529
          %s531 = sshll.u32 %s530, 4
          %s532 = int_to_ptr.hbm [resolvable:$true] %s531
          %s533 = sshll.u32 %s525, 4
          %s534 = int_to_ptr.vmem [resolvable:$true] %s533
          %539 = dma.hbm_to_vmem [thread:$0]  %s532, 3072, %s534, %s522, 192, 192, 12
        $region44: #{clip_forward.1} parent=31 // pred_fallthru
          _
        // Predicated region
        $region45: #{clip_forward.1} parent=31 // pred_check
          %p540 = pneg %p186
        $region46: #{clip_forward.1} parent=31 // pred_check_branch
          %542 = sbr.rel (%p540) target = $region48
        $region47: #{clip_forward.1} parent=31 // pred_region
          %p543 = scmp.lt.s32.totalorder %s37, 1
          %s544 = scalar_select %p543, %s37, 1
          %s545 = smul.addr %s544, 3
          %s546 = scalar_lea.vmem %s5, %s545
        $region48: #{clip_forward.1} parent=31 // pred_fallthru
          _
        // Predicated region
        $region49: #{clip_forward.1} parent=31 // pred_check
          %p547 = pneg %p212
        $region50: #{clip_forward.1} parent=31 // pred_check_branch
          %549 = sbr.rel (%p547) target = $region52
        $region51: #{clip_forward.1} parent=31 // pred_region
          %p550 = scmp.lt.s32.totalorder %s37, 1
          %s551 = scalar_select %p550, %s37, 1
          %s552 = smul.addr %s551, 16
          %s553 = smul.addr %s552, 4
          %s554 = scalar_lea.vmem %s6, %s553
        $region52: #{clip_forward.1} parent=31 // pred_fallthru
          _
        // Predicated region
        $region53: #{clip_forward.1} parent=31 // pred_check
          %p555 = pneg %p238
        $region54: #{clip_forward.1} parent=31 // pred_check_branch
          %557 = sbr.rel (%p555) target = $region56
        $region55: #{clip_forward.1} parent=31 // pred_region
          %p558 = scmp.lt.s32.totalorder %s37, 1
          %s559 = scalar_select %p558, %s37, 1
          %s560 = scalar_lea.vmem %s7, %s559
        $region56: #{clip_forward.1} parent=31 // pred_fallthru
          _
        // Predicated region
        $region57: #{clip_forward.1} parent=31 // pred_check
          %p561 = pneg %p264
        $region58: #{clip_forward.1} parent=31 // pred_check_branch
          %563 = sbr.rel (%p561) target = $region60
        $region59: #{clip_forward.1} parent=31 // pred_region
          %p564 = scmp.lt.s32.totalorder %s37, 1
          %s565 = scalar_select %p564, %s37, 1
          %s566 = scalar_lea.vmem %s8, %s565
        $region60: #{clip_forward.1} parent=31 // pred_fallthru
          _
        // Predicated region
        $region61: #{clip_forward.1} parent=31 // pred_check
          %p567 = pneg %p290
        $region62: #{clip_forward.1} parent=31 // pred_check_branch
          %569 = sbr.rel (%p567) target = $region64
        $region63: #{clip_forward.1} parent=31 // pred_region
          %p570 = scmp.lt.s32.totalorder %s37, 1
          %s571 = scalar_select %p570, %s37, 1
          %s572 = scalar_lea.vmem %s9, %s571
        $region64: #{clip_forward.1} parent=31 // pred_fallthru
          _
        // Predicated region
        $region65: #{clip_forward.1} parent=31 // pred_check
          %p573 = pneg %p316
        $region66: #{clip_forward.1} parent=31 // pred_check_branch
          %575 = sbr.rel (%p573) target = $region68
        $region67: #{clip_forward.1} parent=31 // pred_region
          %s576 = sand.u32 %s29, 1
          %s577 = scalar_lea.sflag [#allocation7], %s576
          %s578 = sand.u32 %s306, 1
          %s579 = smul.addr %s578, 256
          %s580 = scalar_lea.vmem [#allocation6], %s579
          %582 = vsyncadd %s577, 0
          %s583 = smul.addr %s37, 64
          %s584 = smul.addr %s583, 4
          %s585 = scalar_lea.hbm %s10, %s584
          %s586 = sshll.u32 %s585, 4
          %s587 = int_to_ptr.hbm [resolvable:$true] %s586
          %s588 = sshll.u32 %s580, 4
          %s589 = int_to_ptr.vmem [resolvable:$true] %s588
          %594 = dma.hbm_to_vmem [thread:$0]  %s587, 4096, %s589, %s577, 256, 256, 16
        $region68: #{clip_forward.1} parent=31 // pred_fallthru
          _
        // Predicated region
        $region69: #{clip_forward.1} parent=31 // pred_check
          %p595 = pneg %p342
        $region70: #{clip_forward.1} parent=31 // pred_check_branch
          %597 = sbr.rel (%p595) target = $region72
        $region71: #{clip_forward.1} parent=31 // pred_region
          %p598 = scmp.lt.s32.totalorder %s37, 1
          %s599 = scalar_select %p598, %s37, 1
          %s600 = smul.addr %s599, 4
          %s601 = scalar_lea.vmem %s11, %s600
        $region72: #{clip_forward.1} parent=31 // pred_fallthru
          _
        // Predicated region
        $region73: #{clip_forward.1} parent=31 // pred_check
          %p602 = pneg %p368
        $region74: #{clip_forward.1} parent=31 // pred_check_branch
          %604 = sbr.rel (%p602) target = $region76
        $region75: #{clip_forward.1} parent=31 // pred_region
          %s605 = sand.u32 %s29, 1
          %s606 = scalar_lea.sflag [#allocation7], %s605
          %s607 = sand.u32 %s358, 1
          %s608 = smul.addr %s607, 256
          %s609 = scalar_lea.vmem [#allocation8], %s608
          %611 = vsyncadd %s606, 0
          %s612 = smul.addr %s37, 64
          %s613 = smul.addr %s612, 4
          %s614 = scalar_lea.hbm %s12, %s613
          %s615 = sshll.u32 %s614, 4
          %s616 = int_to_ptr.hbm [resolvable:$true] %s615
          %s617 = sshll.u32 %s609, 4
          %s618 = int_to_ptr.vmem [resolvable:$true] %s617
          %623 = dma.hbm_to_vmem [thread:$0]  %s616, 4096, %s618, %s606, 64, 64, 4
        $region76: #{clip_forward.1} parent=31 // pred_fallthru
          _
        // Predicated region
        $region77: #{clip_forward.1} parent=31 // pred_check
          %p624 = pneg %p394
        $region78: #{clip_forward.1} parent=31 // pred_check_branch
          %626 = sbr.rel (%p624) target = $region80
        $region79: #{clip_forward.1} parent=31 // pred_region
          %p627 = scmp.lt.s32.totalorder %s37, 1
          %s628 = scalar_select %p627, %s37, 1
          %s629 = scalar_lea.vmem %s13, %s628
        $region80: #{clip_forward.1} parent=31 // pred_fallthru
          _
      $region32: #{clip_forward.1} parent=5 // pred_fallthru
        _
      %p630 = scmp.le.s32.totalorder 1, %s29
      %p631 = scmp.lt.s32.totalorder %s29, 3
      %p632 = pnand %p630, %p631
      %p633 = pneg %p632
      // Predicated region
      $region81: #{clip_forward.1} parent=5 // pred_check
        _
      $region82: #{clip_forward.1} parent=5 // pred_check_branch
        %635 = sbr.rel (%p632) target = $region84
      $region83: #{clip_forward.1} parent=5 // pred_region
        %s636 = ssub.s32 %s29, 1
        %s637 = sand.u32 %s153, 1
        %s638 = scalar_lea.sflag [#allocation4], %s637
        %s639 = sand.u32 %s153, 1
        %s640 = smul.addr %s639, 192
        %s641 = scalar_lea.vmem [#allocation3], %s640
        // Predicated region
        $region85: #{clip_forward.1} parent=83 // pred_check
          %p642 = pneg %p166
        $region86: #{clip_forward.1} parent=83 // pred_check_branch
          %644 = sbr.rel (%p642) target = $region88
        $region87: #{clip_forward.1} parent=83 // pred_region
          %646 = dma.done %s638, 3072
        $region88: #{clip_forward.1} parent=83 // pred_fallthru
          _
        %s647 = sand.u32 %s34, 1
        %s648 = scalar_lea.sflag [#allocation7], %s647
        %s649 = sand.u32 %s309, 1
        %s650 = smul.addr %s649, 256
        %s651 = scalar_lea.vmem [#allocation6], %s650
        // Predicated region
        $region89: #{clip_forward.1} parent=83 // pred_check
          %p652 = pneg %p322
        $region90: #{clip_forward.1} parent=83 // pred_check_branch
          %654 = sbr.rel (%p652) target = $region92
        $region91: #{clip_forward.1} parent=83 // pred_region
          %656 = dma.done %s648, 4096
        $region92: #{clip_forward.1} parent=83 // pred_fallthru
          _
        %s657 = sand.u32 %s34, 1
        %s658 = scalar_lea.sflag [#allocation7], %s657
        %s659 = sand.u32 %s361, 1
        %s660 = smul.addr %s659, 256
        %s661 = scalar_lea.vmem [#allocation8], %s660
        // Predicated region
        $region93: #{clip_forward.1} parent=83 // pred_check
          %p662 = pneg %p374
        $region94: #{clip_forward.1} parent=83 // pred_check_branch
          %664 = sbr.rel (%p662) target = $region96
        $region95: #{clip_forward.1} parent=83 // pred_region
          %666 = dma.done %s658, 4096
        $region96: #{clip_forward.1} parent=83 // pred_fallthru
          _
        %s667 = smul.u32 2, %s38
        %p668 = scmp.lt.s32.totalorder %s667, 1
        %s669 = scalar_select %p668, %s667, 1
        %s670 = smul.addr %s669, 2
        %s671 = smul.addr %s670, 8
        %s672 = scalar_lea.vmem %s0, %s671
        %p673 = pneg %p67
        %p674 = pneg %p64
        %p675 = pneg %p88
        %p676 = pneg %p85
        %p677 = scmp.lt.s32.totalorder %s39, 1
        %s678 = scalar_select %p677, %s39, 1
        %s679 = scalar_lea.vmem %s2, %s678
        %p680 = pneg %p114
        %p681 = pneg %p111
        %p682 = scmp.lt.s32.totalorder %s39, 1
        %s683 = scalar_select %p682, %s39, 1
        %s684 = scalar_lea.vmem %s3, %s683
        %p685 = pneg %p140
        %p686 = pneg %p137
        %s687 = sand.u32 %s153, 1
        %s688 = scalar_lea.sflag [#allocation4], %s687
        %s689 = sand.u32 %s153, 1
        %s690 = smul.addr %s689, 192
        %s691 = scalar_lea.vmem [#allocation3], %s690
        %p692 = pneg %p166
        %p693 = pneg %p163
        %p694 = scmp.lt.s32.totalorder %s39, 1
        %s695 = scalar_select %p694, %s39, 1
        %s696 = smul.addr %s695, 3
        %s697 = scalar_lea.vmem %s5, %s696
        %p698 = pneg %p192
        %p699 = pneg %p189
        %p700 = scmp.lt.s32.totalorder %s39, 1
        %s701 = scalar_select %p700, %s39, 1
        %s702 = smul.addr %s701, 16
        %s703 = smul.addr %s702, 4
        %s704 = scalar_lea.vmem %s6, %s703
        %p705 = pneg %p218
        %p706 = pneg %p215
        %p707 = scmp.lt.s32.totalorder %s39, 1
        %s708 = scalar_select %p707, %s39, 1
        %s709 = scalar_lea.vmem %s7, %s708
        %p710 = pneg %p244
        %p711 = pneg %p241
        %p712 = scmp.lt.s32.totalorder %s39, 1
        %s713 = scalar_select %p712, %s39, 1
        %s714 = scalar_lea.vmem %s8, %s713
        %p715 = pneg %p270
        %p716 = pneg %p267
        %p717 = scmp.lt.s32.totalorder %s39, 1
        %s718 = scalar_select %p717, %s39, 1
        %s719 = scalar_lea.vmem %s9, %s718
        %p720 = pneg %p296
        %p721 = pneg %p293
        %s722 = sand.u32 %s34, 1
        %s723 = scalar_lea.sflag [#allocation7], %s722
        %s724 = sand.u32 %s309, 1
        %s725 = smul.addr %s724, 256
        %s726 = scalar_lea.vmem [#allocation6], %s725
        %p727 = pneg %p322
        %p728 = pneg %p319
        %p729 = scmp.lt.s32.totalorder %s39, 1
        %s730 = scalar_select %p729, %s39, 1
        %s731 = smul.addr %s730, 4
        %s732 = scalar_lea.vmem %s11, %s731
        %p733 = pneg %p348
        %p734 = pneg %p345
        %s735 = sand.u32 %s34, 1
        %s736 = scalar_lea.sflag [#allocation7], %s735
        %s737 = sand.u32 %s361, 1
        %s738 = smul.addr %s737, 256
        %s739 = scalar_lea.vmem [#allocation8], %s738
        %p740 = pneg %p374
        %p741 = pneg %p371
        %p742 = scmp.lt.s32.totalorder %s39, 1
        %s743 = scalar_select %p742, %s39, 1
        %s744 = scalar_lea.vmem %s13, %s743
        %p745 = pneg %p400
        %p746 = pneg %p397
        %p747 = pneg %p421
        %p748 = pneg %p418
        %p749 = pneg %p442
        %p750 = pneg %p439
        %p751 = pneg %p468
        %p752 = pneg %p465
        %s753 = smul.u32 2, %s38
        %p754 = scmp.lt.s32.totalorder %s753, 1
        %s755 = scalar_select %p754, %s753, 1
        %s756 = smul.addr %s755, 2
        %s757 = smul.addr %s756, 8
        %s758 = scalar_lea.vmem %s0, %s757
        %s759 = smul.u32 2, %s38
        %p760 = scmp.lt.s32.totalorder %s39, 1
        %s761 = scalar_select %p760, %s39, 1
        %s762 = scalar_lea.vmem %s2, %s761
        %p763 = scmp.lt.s32.totalorder %s39, 1
        %s764 = scalar_select %p763, %s39, 1
        %s765 = scalar_lea.vmem %s3, %s764
        %p766 = scmp.lt.s32.totalorder %s39, 1
        %s767 = scalar_select %p766, %s39, 1
        %s768 = smul.addr %s767, 3
        %s769 = scalar_lea.vmem %s5, %s768
        %p770 = scmp.lt.s32.totalorder %s39, 1
        %s771 = scalar_select %p770, %s39, 1
        %s772 = smul.addr %s771, 16
        %s773 = smul.addr %s772, 4
        %s774 = scalar_lea.vmem %s6, %s773
        %p775 = scmp.lt.s32.totalorder %s39, 1
        %s776 = scalar_select %p775, %s39, 1
        %s777 = scalar_lea.vmem %s7, %s776
        %p778 = scmp.lt.s32.totalorder %s39, 1
        %s779 = scalar_select %p778, %s39, 1
        %s780 = scalar_lea.vmem %s8, %s779
        %p781 = scmp.lt.s32.totalorder %s39, 1
        %s782 = scalar_select %p781, %s39, 1
        %s783 = scalar_lea.vmem %s9, %s782
        %p784 = scmp.lt.s32.totalorder %s39, 1
        %s785 = scalar_select %p784, %s39, 1
        %s786 = smul.addr %s785, 4
        %s787 = scalar_lea.vmem %s11, %s786
        %p788 = scmp.lt.s32.totalorder %s39, 1
        %s789 = scalar_select %p788, %s39, 1
        %s790 = scalar_lea.vmem %s13, %s789
        %s791 = smul.u32 2, %s38
        %p793 = scmp.eq.s32.totalorder %s39, 0
        // Predicated region
        $region97: #{clip_forward.1} parent=83 // pred_check
          %p794 = pneg %p793
        $region98: #{clip_forward.1} parent=83 // pred_check_branch
          %796 = sbr.rel (%p794) target = $region100
        $region99: #{clip_forward.1} parent=83 // pred_region
          %v797 = vld [vmem:[%s758] sm:$0xff]
          %v798 = vld [vmem:[%s758 + $0x8] sm:$0xff]
          %v799 = vld [vmem:[%s758 + $0x10] sm:$0xff]
          %v800 = vld [vmem:[%s758 + $0x18] sm:$0xff]
          %801 = vst [vmem:[#allocation2] sm:$0xff] %v797
          %802 = vst [vmem:[#allocation2 + $0x8] sm:$0xff] %v798
          %803 = vst [vmem:[#allocation2 + $0x10] sm:$0xff] %v799
          %804 = vst [vmem:[#allocation2 + $0x18] sm:$0xff] %v800
        $region100: #{clip_forward.1} parent=83 // pred_fallthru
          _
        %v805 = vld [vmem:[#allocation2] sm:$0xff]
        %v806 = vld [vmem:[#allocation2 + $0x8] sm:$0xff]
        %v807 = vld [vmem:[#allocation2 + $0x10] sm:$0xff]
        %v808 = vld [vmem:[#allocation2 + $0x18] sm:$0xff]
        %v809 = vld [vmem:[%s762] sm:$0x1]
        %v810 = vld [vmem:[%s765] sm:$0x1]
        %811 = vadd.xlane.f32.xlu0 %v805
        %v812 = vpop.xlane.xlu0 %811
        %813 = vadd.xlane.f32.xlu0 %v806
        %v814 = vpop.xlane.xlu0 %813
        %815 = vadd.xlane.f32.xlu0 %v807
        %v816 = vpop.xlane.xlu0 %815
        %817 = vadd.xlane.f32.xlu0 %v808
        %v818 = vpop.xlane.xlu0 %817
        %v819 = vrcp.pop 128.0
        %v820 = vmul.f32 128.0, %v819
        %v821 = vsub.f32 1.0, %v820
        %v822 = vmul.f32 %v819, %v821
        %v823 = vadd.f32 %v819, %v822
        %vm824 = vweird.f32 %v819
        %v825 = vsel %vm824, %v819, %v823
        %v826 = vmul.f32 %v812, %v825
        %v827 = vmul.f32 %v814, %v825
        %v828 = vmul.f32 %v816, %v825
        %v829 = vmul.f32 %v818, %v825
        %v830 = vsub.f32 %v805, %v826
        %v831 = vsub.f32 %v806, %v827
        %v832 = vsub.f32 %v807, %v828
        %v833 = vsub.f32 %v808, %v829
        %v834 = vmul.f32 %v830, %v830
        %v835 = vmul.f32 %v831, %v831
        %v836 = vmul.f32 %v832, %v832
        %v837 = vmul.f32 %v833, %v833
        %838 = vadd.xlane.f32.xlu0 %v834
        %v839 = vpop.xlane.xlu0 %838
        %840 = vadd.xlane.f32.xlu0 %v835
        %v841 = vpop.xlane.xlu0 %840
        %842 = vadd.xlane.f32.xlu0 %v836
        %v843 = vpop.xlane.xlu0 %842
        %844 = vadd.xlane.f32.xlu0 %v837
        %v845 = vpop.xlane.xlu0 %844
        %v846 = vmul.f32 %v839, %v825
        %v847 = vmul.f32 %v841, %v825
        %v848 = vmul.f32 %v843, %v825
        %v849 = vmul.f32 %v845, %v825
        %v850 = vadd.f32 %v846, 1e-05
        %v851 = vadd.f32 %v847, 1e-05
        %v852 = vadd.f32 %v848, 1e-05
        %v853 = vadd.f32 %v849, 1e-05
        %v854 = vrsqrt.pop %v850
        %v855 = vmul.f32 %v854, %v850
        %v856 = vmul.f32 %v855, %v854
        %v857 = vmul.f32 0.5, %v856
        %v858 = vsub.f32 1.5, %v857
        %v859 = vmul.f32 %v854, %v858
        %vm860 = vweird.f32 %v850
        %vm861 = vweird.f32 %v854
        %vm862 = vmor %vm860, %vm861
        %v863 = vsel %vm862, %v854, %v859
        %v864 = vrsqrt.pop %v851
        %v865 = vmul.f32 %v864, %v851
        %v866 = vmul.f32 %v865, %v864
        %v867 = vmul.f32 0.5, %v866
        %v868 = vsub.f32 1.5, %v867
        %v869 = vmul.f32 %v864, %v868
        %vm870 = vweird.f32 %v851
        %vm871 = vweird.f32 %v864
        %vm872 = vmor %vm870, %vm871
        %v873 = vsel %vm872, %v864, %v869
        %v874 = vrsqrt.pop %v852
        %v875 = vmul.f32 %v874, %v852
        %v876 = vmul.f32 %v875, %v874
        %v877 = vmul.f32 0.5, %v876
        %v878 = vsub.f32 1.5, %v877
        %v879 = vmul.f32 %v874, %v878
        %vm880 = vweird.f32 %v852
        %vm881 = vweird.f32 %v874
        %vm882 = vmor %vm880, %vm881
        %v883 = vsel %vm882, %v874, %v879
        %v884 = vrsqrt.pop %v853
        %v885 = vmul.f32 %v884, %v853
        %v886 = vmul.f32 %v885, %v884
        %v887 = vmul.f32 0.5, %v886
        %v888 = vsub.f32 1.5, %v887
        %v889 = vmul.f32 %v884, %v888
        %vm890 = vweird.f32 %v853
        %vm891 = vweird.f32 %v884
        %vm892 = vmor %vm890, %vm891
        %v893 = vsel %vm892, %v884, %v889
        %v894 = vmul.f32 %v830, %v863
        %v895 = vmul.f32 %v831, %v873
        %v896 = vmul.f32 %v832, %v883
        %v897 = vmul.f32 %v833, %v893
        %v899 = vperm.slane %v809, 0
        %v901 = vmul.f32 %v894, %v899
        %v902 = vmul.f32 %v895, %v899
        %v903 = vmul.f32 %v896, %v899
        %v904 = vmul.f32 %v897, %v899
        %v906 = vperm.slane %v810, 0
        %v908 = vadd.f32 %v901, %v906
        %v909 = vadd.f32 %v902, %v906
        %v910 = vadd.f32 %v903, %v906
        %v911 = vadd.f32 %v904, %v906
        %v912 = vpack.c.bf16 %v909, %v908
        %v913 = vpack.c.bf16 %v911, %v910
        %v914 = vld [vmem:[%s641] sm:$0xff]
        %v915 = vld [vmem:[%s641 + $0x8] sm:$0xf]
        %v916 = vld [vmem:[%s641 + $0xc] sm:$0xff]
        %v917 = vld [vmem:[%s641 + $0x14] sm:$0xf]
        %v918 = vld [vmem:[%s641 + $0x18] sm:$0xff]
        %v919 = vld [vmem:[%s641 + $0x20] sm:$0xf]
        %v920 = vld [vmem:[%s641 + $0x24] sm:$0xff]
        %v921 = vld [vmem:[%s641 + $0x2c] sm:$0xf]
        %v922 = vld [vmem:[%s641 + $0x30] sm:$0xff]
        %v923 = vld [vmem:[%s641 + $0x38] sm:$0xf]
        %v924 = vld [vmem:[%s641 + $0x3c] sm:$0xff]
        %v925 = vld [vmem:[%s641 + $0x44] sm:$0xf]
        %v926 = vld [vmem:[%s641 + $0x48] sm:$0xff]
        %v927 = vld [vmem:[%s641 + $0x50] sm:$0xf]
        %v928 = vld [vmem:[%s641 + $0x54] sm:$0xff]
        %v929 = vld [vmem:[%s641 + $0x5c] sm:$0xf]
        %v930 = vld [vmem:[%s641 + $0x60] sm:$0xff]
        %v931 = vld [vmem:[%s641 + $0x68] sm:$0xf]
        %v932 = vld [vmem:[%s641 + $0x6c] sm:$0xff]
        %v933 = vld [vmem:[%s641 + $0x74] sm:$0xf]
        %v934 = vld [vmem:[%s641 + $0x78] sm:$0xff]
        %v935 = vld [vmem:[%s641 + $0x80] sm:$0xf]
        %v936 = vld [vmem:[%s641 + $0x84] sm:$0xff]
        %v937 = vld [vmem:[%s641 + $0x8c] sm:$0xf]
        %v938 = vld [vmem:[%s641 + $0x90] sm:$0xff]
        %v939 = vld [vmem:[%s641 + $0x98] sm:$0xf]
        %v940 = vld [vmem:[%s641 + $0x9c] sm:$0xff]
        %v941 = vld [vmem:[%s641 + $0xa4] sm:$0xf]
        %v942 = vld [vmem:[%s641 + $0xa8] sm:$0xff]
        %v943 = vld [vmem:[%s641 + $0xb0] sm:$0xf]
        %v944 = vld [vmem:[%s641 + $0xb4] sm:$0xff]
        %v945 = vld [vmem:[%s641 + $0xbc] sm:$0xf]
        %v946 = vld [vmem:[%s769] sm:$0x7]
        %v948 = vperm.slane %v946, 0
        %v949 = vperm.slane %v946, 1
        %v950 = vperm.slane %v946, 2
        %v986 = vunpack.c.l.b16 %v914
        %v987 = vunpack.c.h.b16 %v914
        %v988 = vunpack.c.l.b16 %v915
        %v989 = vunpack.c.l.b16 %v916
        %v990 = vunpack.c.h.b16 %v916
        %v991 = vunpack.c.l.b16 %v917
        %v992 = vunpack.c.l.b16 %v918
        %v993 = vunpack.c.h.b16 %v918
        %v994 = vunpack.c.l.b16 %v919
        %v995 = vunpack.c.l.b16 %v920
        %v996 = vunpack.c.h.b16 %v920
        %v997 = vunpack.c.l.b16 %v921
        %v998 = vunpack.c.l.b16 %v922
        %v999 = vunpack.c.h.b16 %v922
        %v1000 = vunpack.c.l.b16 %v923
        %v1001 = vunpack.c.l.b16 %v924
        %v1002 = vunpack.c.h.b16 %v924
        %v1003 = vunpack.c.l.b16 %v925
        %v1004 = vunpack.c.l.b16 %v926
        %v1005 = vunpack.c.h.b16 %v926
        %v1006 = vunpack.c.l.b16 %v927
        %v1007 = vunpack.c.l.b16 %v928
        %v1008 = vunpack.c.h.b16 %v928
        %v1009 = vunpack.c.l.b16 %v929
        %v1010 = vunpack.c.l.b16 %v930
        %v1011 = vunpack.c.h.b16 %v930
        %v1012 = vunpack.c.l.b16 %v931
        %v1013 = vunpack.c.l.b16 %v932
        %v1014 = vunpack.c.h.b16 %v932
        %v1015 = vunpack.c.l.b16 %v933
        %v1016 = vunpack.c.l.b16 %v934
        %v1017 = vunpack.c.h.b16 %v934
        %v1018 = vunpack.c.l.b16 %v935
        %v1019 = vunpack.c.l.b16 %v936
        %v1020 = vunpack.c.h.b16 %v936
        %v1021 = vunpack.c.l.b16 %v937
        %v1022 = vunpack.c.l.b16 %v938
        %v1023 = vunpack.c.h.b16 %v938
        %v1024 = vunpack.c.l.b16 %v939
        %v1025 = vunpack.c.l.b16 %v940
        %v1026 = vunpack.c.h.b16 %v940
        %v1027 = vunpack.c.l.b16 %v941
        %v1028 = vunpack.c.l.b16 %v942
        %v1029 = vunpack.c.h.b16 %v942
        %v1030 = vunpack.c.l.b16 %v943
        %v1031 = vunpack.c.l.b16 %v944
        %v1032 = vunpack.c.h.b16 %v944
        %v1033 = vunpack.c.l.b16 %v945
        %v1034 = vpack.c.b16 %v989, %v986
        %v1035 = vpack.c.b16 %v990, %v987
        %v1036 = vpack.c.b16 %v991, %v988
        %v1037 = vpack.c.b16 %v995, %v992
        %v1038 = vpack.c.b16 %v996, %v993
        %v1039 = vpack.c.b16 %v997, %v994
        %v1040 = vpack.c.b16 %v1001, %v998
        %v1041 = vpack.c.b16 %v1002, %v999
        %v1042 = vpack.c.b16 %v1003, %v1000
        %v1043 = vpack.c.b16 %v1007, %v1004
        %v1044 = vpack.c.b16 %v1008, %v1005
        %v1045 = vpack.c.b16 %v1009, %v1006
        %v1046 = vpack.c.b16 %v1013, %v1010
        %v1047 = vpack.c.b16 %v1014, %v1011
        %v1048 = vpack.c.b16 %v1015, %v1012
        %v1049 = vpack.c.b16 %v1019, %v1016
        %v1050 = vpack.c.b16 %v1020, %v1017
        %v1051 = vpack.c.b16 %v1021, %v1018
        %v1052 = vpack.c.b16 %v1025, %v1022
        %v1053 = vpack.c.b16 %v1026, %v1023
        %v1054 = vpack.c.b16 %v1027, %v1024
        %v1055 = vpack.c.b16 %v1031, %v1028
        %v1056 = vpack.c.b16 %v1032, %v1029
        %v1057 = vpack.c.b16 %v1033, %v1030
        %1082 = vmatpush.bf16.msra.mxu0 %v1055
        %1083 = vmatpush.bf16.msra.mxu0 %v1052
        %1084 = vmatpush.bf16.msra.mxu0 %v1049
        %1085 = vmatpush.bf16.msra.mxu0 %v1046
        %1086 = vmatpush.bf16.msra.mxu0 %v1043
        %1087 = vmatpush.bf16.msra.mxu0 %v1040
        %1088 = vmatpush.bf16.msra.mxu0 %v1037
        %1089 = vmatpush.bf16.msra.mxu0 %v1034
        %1090 = vmatmul.bf16.gmra.mxu0 %v912
        %v1091 = vpop.f32.mrf.mxu0
        %v1092 = vadd.f32 %v948, %v1091
        %v1093 = vpop.f32.mrf.mxu0
        %v1094 = vadd.f32 %v948, %v1093
        %1095 = vmatmul.bf16.gmra.mxu0 %v913
        %v1096 = vpop.f32.mrf.mxu0
        %v1097 = vadd.f32 %v948, %v1096
        %v1098 = vpop.f32.mrf.mxu0
        %v1099 = vadd.f32 %v948, %v1098
        %1100 = vdwg.mxu0
        %1101 = vmatpush.bf16.msra.mxu0 %v1056
        %1102 = vmatpush.bf16.msra.mxu0 %v1053
        %1103 = vmatpush.bf16.msra.mxu0 %v1050
        %1104 = vmatpush.bf16.msra.mxu0 %v1047
        %1105 = vmatpush.bf16.msra.mxu0 %v1044
        %1106 = vmatpush.bf16.msra.mxu0 %v1041
        %1107 = vmatpush.bf16.msra.mxu0 %v1038
        %1108 = vmatpush.bf16.msra.mxu0 %v1035
        %1109 = vmatmul.bf16.gmra.mxu0 %v912
        %v1110 = vpop.f32.mrf.mxu0
        %v1111 = vadd.f32 %v949, %v1110
        %v1112 = vpop.f32.mrf.mxu0
        %v1113 = vadd.f32 %v949, %v1112
        %1114 = vmatmul.bf16.gmra.mxu0 %v913
        %v1115 = vpop.f32.mrf.mxu0
        %v1116 = vadd.f32 %v949, %v1115
        %v1117 = vpop.f32.mrf.mxu0
        %v1118 = vadd.f32 %v949, %v1117
        %1119 = vdwg.mxu0
        %1120 = vmatpush.bf16.msra.mxu0 %v1057
        %1121 = vmatpush.bf16.msra.mxu0 %v1054
        %1122 = vmatpush.bf16.msra.mxu0 %v1051
        %1123 = vmatpush.bf16.msra.mxu0 %v1048
        %1124 = vmatpush.bf16.msra.mxu0 %v1045
        %1125 = vmatpush.bf16.msra.mxu0 %v1042
        %1126 = vmatpush.bf16.msra.mxu0 %v1039
        %1127 = vmatpush.bf16.msra.mxu0 %v1036
        %1128 = vmatmul.bf16.gmra.mxu0 %v912
        %v1129 = vpop.f32.mrf.mxu0
        %v1130 = vadd.f32 %v950, %v1129
        %v1131 = vpop.f32.mrf.mxu0
        %v1132 = vadd.f32 %v950, %v1131
        %1133 = vmatmul.bf16.gmra.mxu0 %v913
        %v1134 = vpop.f32.mrf.mxu0
        %v1135 = vadd.f32 %v950, %v1134
        %v1136 = vpop.f32.mrf.mxu0
        %v1137 = vadd.f32 %v950, %v1136
        %1138 = vdwg.mxu0
        %v1139 = vmul.f32 %v1092, 0.17677669
        %v1140 = vmul.f32 %v1094, 0.17677669
        %v1141 = vmul.f32 %v1097, 0.17677669
        %v1142 = vmul.f32 %v1099, 0.17677669
        %1147 = vrot.lane.b32.xlu0 %v1139, 96
        %v1148 = vpop.permute.xlu0 %1147
        %1149 = vrot.lane.b32.xlu0 %v1140, 96
        %v1150 = vpop.permute.xlu0 %1149
        %1151 = vrot.lane.b32.xlu0 %v1141, 96
        %v1152 = vpop.permute.xlu0 %1151
        %1153 = vrot.lane.b32.xlu0 %v1142, 96
        %v1154 = vpop.permute.xlu0 %1153
        %1159 = vrot.lane.b32.xlu0 %v1139, 64
        %v1160 = vpop.permute.xlu0 %1159
        %1161 = vrot.lane.b32.xlu0 %v1140, 64
        %v1162 = vpop.permute.xlu0 %1161
        %1163 = vrot.lane.b32.xlu0 %v1141, 64
        %v1164 = vpop.permute.xlu0 %1163
        %1165 = vrot.lane.b32.xlu0 %v1142, 64
        %v1166 = vpop.permute.xlu0 %1165
        %1171 = vrot.lane.b32.xlu0 %v1139, 32
        %v1172 = vpop.permute.xlu0 %1171
        %1173 = vrot.lane.b32.xlu0 %v1140, 32
        %v1174 = vpop.permute.xlu0 %1173
        %1175 = vrot.lane.b32.xlu0 %v1141, 32
        %v1176 = vpop.permute.xlu0 %1175
        %1177 = vrot.lane.b32.xlu0 %v1142, 32
        %v1178 = vpop.permute.xlu0 %1177
        %v1183 = vpack.c.bf16 %v1139, %v1139
        %v1184 = vpack.c.bf16 %v1140, %v1140
        %v1185 = vpack.c.bf16 %v1148, %v1148
        %v1186 = vpack.c.bf16 %v1150, %v1150
        %v1187 = vpack.c.bf16 %v1160, %v1160
        %v1188 = vpack.c.bf16 %v1162, %v1162
        %v1189 = vpack.c.bf16 %v1172, %v1172
        %v1190 = vpack.c.bf16 %v1174, %v1174
        %v1191 = vpack.c.bf16 %v1141, %v1141
        %v1192 = vpack.c.bf16 %v1142, %v1142
        %v1193 = vpack.c.bf16 %v1152, %v1152
        %v1194 = vpack.c.bf16 %v1154, %v1154
        %v1195 = vpack.c.bf16 %v1164, %v1164
        %v1196 = vpack.c.bf16 %v1166, %v1166
        %v1197 = vpack.c.bf16 %v1176, %v1176
        %v1198 = vpack.c.bf16 %v1178, %v1178
        %1203 = vrot.lane.b32.xlu0 %v1111, 96
        %v1204 = vpop.permute.xlu0 %1203
        %1205 = vrot.lane.b32.xlu0 %v1113, 96
        %v1206 = vpop.permute.xlu0 %1205
        %1207 = vrot.lane.b32.xlu0 %v1116, 96
        %v1208 = vpop.permute.xlu0 %1207
        %1209 = vrot.lane.b32.xlu0 %v1118, 96
        %v1210 = vpop.permute.xlu0 %1209
        %1215 = vrot.lane.b32.xlu0 %v1111, 64
        %v1216 = vpop.permute.xlu0 %1215
        %1217 = vrot.lane.b32.xlu0 %v1113, 64
        %v1218 = vpop.permute.xlu0 %1217
        %1219 = vrot.lane.b32.xlu0 %v1116, 64
        %v1220 = vpop.permute.xlu0 %1219
        %1221 = vrot.lane.b32.xlu0 %v1118, 64
        %v1222 = vpop.permute.xlu0 %1221
        %1227 = vrot.lane.b32.xlu0 %v1111, 32
        %v1228 = vpop.permute.xlu0 %1227
        %1229 = vrot.lane.b32.xlu0 %v1113, 32
        %v1230 = vpop.permute.xlu0 %1229
        %1231 = vrot.lane.b32.xlu0 %v1116, 32
        %v1232 = vpop.permute.xlu0 %1231
        %1233 = vrot.lane.b32.xlu0 %v1118, 32
        %v1234 = vpop.permute.xlu0 %1233
        %v1239 = vpack.c.bf16 %v1111, %v1111
        %v1240 = vpack.c.bf16 %v1113, %v1113
        %v1241 = vpack.c.bf16 %v1204, %v1204
        %v1242 = vpack.c.bf16 %v1206, %v1206
        %v1243 = vpack.c.bf16 %v1216, %v1216
        %v1244 = vpack.c.bf16 %v1218, %v1218
        %v1245 = vpack.c.bf16 %v1228, %v1228
        %v1246 = vpack.c.bf16 %v1230, %v1230
        %v1247 = vpack.c.bf16 %v1116, %v1116
        %v1248 = vpack.c.bf16 %v1118, %v1118
        %v1249 = vpack.c.bf16 %v1208, %v1208
        %v1250 = vpack.c.bf16 %v1210, %v1210
        %v1251 = vpack.c.bf16 %v1220, %v1220
        %v1252 = vpack.c.bf16 %v1222, %v1222
        %v1253 = vpack.c.bf16 %v1232, %v1232
        %v1254 = vpack.c.bf16 %v1234, %v1234
        %1259 = vrot.lane.b32.xlu0 %v1130, 96
        %v1260 = vpop.permute.xlu0 %1259
        %1261 = vrot.lane.b32.xlu0 %v1132, 96
        %v1262 = vpop.permute.xlu0 %1261
        %1263 = vrot.lane.b32.xlu0 %v1135, 96
        %v1264 = vpop.permute.xlu0 %1263
        %1265 = vrot.lane.b32.xlu0 %v1137, 96
        %v1266 = vpop.permute.xlu0 %1265
        %1271 = vrot.lane.b32.xlu0 %v1130, 64
        %v1272 = vpop.permute.xlu0 %1271
        %1273 = vrot.lane.b32.xlu0 %v1132, 64
        %v1274 = vpop.permute.xlu0 %1273
        %1275 = vrot.lane.b32.xlu0 %v1135, 64
        %v1276 = vpop.permute.xlu0 %1275
        %1277 = vrot.lane.b32.xlu0 %v1137, 64
        %v1278 = vpop.permute.xlu0 %1277
        %1283 = vrot.lane.b32.xlu0 %v1130, 32
        %v1284 = vpop.permute.xlu0 %1283
        %1285 = vrot.lane.b32.xlu0 %v1132, 32
        %v1286 = vpop.permute.xlu0 %1285
        %1287 = vrot.lane.b32.xlu0 %v1135, 32
        %v1288 = vpop.permute.xlu0 %1287
        %1289 = vrot.lane.b32.xlu0 %v1137, 32
        %v1290 = vpop.permute.xlu0 %1289
        %v1295 = vpack.c.bf16 %v1130, %v1130
        %v1296 = vpack.c.bf16 %v1132, %v1132
        %v1297 = vpack.c.bf16 %v1260, %v1260
        %v1298 = vpack.c.bf16 %v1262, %v1262
        %v1299 = vpack.c.bf16 %v1272, %v1272
        %v1300 = vpack.c.bf16 %v1274, %v1274
        %v1301 = vpack.c.bf16 %v1284, %v1284
        %v1302 = vpack.c.bf16 %v1286, %v1286
        %v1303 = vpack.c.bf16 %v1135, %v1135
        %v1304 = vpack.c.bf16 %v1137, %v1137
        %v1305 = vpack.c.bf16 %v1264, %v1264
        %v1306 = vpack.c.bf16 %v1266, %v1266
        %v1307 = vpack.c.bf16 %v1276, %v1276
        %v1308 = vpack.c.bf16 %v1278, %v1278
        %v1309 = vpack.c.bf16 %v1288, %v1288
        %v1310 = vpack.c.bf16 %v1290, %v1290
        %v1311 = vld [vmem:[%s1] sm:$0xff]
        %v1312 = vld [vmem:[%s1 + $0x8] sm:$0xff]
        %v1315 = vunpack.c.l.b16 %v1183
        %v1316 = vunpack.c.l.b16 %v1184
        %v1317 = vpack.c.b16 %v1316, %v1315
        %v1320 = vunpack.c.l.b16 %v1239
        %v1321 = vunpack.c.l.b16 %v1240
        %v1322 = vpack.c.b16 %v1321, %v1320
        %vm1323 = vcmask 261120
        %v1325 = vsel %vm1323, %v1317, 0
        %v1328 = vsel %vm1323, %v1322, 0
        %1330 = vmatpush.bf16.xpose.msra.mxu0 0
        %1331 = vmatpush.bf16.xpose.msra.mxu0 0
        %1332 = vmatpush.bf16.xpose.msra.mxu0 0
        %1333 = vmatpush.bf16.xpose.msra.mxu0 0
        %1334 = vmatpush.bf16.xpose.msra.mxu0 0
        %1335 = vmatpush.bf16.xpose.msra.mxu0 0
        %1336 = vmatpush.bf16.xpose.msra.mxu0 0
        %1337 = vmatpush.bf16.xpose.msra.mxu0 %v1328
        %1338 = vmatmul.bf16.gmra.mxu0 %v1325
        %v1339 = vpop.f32.mrf.mxu0
        %v1340 = vadd.f32 %v1311, %v1339
        %v1341 = vpop.f32.mrf.mxu0
        %v1342 = vadd.f32 %v1312, %v1341
        %1343 = vdwg.mxu0
        %v1346 = vunpack.c.l.b16 %v1185
        %v1347 = vunpack.c.l.b16 %v1186
        %v1348 = vpack.c.b16 %v1347, %v1346
        %v1351 = vunpack.c.l.b16 %v1241
        %v1352 = vunpack.c.l.b16 %v1242
        %v1353 = vpack.c.b16 %v1352, %v1351
        %v1355 = vsel %vm1323, %v1348, 0
        %v1358 = vsel %vm1323, %v1353, 0
        %1360 = vmatpush.bf16.xpose.msra.mxu0 0
        %1361 = vmatpush.bf16.xpose.msra.mxu0 0
        %1362 = vmatpush.bf16.xpose.msra.mxu0 0
        %1363 = vmatpush.bf16.xpose.msra.mxu0 0
        %1364 = vmatpush.bf16.xpose.msra.mxu0 0
        %1365 = vmatpush.bf16.xpose.msra.mxu0 0
        %1366 = vmatpush.bf16.xpose.msra.mxu0 0
        %1367 = vmatpush.bf16.xpose.msra.mxu0 %v1358
        %1368 = vmatmul.bf16.gmra.mxu0 %v1355
        %v1369 = vpop.f32.mrf.mxu0
        %v1370 = vadd.f32 %v1311, %v1369
        %v1371 = vpop.f32.mrf.mxu0
        %v1372 = vadd.f32 %v1312, %v1371
        %1373 = vdwg.mxu0
        %v1376 = vunpack.c.l.b16 %v1187
        %v1377 = vunpack.c.l.b16 %v1188
        %v1378 = vpack.c.b16 %v1377, %v1376
        %v1381 = vunpack.c.l.b16 %v1243
        %v1382 = vunpack.c.l.b16 %v1244
        %v1383 = vpack.c.b16 %v1382, %v1381
        %v1385 = vsel %vm1323, %v1378, 0
        %v1388 = vsel %vm1323, %v1383, 0
        %1390 = vmatpush.bf16.xpose.msra.mxu0 0
        %1391 = vmatpush.bf16.xpose.msra.mxu0 0
        %1392 = vmatpush.bf16.xpose.msra.mxu0 0
        %1393 = vmatpush.bf16.xpose.msra.mxu0 0
        %1394 = vmatpush.bf16.xpose.msra.mxu0 0
        %1395 = vmatpush.bf16.xpose.msra.mxu0 0
        %1396 = vmatpush.bf16.xpose.msra.mxu0 0
        %1397 = vmatpush.bf16.xpose.msra.mxu0 %v1388
        %1398 = vmatmul.bf16.gmra.mxu0 %v1385
        %v1399 = vpop.f32.mrf.mxu0
        %v1400 = vadd.f32 %v1311, %v1399
        %v1401 = vpop.f32.mrf.mxu0
        %v1402 = vadd.f32 %v1312, %v1401
        %1403 = vdwg.mxu0
        %v1406 = vunpack.c.l.b16 %v1189
        %v1407 = vunpack.c.l.b16 %v1190
        %v1408 = vpack.c.b16 %v1407, %v1406
        %v1411 = vunpack.c.l.b16 %v1245
        %v1412 = vunpack.c.l.b16 %v1246
        %v1413 = vpack.c.b16 %v1412, %v1411
        %v1415 = vsel %vm1323, %v1408, 0
        %v1418 = vsel %vm1323, %v1413, 0
        %1420 = vmatpush.bf16.xpose.msra.mxu0 0
        %1421 = vmatpush.bf16.xpose.msra.mxu0 0
        %1422 = vmatpush.bf16.xpose.msra.mxu0 0
        %1423 = vmatpush.bf16.xpose.msra.mxu0 0
        %1424 = vmatpush.bf16.xpose.msra.mxu0 0
        %1425 = vmatpush.bf16.xpose.msra.mxu0 0
        %1426 = vmatpush.bf16.xpose.msra.mxu0 0
        %1427 = vmatpush.bf16.xpose.msra.mxu0 %v1418
        %1428 = vmatmul.bf16.gmra.mxu0 %v1415
        %v1429 = vpop.f32.mrf.mxu0
        %v1430 = vadd.f32 %v1311, %v1429
        %v1431 = vpop.f32.mrf.mxu0
        %v1432 = vadd.f32 %v1312, %v1431
        %1433 = vdwg.mxu0
        %v1436 = vunpack.c.l.b16 %v1191
        %v1437 = vunpack.c.l.b16 %v1192
        %v1438 = vpack.c.b16 %v1437, %v1436
        %v1441 = vunpack.c.l.b16 %v1247
        %v1442 = vunpack.c.l.b16 %v1248
        %v1443 = vpack.c.b16 %v1442, %v1441
        %v1445 = vsel %vm1323, %v1438, 0
        %v1448 = vsel %vm1323, %v1443, 0
        %1450 = vmatpush.bf16.xpose.msra.mxu0 0
        %1451 = vmatpush.bf16.xpose.msra.mxu0 0
        %1452 = vmatpush.bf16.xpose.msra.mxu0 0
        %1453 = vmatpush.bf16.xpose.msra.mxu0 0
        %1454 = vmatpush.bf16.xpose.msra.mxu0 0
        %1455 = vmatpush.bf16.xpose.msra.mxu0 0
        %1456 = vmatpush.bf16.xpose.msra.mxu0 0
        %1457 = vmatpush.bf16.xpose.msra.mxu0 %v1448
        %1458 = vmatmul.bf16.gmra.mxu0 %v1445
        %v1459 = vpop.f32.mrf.mxu0
        %v1460 = vadd.f32 %v1311, %v1459
        %v1461 = vpop.f32.mrf.mxu0
        %v1462 = vadd.f32 %v1312, %v1461
        %1463 = vdwg.mxu0
        %v1466 = vunpack.c.l.b16 %v1193
        %v1467 = vunpack.c.l.b16 %v1194
        %v1468 = vpack.c.b16 %v1467, %v1466
        %v1471 = vunpack.c.l.b16 %v1249
        %v1472 = vunpack.c.l.b16 %v1250
        %v1473 = vpack.c.b16 %v1472, %v1471
        %v1475 = vsel %vm1323, %v1468, 0
        %v1478 = vsel %vm1323, %v1473, 0
        %1480 = vmatpush.bf16.xpose.msra.mxu0 0
        %1481 = vmatpush.bf16.xpose.msra.mxu0 0
        %1482 = vmatpush.bf16.xpose.msra.mxu0 0
        %1483 = vmatpush.bf16.xpose.msra.mxu0 0
        %1484 = vmatpush.bf16.xpose.msra.mxu0 0
        %1485 = vmatpush.bf16.xpose.msra.mxu0 0
        %1486 = vmatpush.bf16.xpose.msra.mxu0 0
        %1487 = vmatpush.bf16.xpose.msra.mxu0 %v1478
        %1488 = vmatmul.bf16.gmra.mxu0 %v1475
        %v1489 = vpop.f32.mrf.mxu0
        %v1490 = vadd.f32 %v1311, %v1489
        %v1491 = vpop.f32.mrf.mxu0
        %v1492 = vadd.f32 %v1312, %v1491
        %1493 = vdwg.mxu0
        %v1496 = vunpack.c.l.b16 %v1195
        %v1497 = vunpack.c.l.b16 %v1196
        %v1498 = vpack.c.b16 %v1497, %v1496
        %v1501 = vunpack.c.l.b16 %v1251
        %v1502 = vunpack.c.l.b16 %v1252
        %v1503 = vpack.c.b16 %v1502, %v1501
        %v1505 = vsel %vm1323, %v1498, 0
        %v1508 = vsel %vm1323, %v1503, 0
        %1510 = vmatpush.bf16.xpose.msra.mxu0 0
        %1511 = vmatpush.bf16.xpose.msra.mxu0 0
        %1512 = vmatpush.bf16.xpose.msra.mxu0 0
        %1513 = vmatpush.bf16.xpose.msra.mxu0 0
        %1514 = vmatpush.bf16.xpose.msra.mxu0 0
        %1515 = vmatpush.bf16.xpose.msra.mxu0 0
        %1516 = vmatpush.bf16.xpose.msra.mxu0 0
        %1517 = vmatpush.bf16.xpose.msra.mxu0 %v1508
        %1518 = vmatmul.bf16.gmra.mxu0 %v1505
        %v1519 = vpop.f32.mrf.mxu0
        %v1520 = vadd.f32 %v1311, %v1519
        %v1521 = vpop.f32.mrf.mxu0
        %v1522 = vadd.f32 %v1312, %v1521
        %1523 = vdwg.mxu0
        %v1526 = vunpack.c.l.b16 %v1197
        %v1527 = vunpack.c.l.b16 %v1198
        %v1528 = vpack.c.b16 %v1527, %v1526
        %v1531 = vunpack.c.l.b16 %v1253
        %v1532 = vunpack.c.l.b16 %v1254
        %v1533 = vpack.c.b16 %v1532, %v1531
        %v1535 = vsel %vm1323, %v1528, 0
        %v1538 = vsel %vm1323, %v1533, 0
        %1540 = vmatpush.bf16.xpose.msra.mxu0 0
        %1541 = vmatpush.bf16.xpose.msra.mxu0 0
        %1542 = vmatpush.bf16.xpose.msra.mxu0 0
        %1543 = vmatpush.bf16.xpose.msra.mxu0 0
        %1544 = vmatpush.bf16.xpose.msra.mxu0 0
        %1545 = vmatpush.bf16.xpose.msra.mxu0 0
        %1546 = vmatpush.bf16.xpose.msra.mxu0 0
        %1547 = vmatpush.bf16.xpose.msra.mxu0 %v1538
        %1548 = vmatmul.bf16.gmra.mxu0 %v1535
        %v1549 = vpop.f32.mrf.mxu0
        %v1550 = vadd.f32 %v1311, %v1549
        %v1551 = vpop.f32.mrf.mxu0
        %v1552 = vadd.f32 %v1312, %v1551
        %1553 = vdwg.mxu0
        %vm1554 = vcmask 130048
        %v1555 = vsel %vm1554, %v1340, -inf
        %1556 = vmax.xlane.f32.xlu0 %v1555
        %v1557 = vpop.xlane.xlu0 %1556
        %v1558 = vsel %vm1554, %v1342, -inf
        %1559 = vmax.xlane.f32.xlu0 %v1558
        %v1560 = vpop.xlane.xlu0 %1559
        %v1561 = vsel %vm1554, %v1370, -inf
        %1562 = vmax.xlane.f32.xlu0 %v1561
        %v1563 = vpop.xlane.xlu0 %1562
        %v1564 = vsel %vm1554, %v1372, -inf
        %1565 = vmax.xlane.f32.xlu0 %v1564
        %v1566 = vpop.xlane.xlu0 %1565
        %v1567 = vsel %vm1554, %v1400, -inf
        %1568 = vmax.xlane.f32.xlu0 %v1567
        %v1569 = vpop.xlane.xlu0 %1568
        %v1570 = vsel %vm1554, %v1402, -inf
        %1571 = vmax.xlane.f32.xlu0 %v1570
        %v1572 = vpop.xlane.xlu0 %1571
        %v1573 = vsel %vm1554, %v1430, -inf
        %1574 = vmax.xlane.f32.xlu0 %v1573
        %v1575 = vpop.xlane.xlu0 %1574
        %v1576 = vsel %vm1554, %v1432, -inf
        %1577 = vmax.xlane.f32.xlu0 %v1576
        %v1578 = vpop.xlane.xlu0 %1577
        %v1579 = vsel %vm1554, %v1460, -inf
        %1580 = vmax.xlane.f32.xlu0 %v1579
        %v1581 = vpop.xlane.xlu0 %1580
        %v1582 = vsel %vm1554, %v1462, -inf
        %1583 = vmax.xlane.f32.xlu0 %v1582
        %v1584 = vpop.xlane.xlu0 %1583
        %v1585 = vsel %vm1554, %v1490, -inf
        %1586 = vmax.xlane.f32.xlu0 %v1585
        %v1587 = vpop.xlane.xlu0 %1586
        %v1588 = vsel %vm1554, %v1492, -inf
        %1589 = vmax.xlane.f32.xlu0 %v1588
        %v1590 = vpop.xlane.xlu0 %1589
        %v1591 = vsel %vm1554, %v1520, -inf
        %1592 = vmax.xlane.f32.xlu0 %v1591
        %v1593 = vpop.xlane.xlu0 %1592
        %v1594 = vsel %vm1554, %v1522, -inf
        %1595 = vmax.xlane.f32.xlu0 %v1594
        %v1596 = vpop.xlane.xlu0 %1595
        %v1597 = vsel %vm1554, %v1550, -inf
        %1598 = vmax.xlane.f32.xlu0 %v1597
        %v1599 = vpop.xlane.xlu0 %1598
        %v1600 = vsel %vm1554, %v1552, -inf
        %1601 = vmax.xlane.f32.xlu0 %v1600
        %v1602 = vpop.xlane.xlu0 %1601
        %v1603 = vsub.f32 %v1340, %v1557
        %v1604 = vsub.f32 %v1342, %v1560
        %v1605 = vsub.f32 %v1370, %v1563
        %v1606 = vsub.f32 %v1372, %v1566
        %v1607 = vsub.f32 %v1400, %v1569
        %v1608 = vsub.f32 %v1402, %v1572
        %v1609 = vsub.f32 %v1430, %v1575
        %v1610 = vsub.f32 %v1432, %v1578
        %v1611 = vsub.f32 %v1460, %v1581
        %v1612 = vsub.f32 %v1462, %v1584
        %v1613 = vsub.f32 %v1490, %v1587
        %v1614 = vsub.f32 %v1492, %v1590
        %v1615 = vsub.f32 %v1520, %v1593
        %v1616 = vsub.f32 %v1522, %v1596
        %v1617 = vsub.f32 %v1550, %v1599
        %v1618 = vsub.f32 %v1552, %v1602
        %v1619 = vmul.f32 %v1603, 1.442695
        %v1620 = vpow.pop %v1619
        %v1621 = vmul.f32 %v1604, 1.442695
        %v1622 = vpow.pop %v1621
        %v1623 = vmul.f32 %v1605, 1.442695
        %v1624 = vpow.pop %v1623
        %v1625 = vmul.f32 %v1606, 1.442695
        %v1626 = vpow.pop %v1625
        %v1627 = vmul.f32 %v1607, 1.442695
        %v1628 = vpow.pop %v1627
        %v1629 = vmul.f32 %v1608, 1.442695
        %v1630 = vpow.pop %v1629
        %v1631 = vmul.f32 %v1609, 1.442695
        %v1632 = vpow.pop %v1631
        %v1633 = vmul.f32 %v1610, 1.442695
        %v1634 = vpow.pop %v1633
        %v1635 = vmul.f32 %v1611, 1.442695
        %v1636 = vpow.pop %v1635
        %v1637 = vmul.f32 %v1612, 1.442695
        %v1638 = vpow.pop %v1637
        %v1639 = vmul.f32 %v1613, 1.442695
        %v1640 = vpow.pop %v1639
        %v1641 = vmul.f32 %v1614, 1.442695
        %v1642 = vpow.pop %v1641
        %v1643 = vmul.f32 %v1615, 1.442695
        %v1644 = vpow.pop %v1643
        %v1645 = vmul.f32 %v1616, 1.442695
        %v1646 = vpow.pop %v1645
        %v1647 = vmul.f32 %v1617, 1.442695
        %v1648 = vpow.pop %v1647
        %v1649 = vmul.f32 %v1618, 1.442695
        %v1650 = vpow.pop %v1649
        %v1651 = vsel %vm1554, %v1620, 0.0
        %1652 = vadd.xlane.f32.xlu0 %v1651
        %v1653 = vpop.xlane.xlu0 %1652
        %v1654 = vsel %vm1554, %v1622, 0.0
        %1655 = vadd.xlane.f32.xlu0 %v1654
        %v1656 = vpop.xlane.xlu0 %1655
        %v1657 = vsel %vm1554, %v1624, 0.0
        %1658 = vadd.xlane.f32.xlu0 %v1657
        %v1659 = vpop.xlane.xlu0 %1658
        %v1660 = vsel %vm1554, %v1626, 0.0
        %1661 = vadd.xlane.f32.xlu0 %v1660
        %v1662 = vpop.xlane.xlu0 %1661
        %v1663 = vsel %vm1554, %v1628, 0.0
        %1664 = vadd.xlane.f32.xlu0 %v1663
        %v1665 = vpop.xlane.xlu0 %1664
        %v1666 = vsel %vm1554, %v1630, 0.0
        %1667 = vadd.xlane.f32.xlu0 %v1666
        %v1668 = vpop.xlane.xlu0 %1667
        %v1669 = vsel %vm1554, %v1632, 0.0
        %1670 = vadd.xlane.f32.xlu0 %v1669
        %v1671 = vpop.xlane.xlu0 %1670
        %v1672 = vsel %vm1554, %v1634, 0.0
        %1673 = vadd.xlane.f32.xlu0 %v1672
        %v1674 = vpop.xlane.xlu0 %1673
        %v1675 = vsel %vm1554, %v1636, 0.0
        %1676 = vadd.xlane.f32.xlu0 %v1675
        %v1677 = vpop.xlane.xlu0 %1676
        %v1678 = vsel %vm1554, %v1638, 0.0
        %1679 = vadd.xlane.f32.xlu0 %v1678
        %v1680 = vpop.xlane.xlu0 %1679
        %v1681 = vsel %vm1554, %v1640, 0.0
        %1682 = vadd.xlane.f32.xlu0 %v1681
        %v1683 = vpop.xlane.xlu0 %1682
        %v1684 = vsel %vm1554, %v1642, 0.0
        %1685 = vadd.xlane.f32.xlu0 %v1684
        %v1686 = vpop.xlane.xlu0 %1685
        %v1687 = vsel %vm1554, %v1644, 0.0
        %1688 = vadd.xlane.f32.xlu0 %v1687
        %v1689 = vpop.xlane.xlu0 %1688
        %v1690 = vsel %vm1554, %v1646, 0.0
        %1691 = vadd.xlane.f32.xlu0 %v1690
        %v1692 = vpop.xlane.xlu0 %1691
        %v1693 = vsel %vm1554, %v1648, 0.0
        %1694 = vadd.xlane.f32.xlu0 %v1693
        %v1695 = vpop.xlane.xlu0 %1694
        %v1696 = vsel %vm1554, %v1650, 0.0
        %1697 = vadd.xlane.f32.xlu0 %v1696
        %v1698 = vpop.xlane.xlu0 %1697
        %v1699 = vrcp.pop %v1653
        %v1700 = vrcp.pop %v1656
        %v1701 = vrcp.pop %v1659
        %v1702 = vrcp.pop %v1662
        %v1703 = vrcp.pop %v1665
        %v1704 = vrcp.pop %v1668
        %v1705 = vrcp.pop %v1671
        %v1706 = vrcp.pop %v1674
        %v1707 = vrcp.pop %v1677
        %v1708 = vrcp.pop %v1680
        %v1709 = vrcp.pop %v1683
        %v1710 = vrcp.pop %v1686
        %v1711 = vrcp.pop %v1689
        %v1712 = vrcp.pop %v1692
        %v1713 = vrcp.pop %v1695
        %v1714 = vrcp.pop %v1698
        %v1715 = vmul.f32 %v1620, %v1699
        %v1716 = vmul.f32 %v1622, %v1700
        %v1717 = vmul.f32 %v1624, %v1701
        %v1718 = vmul.f32 %v1626, %v1702
        %v1719 = vmul.f32 %v1628, %v1703
        %v1720 = vmul.f32 %v1630, %v1704
        %v1721 = vmul.f32 %v1632, %v1705
        %v1722 = vmul.f32 %v1634, %v1706
        %v1723 = vmul.f32 %v1636, %v1707
        %v1724 = vmul.f32 %v1638, %v1708
        %v1725 = vmul.f32 %v1640, %v1709
        %v1726 = vmul.f32 %v1642, %v1710
        %v1727 = vmul.f32 %v1644, %v1711
        %v1728 = vmul.f32 %v1646, %v1712
        %v1729 = vmul.f32 %v1648, %v1713
        %v1730 = vmul.f32 %v1650, %v1714
        %v1731 = vpack.c.bf16 %v1715, %v1715
        %v1732 = vpack.c.bf16 %v1716, %v1716
        %v1733 = vpack.c.bf16 %v1717, %v1717
        %v1734 = vpack.c.bf16 %v1718, %v1718
        %v1735 = vpack.c.bf16 %v1719, %v1719
        %v1736 = vpack.c.bf16 %v1720, %v1720
        %v1737 = vpack.c.bf16 %v1721, %v1721
        %v1738 = vpack.c.bf16 %v1722, %v1722
        %v1739 = vpack.c.bf16 %v1723, %v1723
        %v1740 = vpack.c.bf16 %v1724, %v1724
        %v1741 = vpack.c.bf16 %v1725, %v1725
        %v1742 = vpack.c.bf16 %v1726, %v1726
        %v1743 = vpack.c.bf16 %v1727, %v1727
        %v1744 = vpack.c.bf16 %v1728, %v1728
        %v1745 = vpack.c.bf16 %v1729, %v1729
        %v1746 = vpack.c.bf16 %v1730, %v1730
        %v1749 = vunpack.c.l.b16 %v1731
        %v1750 = vunpack.c.l.b16 %v1732
        %v1751 = vpack.c.b16 %v1750, %v1749
        %v1754 = vunpack.c.l.b16 %v1295
        %v1755 = vunpack.c.l.b16 %v1296
        %v1756 = vpack.c.b16 %v1755, %v1754
        %v1759 = vsel %vm1554, %v1751, 0
        %1761 = vmatpush.bf16.msra.mxu0 0
        %1762 = vmatpush.bf16.msra.mxu0 0
        %1763 = vmatpush.bf16.msra.mxu0 0
        %1764 = vmatpush.bf16.msra.mxu0 0
        %1765 = vmatpush.bf16.msra.mxu0 0
        %1766 = vmatpush.bf16.msra.mxu0 0
        %1767 = vmatpush.bf16.msra.mxu0 0
        %1768 = vmatpush.bf16.msra.mxu0 %v1756
        %1769 = vmatmul.bf16.gmra.mxu0 %v1759
        %v1770 = vpop.f32.mrf.mxu0
        %v1771 = vadd.f32 0.0, %v1770
        %v1772 = vpop.f32.mrf.mxu0
        %v1773 = vadd.f32 0.0, %v1772
        %1774 = vdwg.mxu0
        %v1777 = vunpack.c.l.b16 %v1733
        %v1778 = vunpack.c.l.b16 %v1734
        %v1779 = vpack.c.b16 %v1778, %v1777
        %v1782 = vunpack.c.l.b16 %v1297
        %v1783 = vunpack.c.l.b16 %v1298
        %v1784 = vpack.c.b16 %v1783, %v1782
        %v1787 = vsel %vm1554, %v1779, 0
        %1789 = vmatpush.bf16.msra.mxu0 0
        %1790 = vmatpush.bf16.msra.mxu0 0
        %1791 = vmatpush.bf16.msra.mxu0 0
        %1792 = vmatpush.bf16.msra.mxu0 0
        %1793 = vmatpush.bf16.msra.mxu0 0
        %1794 = vmatpush.bf16.msra.mxu0 0
        %1795 = vmatpush.bf16.msra.mxu0 0
        %1796 = vmatpush.bf16.msra.mxu0 %v1784
        %1797 = vmatmul.bf16.gmra.mxu0 %v1787
        %v1798 = vpop.f32.mrf.mxu0
        %v1799 = vadd.f32 0.0, %v1798
        %v1800 = vpop.f32.mrf.mxu0
        %v1801 = vadd.f32 0.0, %v1800
        %1802 = vdwg.mxu0
        %v1805 = vunpack.c.l.b16 %v1735
        %v1806 = vunpack.c.l.b16 %v1736
        %v1807 = vpack.c.b16 %v1806, %v1805
        %v1810 = vunpack.c.l.b16 %v1299
        %v1811 = vunpack.c.l.b16 %v1300
        %v1812 = vpack.c.b16 %v1811, %v1810
        %v1815 = vsel %vm1554, %v1807, 0
        %1817 = vmatpush.bf16.msra.mxu0 0
        %1818 = vmatpush.bf16.msra.mxu0 0
        %1819 = vmatpush.bf16.msra.mxu0 0
        %1820 = vmatpush.bf16.msra.mxu0 0
        %1821 = vmatpush.bf16.msra.mxu0 0
        %1822 = vmatpush.bf16.msra.mxu0 0
        %1823 = vmatpush.bf16.msra.mxu0 0
        %1824 = vmatpush.bf16.msra.mxu0 %v1812
        %1825 = vmatmul.bf16.gmra.mxu0 %v1815
        %v1826 = vpop.f32.mrf.mxu0
        %v1827 = vadd.f32 0.0, %v1826
        %v1828 = vpop.f32.mrf.mxu0
        %v1829 = vadd.f32 0.0, %v1828
        %1830 = vdwg.mxu0
        %v1833 = vunpack.c.l.b16 %v1737
        %v1834 = vunpack.c.l.b16 %v1738
        %v1835 = vpack.c.b16 %v1834, %v1833
        %v1838 = vunpack.c.l.b16 %v1301
        %v1839 = vunpack.c.l.b16 %v1302
        %v1840 = vpack.c.b16 %v1839, %v1838
        %v1843 = vsel %vm1554, %v1835, 0
        %1845 = vmatpush.bf16.msra.mxu0 0
        %1846 = vmatpush.bf16.msra.mxu0 0
        %1847 = vmatpush.bf16.msra.mxu0 0
        %1848 = vmatpush.bf16.msra.mxu0 0
        %1849 = vmatpush.bf16.msra.mxu0 0
        %1850 = vmatpush.bf16.msra.mxu0 0
        %1851 = vmatpush.bf16.msra.mxu0 0
        %1852 = vmatpush.bf16.msra.mxu0 %v1840
        %1853 = vmatmul.bf16.gmra.mxu0 %v1843
        %v1854 = vpop.f32.mrf.mxu0
        %v1855 = vadd.f32 0.0, %v1854
        %v1856 = vpop.f32.mrf.mxu0
        %v1857 = vadd.f32 0.0, %v1856
        %1858 = vdwg.mxu0
        %v1861 = vunpack.c.l.b16 %v1739
        %v1862 = vunpack.c.l.b16 %v1740
        %v1863 = vpack.c.b16 %v1862, %v1861
        %v1866 = vunpack.c.l.b16 %v1303
        %v1867 = vunpack.c.l.b16 %v1304
        %v1868 = vpack.c.b16 %v1867, %v1866
        %v1871 = vsel %vm1554, %v1863, 0
        %1873 = vmatpush.bf16.msra.mxu0 0
        %1874 = vmatpush.bf16.msra.mxu0 0
        %1875 = vmatpush.bf16.msra.mxu0 0
        %1876 = vmatpush.bf16.msra.mxu0 0
        %1877 = vmatpush.bf16.msra.mxu0 0
        %1878 = vmatpush.bf16.msra.mxu0 0
        %1879 = vmatpush.bf16.msra.mxu0 0
        %1880 = vmatpush.bf16.msra.mxu0 %v1868
        %1881 = vmatmul.bf16.gmra.mxu0 %v1871
        %v1882 = vpop.f32.mrf.mxu0
        %v1883 = vadd.f32 0.0, %v1882
        %v1884 = vpop.f32.mrf.mxu0
        %v1885 = vadd.f32 0.0, %v1884
        %1886 = vdwg.mxu0
        %v1889 = vunpack.c.l.b16 %v1741
        %v1890 = vunpack.c.l.b16 %v1742
        %v1891 = vpack.c.b16 %v1890, %v1889
        %v1894 = vunpack.c.l.b16 %v1305
        %v1895 = vunpack.c.l.b16 %v1306
        %v1896 = vpack.c.b16 %v1895, %v1894
        %v1899 = vsel %vm1554, %v1891, 0
        %1901 = vmatpush.bf16.msra.mxu0 0
        %1902 = vmatpush.bf16.msra.mxu0 0
        %1903 = vmatpush.bf16.msra.mxu0 0
        %1904 = vmatpush.bf16.msra.mxu0 0
        %1905 = vmatpush.bf16.msra.mxu0 0
        %1906 = vmatpush.bf16.msra.mxu0 0
        %1907 = vmatpush.bf16.msra.mxu0 0
        %1908 = vmatpush.bf16.msra.mxu0 %v1896
        %1909 = vmatmul.bf16.gmra.mxu0 %v1899
        %v1910 = vpop.f32.mrf.mxu0
        %v1911 = vadd.f32 0.0, %v1910
        %v1912 = vpop.f32.mrf.mxu0
        %v1913 = vadd.f32 0.0, %v1912
        %1914 = vdwg.mxu0
        %v1917 = vunpack.c.l.b16 %v1743
        %v1918 = vunpack.c.l.b16 %v1744
        %v1919 = vpack.c.b16 %v1918, %v1917
        %v1922 = vunpack.c.l.b16 %v1307
        %v1923 = vunpack.c.l.b16 %v1308
        %v1924 = vpack.c.b16 %v1923, %v1922
        %v1927 = vsel %vm1554, %v1919, 0
        %1929 = vmatpush.bf16.msra.mxu0 0
        %1930 = vmatpush.bf16.msra.mxu0 0
        %1931 = vmatpush.bf16.msra.mxu0 0
        %1932 = vmatpush.bf16.msra.mxu0 0
        %1933 = vmatpush.bf16.msra.mxu0 0
        %1934 = vmatpush.bf16.msra.mxu0 0
        %1935 = vmatpush.bf16.msra.mxu0 0
        %1936 = vmatpush.bf16.msra.mxu0 %v1924
        %1937 = vmatmul.bf16.gmra.mxu0 %v1927
        %v1938 = vpop.f32.mrf.mxu0
        %v1939 = vadd.f32 0.0, %v1938
        %v1940 = vpop.f32.mrf.mxu0
        %v1941 = vadd.f32 0.0, %v1940
        %1942 = vdwg.mxu0
        %v1945 = vunpack.c.l.b16 %v1745
        %v1946 = vunpack.c.l.b16 %v1746
        %v1947 = vpack.c.b16 %v1946, %v1945
        %v1950 = vunpack.c.l.b16 %v1309
        %v1951 = vunpack.c.l.b16 %v1310
        %v1952 = vpack.c.b16 %v1951, %v1950
        %v1955 = vsel %vm1554, %v1947, 0
        %1957 = vmatpush.bf16.msra.mxu0 0
        %1958 = vmatpush.bf16.msra.mxu0 0
        %1959 = vmatpush.bf16.msra.mxu0 0
        %1960 = vmatpush.bf16.msra.mxu0 0
        %1961 = vmatpush.bf16.msra.mxu0 0
        %1962 = vmatpush.bf16.msra.mxu0 0
        %1963 = vmatpush.bf16.msra.mxu0 0
        %1964 = vmatpush.bf16.msra.mxu0 %v1952
        %1965 = vmatmul.bf16.gmra.mxu0 %v1955
        %v1966 = vpop.f32.mrf.mxu0
        %v1967 = vadd.f32 0.0, %v1966
        %v1968 = vpop.f32.mrf.mxu0
        %v1969 = vadd.f32 0.0, %v1968
        %1970 = vdwg.mxu0
        %1975 = vrot.lane.b32.xlu0 %v1799, 32
        %v1976 = vpop.permute.xlu0 %1975
        %1977 = vrot.lane.b32.xlu0 %v1801, 32
        %v1978 = vpop.permute.xlu0 %1977
        %1979 = vrot.lane.b32.xlu0 %v1911, 32
        %v1980 = vpop.permute.xlu0 %1979
        %1981 = vrot.lane.b32.xlu0 %v1913, 32
        %v1982 = vpop.permute.xlu0 %1981
        %1991 = vrot.lane.b32.xlu0 %v1827, 64
        %v1992 = vpop.permute.xlu0 %1991
        %1993 = vrot.lane.b32.xlu0 %v1829, 64
        %v1994 = vpop.permute.xlu0 %1993
        %1995 = vrot.lane.b32.xlu0 %v1939, 64
        %v1996 = vpop.permute.xlu0 %1995
        %1997 = vrot.lane.b32.xlu0 %v1941, 64
        %v1998 = vpop.permute.xlu0 %1997
        %2007 = vrot.lane.b32.xlu0 %v1855, 96
        %v2008 = vpop.permute.xlu0 %2007
        %2009 = vrot.lane.b32.xlu0 %v1857, 96
        %v2010 = vpop.permute.xlu0 %2009
        %2011 = vrot.lane.b32.xlu0 %v1967, 96
        %v2012 = vpop.permute.xlu0 %2011
        %2013 = vrot.lane.b32.xlu0 %v1969, 96
        %v2014 = vpop.permute.xlu0 %2013
        %v2019 = vsel %vm1323, %v1771, %v1976
        %v2020 = vsel %vm1323, %v1773, %v1978
        %v2021 = vsel %vm1323, %v1883, %v1980
        %v2022 = vsel %vm1323, %v1885, %v1982
        %vm2023 = vcmask 523264
        %v2024 = vsel %vm2023, %v2019, %v1992
        %v2025 = vsel %vm2023, %v2020, %v1994
        %v2026 = vsel %vm2023, %v2021, %v1996
        %v2027 = vsel %vm2023, %v2022, %v1998
        %vm2028 = vcmask 785408
        %v2029 = vsel %vm2028, %v2024, %v2008
        %v2030 = vsel %vm2028, %v2025, %v2010
        %v2031 = vsel %vm2028, %v2026, %v2012
        %v2032 = vsel %vm2028, %v2027, %v2014
        %v2033 = vpack.c.bf16 %v2030, %v2029
        %v2034 = vpack.c.bf16 %v2032, %v2031
        %v2035 = vld [vmem:[%s774] sm:$0xf]
        %v2036 = vld [vmem:[%s774 + $0x4] sm:$0xf]
        %v2037 = vld [vmem:[%s774 + $0x8] sm:$0xf]
        %v2038 = vld [vmem:[%s774 + $0xc] sm:$0xf]
        %v2039 = vld [vmem:[%s774 + $0x10] sm:$0xf]
        %v2040 = vld [vmem:[%s774 + $0x14] sm:$0xf]
        %v2041 = vld [vmem:[%s774 + $0x18] sm:$0xf]
        %v2042 = vld [vmem:[%s774 + $0x1c] sm:$0xf]
        %v2043 = vld [vmem:[%s774 + $0x20] sm:$0xf]
        %v2044 = vld [vmem:[%s774 + $0x24] sm:$0xf]
        %v2045 = vld [vmem:[%s774 + $0x28] sm:$0xf]
        %v2046 = vld [vmem:[%s774 + $0x2c] sm:$0xf]
        %v2047 = vld [vmem:[%s774 + $0x30] sm:$0xf]
        %v2048 = vld [vmem:[%s774 + $0x34] sm:$0xf]
        %v2049 = vld [vmem:[%s774 + $0x38] sm:$0xf]
        %v2050 = vld [vmem:[%s774 + $0x3c] sm:$0xf]
        %v2051 = vld [vmem:[%s777] sm:$0x1]
        %v2053 = vperm.slane %v2051, 0
        %v2071 = vunpack.c.l.b16 %v2035
        %v2072 = vunpack.c.l.b16 %v2036
        %v2073 = vunpack.c.l.b16 %v2037
        %v2074 = vunpack.c.l.b16 %v2038
        %v2075 = vunpack.c.l.b16 %v2039
        %v2076 = vunpack.c.l.b16 %v2040
        %v2077 = vunpack.c.l.b16 %v2041
        %v2078 = vunpack.c.l.b16 %v2042
        %v2079 = vunpack.c.l.b16 %v2043
        %v2080 = vunpack.c.l.b16 %v2044
        %v2081 = vunpack.c.l.b16 %v2045
        %v2082 = vunpack.c.l.b16 %v2046
        %v2083 = vunpack.c.l.b16 %v2047
        %v2084 = vunpack.c.l.b16 %v2048
        %v2085 = vunpack.c.l.b16 %v2049
        %v2086 = vunpack.c.l.b16 %v2050
        %v2087 = vpack.c.b16 %v2072, %v2071
        %v2088 = vpack.c.b16 %v2074, %v2073
        %v2089 = vpack.c.b16 %v2076, %v2075
        %v2090 = vpack.c.b16 %v2078, %v2077
        %v2091 = vpack.c.b16 %v2080, %v2079
        %v2092 = vpack.c.b16 %v2082, %v2081
        %v2093 = vpack.c.b16 %v2084, %v2083
        %v2094 = vpack.c.b16 %v2086, %v2085
        %2103 = vmatpush.bf16.msra.mxu0 %v2094
        %2104 = vmatpush.bf16.msra.mxu0 %v2093
        %2105 = vmatpush.bf16.msra.mxu0 %v2092
        %2106 = vmatpush.bf16.msra.mxu0 %v2091
        %2107 = vmatpush.bf16.msra.mxu0 %v2090
        %2108 = vmatpush.bf16.msra.mxu0 %v2089
        %2109 = vmatpush.bf16.msra.mxu0 %v2088
        %2110 = vmatpush.bf16.msra.mxu0 %v2087
        %2111 = vmatmul.bf16.gmra.mxu0 %v2033
        %v2112 = vpop.f32.mrf.mxu0
        %v2113 = vadd.f32 %v2053, %v2112
        %v2114 = vpop.f32.mrf.mxu0
        %v2115 = vadd.f32 %v2053, %v2114
        %2116 = vmatmul.bf16.gmra.mxu0 %v2034
        %v2117 = vpop.f32.mrf.mxu0
        %v2118 = vadd.f32 %v2053, %v2117
        %v2119 = vpop.f32.mrf.mxu0
        %v2120 = vadd.f32 %v2053, %v2119
        %2121 = vdwg.mxu0
        %v2122 = vld [vmem:[%s780] sm:$0x1]
        %v2123 = vld [vmem:[%s783] sm:$0x1]
        %2124 = vadd.xlane.f32.xlu0 %v2113
        %v2125 = vpop.xlane.xlu0 %2124
        %2126 = vadd.xlane.f32.xlu0 %v2115
        %v2127 = vpop.xlane.xlu0 %2126
        %2128 = vadd.xlane.f32.xlu0 %v2118
        %v2129 = vpop.xlane.xlu0 %2128
        %2130 = vadd.xlane.f32.xlu0 %v2120
        %v2131 = vpop.xlane.xlu0 %2130
        %v2132 = vmul.f32 %v2125, %v825
        %v2133 = vmul.f32 %v2127, %v825
        %v2134 = vmul.f32 %v2129, %v825
        %v2135 = vmul.f32 %v2131, %v825
        %v2136 = vsub.f32 %v2113, %v2132
        %v2137 = vsub.f32 %v2115, %v2133
        %v2138 = vsub.f32 %v2118, %v2134
        %v2139 = vsub.f32 %v2120, %v2135
        %v2140 = vmul.f32 %v2136, %v2136
        %v2141 = vmul.f32 %v2137, %v2137
        %v2142 = vmul.f32 %v2138, %v2138
        %v2143 = vmul.f32 %v2139, %v2139
        %2144 = vadd.xlane.f32.xlu0 %v2140
        %v2145 = vpop.xlane.xlu0 %2144
        %2146 = vadd.xlane.f32.xlu0 %v2141
        %v2147 = vpop.xlane.xlu0 %2146
        %2148 = vadd.xlane.f32.xlu0 %v2142
        %v2149 = vpop.xlane.xlu0 %2148
        %2150 = vadd.xlane.f32.xlu0 %v2143
        %v2151 = vpop.xlane.xlu0 %2150
        %v2152 = vmul.f32 %v2145, %v825
        %v2153 = vmul.f32 %v2147, %v825
        %v2154 = vmul.f32 %v2149, %v825
        %v2155 = vmul.f32 %v2151, %v825
        %v2156 = vadd.f32 %v2152, 1e-05
        %v2157 = vadd.f32 %v2153, 1e-05
        %v2158 = vadd.f32 %v2154, 1e-05
        %v2159 = vadd.f32 %v2155, 1e-05
        %v2160 = vrsqrt.pop %v2156
        %v2161 = vmul.f32 %v2160, %v2156
        %v2162 = vmul.f32 %v2161, %v2160
        %v2163 = vmul.f32 0.5, %v2162
        %v2164 = vsub.f32 1.5, %v2163
        %v2165 = vmul.f32 %v2160, %v2164
        %vm2166 = vweird.f32 %v2156
        %vm2167 = vweird.f32 %v2160
        %vm2168 = vmor %vm2166, %vm2167
        %v2169 = vsel %vm2168, %v2160, %v2165
        %v2170 = vrsqrt.pop %v2157
        %v2171 = vmul.f32 %v2170, %v2157
        %v2172 = vmul.f32 %v2171, %v2170
        %v2173 = vmul.f32 0.5, %v2172
        %v2174 = vsub.f32 1.5, %v2173
        %v2175 = vmul.f32 %v2170, %v2174
        %vm2176 = vweird.f32 %v2157
        %vm2177 = vweird.f32 %v2170
        %vm2178 = vmor %vm2176, %vm2177
        %v2179 = vsel %vm2178, %v2170, %v2175
        %v2180 = vrsqrt.pop %v2158
        %v2181 = vmul.f32 %v2180, %v2158
        %v2182 = vmul.f32 %v2181, %v2180
        %v2183 = vmul.f32 0.5, %v2182
        %v2184 = vsub.f32 1.5, %v2183
        %v2185 = vmul.f32 %v2180, %v2184
        %vm2186 = vweird.f32 %v2158
        %vm2187 = vweird.f32 %v2180
        %vm2188 = vmor %vm2186, %vm2187
        %v2189 = vsel %vm2188, %v2180, %v2185
        %v2190 = vrsqrt.pop %v2159
        %v2191 = vmul.f32 %v2190, %v2159
        %v2192 = vmul.f32 %v2191, %v2190
        %v2193 = vmul.f32 0.5, %v2192
        %v2194 = vsub.f32 1.5, %v2193
        %v2195 = vmul.f32 %v2190, %v2194
        %vm2196 = vweird.f32 %v2159
        %vm2197 = vweird.f32 %v2190
        %vm2198 = vmor %vm2196, %vm2197
        %v2199 = vsel %vm2198, %v2190, %v2195
        %v2200 = vmul.f32 %v2136, %v2169
        %v2201 = vmul.f32 %v2137, %v2179
        %v2202 = vmul.f32 %v2138, %v2189
        %v2203 = vmul.f32 %v2139, %v2199
        %v2205 = vperm.slane %v2122, 0
        %v2207 = vmul.f32 %v2200, %v2205
        %v2208 = vmul.f32 %v2201, %v2205
        %v2209 = vmul.f32 %v2202, %v2205
        %v2210 = vmul.f32 %v2203, %v2205
        %v2212 = vperm.slane %v2123, 0
        %v2214 = vadd.f32 %v2207, %v2212
        %v2215 = vadd.f32 %v2208, %v2212
        %v2216 = vadd.f32 %v2209, %v2212
        %v2217 = vadd.f32 %v2210, %v2212
        %v2218 = vadd.f32 %v2214, %v805
        %v2219 = vadd.f32 %v2215, %v806
        %v2220 = vadd.f32 %v2216, %v807
        %v2221 = vadd.f32 %v2217, %v808
        %v2222 = vpack.c.bf16 %v2219, %v2218
        %v2223 = vpack.c.bf16 %v2221, %v2220
        %v2224 = vld [vmem:[%s651] sm:$0xff]
        %v2225 = vld [vmem:[%s651 + $0x8] sm:$0xff]
        %v2226 = vld [vmem:[%s651 + $0x10] sm:$0xff]
        %v2227 = vld [vmem:[%s651 + $0x18] sm:$0xff]
        %v2228 = vld [vmem:[%s651 + $0x20] sm:$0xff]
        %v2229 = vld [vmem:[%s651 + $0x28] sm:$0xff]
        %v2230 = vld [vmem:[%s651 + $0x30] sm:$0xff]
        %v2231 = vld [vmem:[%s651 + $0x38] sm:$0xff]
        %v2232 = vld [vmem:[%s651 + $0x40] sm:$0xff]
        %v2233 = vld [vmem:[%s651 + $0x48] sm:$0xff]
        %v2234 = vld [vmem:[%s651 + $0x50] sm:$0xff]
        %v2235 = vld [vmem:[%s651 + $0x58] sm:$0xff]
        %v2236 = vld [vmem:[%s651 + $0x60] sm:$0xff]
        %v2237 = vld [vmem:[%s651 + $0x68] sm:$0xff]
        %v2238 = vld [vmem:[%s651 + $0x70] sm:$0xff]
        %v2239 = vld [vmem:[%s651 + $0x78] sm:$0xff]
        %v2240 = vld [vmem:[%s651 + $0x80] sm:$0xff]
        %v2241 = vld [vmem:[%s651 + $0x88] sm:$0xff]
        %v2242 = vld [vmem:[%s651 + $0x90] sm:$0xff]
        %v2243 = vld [vmem:[%s651 + $0x98] sm:$0xff]
        %v2244 = vld [vmem:[%s651 + $0xa0] sm:$0xff]
        %v2245 = vld [vmem:[%s651 + $0xa8] sm:$0xff]
        %v2246 = vld [vmem:[%s651 + $0xb0] sm:$0xff]
        %v2247 = vld [vmem:[%s651 + $0xb8] sm:$0xff]
        %v2248 = vld [vmem:[%s651 + $0xc0] sm:$0xff]
        %v2249 = vld [vmem:[%s651 + $0xc8] sm:$0xff]
        %v2250 = vld [vmem:[%s651 + $0xd0] sm:$0xff]
        %v2251 = vld [vmem:[%s651 + $0xd8] sm:$0xff]
        %v2252 = vld [vmem:[%s651 + $0xe0] sm:$0xff]
        %v2253 = vld [vmem:[%s651 + $0xe8] sm:$0xff]
        %v2254 = vld [vmem:[%s651 + $0xf0] sm:$0xff]
        %v2255 = vld [vmem:[%s651 + $0xf8] sm:$0xff]
        %v2256 = vld [vmem:[%s787] sm:$0xf]
        %v2258 = vperm.slane %v2256, 0
        %v2259 = vperm.slane %v2256, 1
        %v2260 = vperm.slane %v2256, 2
        %v2261 = vperm.slane %v2256, 3
        %v2298 = vunpack.c.l.b16 %v2224
        %v2299 = vunpack.c.h.b16 %v2224
        %v2300 = vunpack.c.l.b16 %v2225
        %v2301 = vunpack.c.h.b16 %v2225
        %v2302 = vunpack.c.l.b16 %v2226
        %v2303 = vunpack.c.h.b16 %v2226
        %v2304 = vunpack.c.l.b16 %v2227
        %v2305 = vunpack.c.h.b16 %v2227
        %v2306 = vunpack.c.l.b16 %v2228
        %v2307 = vunpack.c.h.b16 %v2228
        %v2308 = vunpack.c.l.b16 %v2229
        %v2309 = vunpack.c.h.b16 %v2229
        %v2310 = vunpack.c.l.b16 %v2230
        %v2311 = vunpack.c.h.b16 %v2230
        %v2312 = vunpack.c.l.b16 %v2231
        %v2313 = vunpack.c.h.b16 %v2231
        %v2314 = vunpack.c.l.b16 %v2232
        %v2315 = vunpack.c.h.b16 %v2232
        %v2316 = vunpack.c.l.b16 %v2233
        %v2317 = vunpack.c.h.b16 %v2233
        %v2318 = vunpack.c.l.b16 %v2234
        %v2319 = vunpack.c.h.b16 %v2234
        %v2320 = vunpack.c.l.b16 %v2235
        %v2321 = vunpack.c.h.b16 %v2235
        %v2322 = vunpack.c.l.b16 %v2236
        %v2323 = vunpack.c.h.b16 %v2236
        %v2324 = vunpack.c.l.b16 %v2237
        %v2325 = vunpack.c.h.b16 %v2237
        %v2326 = vunpack.c.l.b16 %v2238
        %v2327 = vunpack.c.h.b16 %v2238
        %v2328 = vunpack.c.l.b16 %v2239
        %v2329 = vunpack.c.h.b16 %v2239
        %v2330 = vunpack.c.l.b16 %v2240
        %v2331 = vunpack.c.h.b16 %v2240
        %v2332 = vunpack.c.l.b16 %v2241
        %v2333 = vunpack.c.h.b16 %v2241
        %v2334 = vunpack.c.l.b16 %v2242
        %v2335 = vunpack.c.h.b16 %v2242
        %v2336 = vunpack.c.l.b16 %v2243
        %v2337 = vunpack.c.h.b16 %v2243
        %v2338 = vunpack.c.l.b16 %v2244
        %v2339 = vunpack.c.h.b16 %v2244
        %v2340 = vunpack.c.l.b16 %v2245
        %v2341 = vunpack.c.h.b16 %v2245
        %v2342 = vunpack.c.l.b16 %v2246
        %v2343 = vunpack.c.h.b16 %v2246
        %v2344 = vunpack.c.l.b16 %v2247
        %v2345 = vunpack.c.h.b16 %v2247
        %v2346 = vunpack.c.l.b16 %v2248
        %v2347 = vunpack.c.h.b16 %v2248
        %v2348 = vunpack.c.l.b16 %v2249
        %v2349 = vunpack.c.h.b16 %v2249
        %v2350 = vunpack.c.l.b16 %v2250
        %v2351 = vunpack.c.h.b16 %v2250
        %v2352 = vunpack.c.l.b16 %v2251
        %v2353 = vunpack.c.h.b16 %v2251
        %v2354 = vunpack.c.l.b16 %v2252
        %v2355 = vunpack.c.h.b16 %v2252
        %v2356 = vunpack.c.l.b16 %v2253
        %v2357 = vunpack.c.h.b16 %v2253
        %v2358 = vunpack.c.l.b16 %v2254
        %v2359 = vunpack.c.h.b16 %v2254
        %v2360 = vunpack.c.l.b16 %v2255
        %v2361 = vunpack.c.h.b16 %v2255
        %v2362 = vpack.c.b16 %v2302, %v2298
        %v2363 = vpack.c.b16 %v2303, %v2299
        %v2364 = vpack.c.b16 %v2304, %v2300
        %v2365 = vpack.c.b16 %v2305, %v2301
        %v2366 = vpack.c.b16 %v2310, %v2306
        %v2367 = vpack.c.b16 %v2311, %v2307
        %v2368 = vpack.c.b16 %v2312, %v2308
        %v2369 = vpack.c.b16 %v2313, %v2309
        %v2370 = vpack.c.b16 %v2318, %v2314
        %v2371 = vpack.c.b16 %v2319, %v2315
        %v2372 = vpack.c.b16 %v2320, %v2316
        %v2373 = vpack.c.b16 %v2321, %v2317
        %v2374 = vpack.c.b16 %v2326, %v2322
        %v2375 = vpack.c.b16 %v2327, %v2323
        %v2376 = vpack.c.b16 %v2328, %v2324
        %v2377 = vpack.c.b16 %v2329, %v2325
        %v2378 = vpack.c.b16 %v2334, %v2330
        %v2379 = vpack.c.b16 %v2335, %v2331
        %v2380 = vpack.c.b16 %v2336, %v2332
        %v2381 = vpack.c.b16 %v2337, %v2333
        %v2382 = vpack.c.b16 %v2342, %v2338
        %v2383 = vpack.c.b16 %v2343, %v2339
        %v2384 = vpack.c.b16 %v2344, %v2340
        %v2385 = vpack.c.b16 %v2345, %v2341
        %v2386 = vpack.c.b16 %v2350, %v2346
        %v2387 = vpack.c.b16 %v2351, %v2347
        %v2388 = vpack.c.b16 %v2352, %v2348
        %v2389 = vpack.c.b16 %v2353, %v2349
        %v2390 = vpack.c.b16 %v2358, %v2354
        %v2391 = vpack.c.b16 %v2359, %v2355
        %v2392 = vpack.c.b16 %v2360, %v2356
        %v2393 = vpack.c.b16 %v2361, %v2357
        %2426 = vmatpush.bf16.msra.mxu0 %v2390
        %2427 = vmatpush.bf16.msra.mxu0 %v2386
        %2428 = vmatpush.bf16.msra.mxu0 %v2382
        %2429 = vmatpush.bf16.msra.mxu0 %v2378
        %2430 = vmatpush.bf16.msra.mxu0 %v2374
        %2431 = vmatpush.bf16.msra.mxu0 %v2370
        %2432 = vmatpush.bf16.msra.mxu0 %v2366
        %2433 = vmatpush.bf16.msra.mxu0 %v2362
        %2434 = vmatmul.bf16.gmra.mxu0 %v2222
        %v2435 = vpop.f32.mrf.mxu0
        %v2436 = vadd.f32 %v2258, %v2435
        %v2437 = vpop.f32.mrf.mxu0
        %v2438 = vadd.f32 %v2258, %v2437
        %2439 = vmatmul.bf16.gmra.mxu0 %v2223
        %v2440 = vpop.f32.mrf.mxu0
        %v2441 = vadd.f32 %v2258, %v2440
        %v2442 = vpop.f32.mrf.mxu0
        %v2443 = vadd.f32 %v2258, %v2442
        %2444 = vdwg.mxu0
        %2445 = vmatpush.bf16.msra.mxu0 %v2391
        %2446 = vmatpush.bf16.msra.mxu0 %v2387
        %2447 = vmatpush.bf16.msra.mxu0 %v2383
        %2448 = vmatpush.bf16.msra.mxu0 %v2379
        %2449 = vmatpush.bf16.msra.mxu0 %v2375
        %2450 = vmatpush.bf16.msra.mxu0 %v2371
        %2451 = vmatpush.bf16.msra.mxu0 %v2367
        %2452 = vmatpush.bf16.msra.mxu0 %v2363
        %2453 = vmatmul.bf16.gmra.mxu0 %v2222
        %v2454 = vpop.f32.mrf.mxu0
        %v2455 = vadd.f32 %v2259, %v2454
        %v2456 = vpop.f32.mrf.mxu0
        %v2457 = vadd.f32 %v2259, %v2456
        %2458 = vmatmul.bf16.gmra.mxu0 %v2223
        %v2459 = vpop.f32.mrf.mxu0
        %v2460 = vadd.f32 %v2259, %v2459
        %v2461 = vpop.f32.mrf.mxu0
        %v2462 = vadd.f32 %v2259, %v2461
        %2463 = vdwg.mxu0
        %2464 = vmatpush.bf16.msra.mxu0 %v2392
        %2465 = vmatpush.bf16.msra.mxu0 %v2388
        %2466 = vmatpush.bf16.msra.mxu0 %v2384
        %2467 = vmatpush.bf16.msra.mxu0 %v2380
        %2468 = vmatpush.bf16.msra.mxu0 %v2376
        %2469 = vmatpush.bf16.msra.mxu0 %v2372
        %2470 = vmatpush.bf16.msra.mxu0 %v2368
        %2471 = vmatpush.bf16.msra.mxu0 %v2364
        %2472 = vmatmul.bf16.gmra.mxu0 %v2222
        %v2473 = vpop.f32.mrf.mxu0
        %v2474 = vadd.f32 %v2260, %v2473
        %v2475 = vpop.f32.mrf.mxu0
        %v2476 = vadd.f32 %v2260, %v2475
        %2477 = vmatmul.bf16.gmra.mxu0 %v2223
        %v2478 = vpop.f32.mrf.mxu0
        %v2479 = vadd.f32 %v2260, %v2478
        %v2480 = vpop.f32.mrf.mxu0
        %v2481 = vadd.f32 %v2260, %v2480
        %2482 = vdwg.mxu0
        %2483 = vmatpush.bf16.msra.mxu0 %v2393
        %2484 = vmatpush.bf16.msra.mxu0 %v2389
        %2485 = vmatpush.bf16.msra.mxu0 %v2385
        %2486 = vmatpush.bf16.msra.mxu0 %v2381
        %2487 = vmatpush.bf16.msra.mxu0 %v2377
        %2488 = vmatpush.bf16.msra.mxu0 %v2373
        %2489 = vmatpush.bf16.msra.mxu0 %v2369
        %2490 = vmatpush.bf16.msra.mxu0 %v2365
        %2491 = vmatmul.bf16.gmra.mxu0 %v2222
        %v2492 = vpop.f32.mrf.mxu0
        %v2493 = vadd.f32 %v2261, %v2492
        %v2494 = vpop.f32.mrf.mxu0
        %v2495 = vadd.f32 %v2261, %v2494
        %2496 = vmatmul.bf16.gmra.mxu0 %v2223
        %v2497 = vpop.f32.mrf.mxu0
        %v2498 = vadd.f32 %v2261, %v2497
        %v2499 = vpop.f32.mrf.mxu0
        %v2500 = vadd.f32 %v2261, %v2499
        %2501 = vdwg.mxu0
        %v2502 = vmul.f32 %v2436, 1.782
        %v2503 = vmul.f32 %v2455, 1.782
        %v2504 = vmul.f32 %v2474, 1.782
        %v2505 = vmul.f32 %v2493, 1.782
        %v2506 = vmul.f32 %v2438, 1.782
        %v2507 = vmul.f32 %v2457, 1.782
        %v2508 = vmul.f32 %v2476, 1.782
        %v2509 = vmul.f32 %v2495, 1.782
        %v2510 = vmul.f32 %v2441, 1.782
        %v2511 = vmul.f32 %v2460, 1.782
        %v2512 = vmul.f32 %v2479, 1.782
        %v2513 = vmul.f32 %v2498, 1.782
        %v2514 = vmul.f32 %v2443, 1.782
        %v2515 = vmul.f32 %v2462, 1.782
        %v2516 = vmul.f32 %v2481, 1.782
        %v2517 = vmul.f32 %v2500, 1.782
        %v2518 = vxor.u32 %v2502, 2147483648
        %v2519 = vxor.u32 %v2503, 2147483648
        %v2520 = vxor.u32 %v2504, 2147483648
        %v2521 = vxor.u32 %v2505, 2147483648
        %v2522 = vxor.u32 %v2506, 2147483648
        %v2523 = vxor.u32 %v2507, 2147483648
        %v2524 = vxor.u32 %v2508, 2147483648
        %v2525 = vxor.u32 %v2509, 2147483648
        %v2526 = vxor.u32 %v2510, 2147483648
        %v2527 = vxor.u32 %v2511, 2147483648
        %v2528 = vxor.u32 %v2512, 2147483648
        %v2529 = vxor.u32 %v2513, 2147483648
        %v2530 = vxor.u32 %v2514, 2147483648
        %v2531 = vxor.u32 %v2515, 2147483648
        %v2532 = vxor.u32 %v2516, 2147483648
        %v2533 = vxor.u32 %v2517, 2147483648
        %v2534 = vmul.f32 %v2518, 1.442695
        %v2535 = vpow.pop %v2534
        %v2536 = vmul.f32 %v2519, 1.442695
        %v2537 = vpow.pop %v2536
        %v2538 = vmul.f32 %v2520, 1.442695
        %v2539 = vpow.pop %v2538
        %v2540 = vmul.f32 %v2521, 1.442695
        %v2541 = vpow.pop %v2540
        %v2542 = vmul.f32 %v2522, 1.442695
        %v2543 = vpow.pop %v2542
        %v2544 = vmul.f32 %v2523, 1.442695
        %v2545 = vpow.pop %v2544
        %v2546 = vmul.f32 %v2524, 1.442695
        %v2547 = vpow.pop %v2546
        %v2548 = vmul.f32 %v2525, 1.442695
        %v2549 = vpow.pop %v2548
        %v2550 = vmul.f32 %v2526, 1.442695
        %v2551 = vpow.pop %v2550
        %v2552 = vmul.f32 %v2527, 1.442695
        %v2553 = vpow.pop %v2552
        %v2554 = vmul.f32 %v2528, 1.442695
        %v2555 = vpow.pop %v2554
        %v2556 = vmul.f32 %v2529, 1.442695
        %v2557 = vpow.pop %v2556
        %v2558 = vmul.f32 %v2530, 1.442695
        %v2559 = vpow.pop %v2558
        %v2560 = vmul.f32 %v2531, 1.442695
        %v2561 = vpow.pop %v2560
        %v2562 = vmul.f32 %v2532, 1.442695
        %v2563 = vpow.pop %v2562
        %v2564 = vmul.f32 %v2533, 1.442695
        %v2565 = vpow.pop %v2564
        %v2566 = vadd.f32 %v2535, 1.0
        %v2567 = vadd.f32 %v2537, 1.0
        %v2568 = vadd.f32 %v2539, 1.0
        %v2569 = vadd.f32 %v2541, 1.0
        %v2570 = vadd.f32 %v2543, 1.0
        %v2571 = vadd.f32 %v2545, 1.0
        %v2572 = vadd.f32 %v2547, 1.0
        %v2573 = vadd.f32 %v2549, 1.0
        %v2574 = vadd.f32 %v2551, 1.0
        %v2575 = vadd.f32 %v2553, 1.0
        %v2576 = vadd.f32 %v2555, 1.0
        %v2577 = vadd.f32 %v2557, 1.0
        %v2578 = vadd.f32 %v2559, 1.0
        %v2579 = vadd.f32 %v2561, 1.0
        %v2580 = vadd.f32 %v2563, 1.0
        %v2581 = vadd.f32 %v2565, 1.0
        %v2582 = vrcp.pop %v2566
        %v2583 = vmul.f32 %v2566, %v2582
        %v2584 = vsub.f32 1.0, %v2583
        %v2585 = vmul.f32 %v2582, %v2584
        %v2586 = vadd.f32 %v2582, %v2585
        %vm2587 = vweird.f32 %v2566
        %vm2588 = vweird.f32 %v2582
        %vm2589 = vmor %vm2587, %vm2588
        %v2590 = vsel %vm2589, %v2582, %v2586
        %v2591 = vand.u32 2147483647, %v2566
        %vm2592 = vcmp.eq.f32.partialorder %v2591, 8.507059e+37
        %v2593 = vand.u32 %v2566, 2147483648
        %v2594 = vor.u32 1.1754944e-38, %v2593
        %v2595 = vsel %vm2592, %v2594, %v2590
        %v2596 = vmul.f32 1.0, %v2595
        %v2597 = vrcp.pop %v2567
        %v2598 = vmul.f32 %v2567, %v2597
        %v2599 = vsub.f32 1.0, %v2598
        %v2600 = vmul.f32 %v2597, %v2599
        %v2601 = vadd.f32 %v2597, %v2600
        %vm2602 = vweird.f32 %v2567
        %vm2603 = vweird.f32 %v2597
        %vm2604 = vmor %vm2602, %vm2603
        %v2605 = vsel %vm2604, %v2597, %v2601
        %v2606 = vand.u32 2147483647, %v2567
        %vm2607 = vcmp.eq.f32.partialorder %v2606, 8.507059e+37
        %v2608 = vand.u32 %v2567, 2147483648
        %v2609 = vor.u32 1.1754944e-38, %v2608
        %v2610 = vsel %vm2607, %v2609, %v2605
        %v2611 = vmul.f32 1.0, %v2610
        %v2612 = vrcp.pop %v2568
        %v2613 = vmul.f32 %v2568, %v2612
        %v2614 = vsub.f32 1.0, %v2613
        %v2615 = vmul.f32 %v2612, %v2614
        %v2616 = vadd.f32 %v2612, %v2615
        %vm2617 = vweird.f32 %v2568
        %vm2618 = vweird.f32 %v2612
        %vm2619 = vmor %vm2617, %vm2618
        %v2620 = vsel %vm2619, %v2612, %v2616
        %v2621 = vand.u32 2147483647, %v2568
        %vm2622 = vcmp.eq.f32.partialorder %v2621, 8.507059e+37
        %v2623 = vand.u32 %v2568, 2147483648
        %v2624 = vor.u32 1.1754944e-38, %v2623
        %v2625 = vsel %vm2622, %v2624, %v2620
        %v2626 = vmul.f32 1.0, %v2625
        %v2627 = vrcp.pop %v2569
        %v2628 = vmul.f32 %v2569, %v2627
        %v2629 = vsub.f32 1.0, %v2628
        %v2630 = vmul.f32 %v2627, %v2629
        %v2631 = vadd.f32 %v2627, %v2630
        %vm2632 = vweird.f32 %v2569
        %vm2633 = vweird.f32 %v2627
        %vm2634 = vmor %vm2632, %vm2633
        %v2635 = vsel %vm2634, %v2627, %v2631
        %v2636 = vand.u32 2147483647, %v2569
        %vm2637 = vcmp.eq.f32.partialorder %v2636, 8.507059e+37
        %v2638 = vand.u32 %v2569, 2147483648
        %v2639 = vor.u32 1.1754944e-38, %v2638
        %v2640 = vsel %vm2637, %v2639, %v2635
        %v2641 = vmul.f32 1.0, %v2640
        %v2642 = vrcp.pop %v2570
        %v2643 = vmul.f32 %v2570, %v2642
        %v2644 = vsub.f32 1.0, %v2643
        %v2645 = vmul.f32 %v2642, %v2644
        %v2646 = vadd.f32 %v2642, %v2645
        %vm2647 = vweird.f32 %v2570
        %vm2648 = vweird.f32 %v2642
        %vm2649 = vmor %vm2647, %vm2648
        %v2650 = vsel %vm2649, %v2642, %v2646
        %v2651 = vand.u32 2147483647, %v2570
        %vm2652 = vcmp.eq.f32.partialorder %v2651, 8.507059e+37
        %v2653 = vand.u32 %v2570, 2147483648
        %v2654 = vor.u32 1.1754944e-38, %v2653
        %v2655 = vsel %vm2652, %v2654, %v2650
        %v2656 = vmul.f32 1.0, %v2655
        %v2657 = vrcp.pop %v2571
        %v2658 = vmul.f32 %v2571, %v2657
        %v2659 = vsub.f32 1.0, %v2658
        %v2660 = vmul.f32 %v2657, %v2659
        %v2661 = vadd.f32 %v2657, %v2660
        %vm2662 = vweird.f32 %v2571
        %vm2663 = vweird.f32 %v2657
        %vm2664 = vmor %vm2662, %vm2663
        %v2665 = vsel %vm2664, %v2657, %v2661
        %v2666 = vand.u32 2147483647, %v2571
        %vm2667 = vcmp.eq.f32.partialorder %v2666, 8.507059e+37
        %v2668 = vand.u32 %v2571, 2147483648
        %v2669 = vor.u32 1.1754944e-38, %v2668
        %v2670 = vsel %vm2667, %v2669, %v2665
        %v2671 = vmul.f32 1.0, %v2670
        %v2672 = vrcp.pop %v2572
        %v2673 = vmul.f32 %v2572, %v2672
        %v2674 = vsub.f32 1.0, %v2673
        %v2675 = vmul.f32 %v2672, %v2674
        %v2676 = vadd.f32 %v2672, %v2675
        %vm2677 = vweird.f32 %v2572
        %vm2678 = vweird.f32 %v2672
        %vm2679 = vmor %vm2677, %vm2678
        %v2680 = vsel %vm2679, %v2672, %v2676
        %v2681 = vand.u32 2147483647, %v2572
        %vm2682 = vcmp.eq.f32.partialorder %v2681, 8.507059e+37
        %v2683 = vand.u32 %v2572, 2147483648
        %v2684 = vor.u32 1.1754944e-38, %v2683
        %v2685 = vsel %vm2682, %v2684, %v2680
        %v2686 = vmul.f32 1.0, %v2685
        %v2687 = vrcp.pop %v2573
        %v2688 = vmul.f32 %v2573, %v2687
        %v2689 = vsub.f32 1.0, %v2688
        %v2690 = vmul.f32 %v2687, %v2689
        %v2691 = vadd.f32 %v2687, %v2690
        %vm2692 = vweird.f32 %v2573
        %vm2693 = vweird.f32 %v2687
        %vm2694 = vmor %vm2692, %vm2693
        %v2695 = vsel %vm2694, %v2687, %v2691
        %v2696 = vand.u32 2147483647, %v2573
        %vm2697 = vcmp.eq.f32.partialorder %v2696, 8.507059e+37
        %v2698 = vand.u32 %v2573, 2147483648
        %v2699 = vor.u32 1.1754944e-38, %v2698
        %v2700 = vsel %vm2697, %v2699, %v2695
        %v2701 = vmul.f32 1.0, %v2700
        %v2702 = vrcp.pop %v2574
        %v2703 = vmul.f32 %v2574, %v2702
        %v2704 = vsub.f32 1.0, %v2703
        %v2705 = vmul.f32 %v2702, %v2704
        %v2706 = vadd.f32 %v2702, %v2705
        %vm2707 = vweird.f32 %v2574
        %vm2708 = vweird.f32 %v2702
        %vm2709 = vmor %vm2707, %vm2708
        %v2710 = vsel %vm2709, %v2702, %v2706
        %v2711 = vand.u32 2147483647, %v2574
        %vm2712 = vcmp.eq.f32.partialorder %v2711, 8.507059e+37
        %v2713 = vand.u32 %v2574, 2147483648
        %v2714 = vor.u32 1.1754944e-38, %v2713
        %v2715 = vsel %vm2712, %v2714, %v2710
        %v2716 = vmul.f32 1.0, %v2715
        %v2717 = vrcp.pop %v2575
        %v2718 = vmul.f32 %v2575, %v2717
        %v2719 = vsub.f32 1.0, %v2718
        %v2720 = vmul.f32 %v2717, %v2719
        %v2721 = vadd.f32 %v2717, %v2720
        %vm2722 = vweird.f32 %v2575
        %vm2723 = vweird.f32 %v2717
        %vm2724 = vmor %vm2722, %vm2723
        %v2725 = vsel %vm2724, %v2717, %v2721
        %v2726 = vand.u32 2147483647, %v2575
        %vm2727 = vcmp.eq.f32.partialorder %v2726, 8.507059e+37
        %v2728 = vand.u32 %v2575, 2147483648
        %v2729 = vor.u32 1.1754944e-38, %v2728
        %v2730 = vsel %vm2727, %v2729, %v2725
        %v2731 = vmul.f32 1.0, %v2730
        %v2732 = vrcp.pop %v2576
        %v2733 = vmul.f32 %v2576, %v2732
        %v2734 = vsub.f32 1.0, %v2733
        %v2735 = vmul.f32 %v2732, %v2734
        %v2736 = vadd.f32 %v2732, %v2735
        %vm2737 = vweird.f32 %v2576
        %vm2738 = vweird.f32 %v2732
        %vm2739 = vmor %vm2737, %vm2738
        %v2740 = vsel %vm2739, %v2732, %v2736
        %v2741 = vand.u32 2147483647, %v2576
        %vm2742 = vcmp.eq.f32.partialorder %v2741, 8.507059e+37
        %v2743 = vand.u32 %v2576, 2147483648
        %v2744 = vor.u32 1.1754944e-38, %v2743
        %v2745 = vsel %vm2742, %v2744, %v2740
        %v2746 = vmul.f32 1.0, %v2745
        %v2747 = vrcp.pop %v2577
        %v2748 = vmul.f32 %v2577, %v2747
        %v2749 = vsub.f32 1.0, %v2748
        %v2750 = vmul.f32 %v2747, %v2749
        %v2751 = vadd.f32 %v2747, %v2750
        %vm2752 = vweird.f32 %v2577
        %vm2753 = vweird.f32 %v2747
        %vm2754 = vmor %vm2752, %vm2753
        %v2755 = vsel %vm2754, %v2747, %v2751
        %v2756 = vand.u32 2147483647, %v2577
        %vm2757 = vcmp.eq.f32.partialorder %v2756, 8.507059e+37
        %v2758 = vand.u32 %v2577, 2147483648
        %v2759 = vor.u32 1.1754944e-38, %v2758
        %v2760 = vsel %vm2757, %v2759, %v2755
        %v2761 = vmul.f32 1.0, %v2760
        %v2762 = vrcp.pop %v2578
        %v2763 = vmul.f32 %v2578, %v2762
        %v2764 = vsub.f32 1.0, %v2763
        %v2765 = vmul.f32 %v2762, %v2764
        %v2766 = vadd.f32 %v2762, %v2765
        %vm2767 = vweird.f32 %v2578
        %vm2768 = vweird.f32 %v2762
        %vm2769 = vmor %vm2767, %vm2768
        %v2770 = vsel %vm2769, %v2762, %v2766
        %v2771 = vand.u32 2147483647, %v2578
        %vm2772 = vcmp.eq.f32.partialorder %v2771, 8.507059e+37
        %v2773 = vand.u32 %v2578, 2147483648
        %v2774 = vor.u32 1.1754944e-38, %v2773
        %v2775 = vsel %vm2772, %v2774, %v2770
        %v2776 = vmul.f32 1.0, %v2775
        %v2777 = vrcp.pop %v2579
        %v2778 = vmul.f32 %v2579, %v2777
        %v2779 = vsub.f32 1.0, %v2778
        %v2780 = vmul.f32 %v2777, %v2779
        %v2781 = vadd.f32 %v2777, %v2780
        %vm2782 = vweird.f32 %v2579
        %vm2783 = vweird.f32 %v2777
        %vm2784 = vmor %vm2782, %vm2783
        %v2785 = vsel %vm2784, %v2777, %v2781
        %v2786 = vand.u32 2147483647, %v2579
        %vm2787 = vcmp.eq.f32.partialorder %v2786, 8.507059e+37
        %v2788 = vand.u32 %v2579, 2147483648
        %v2789 = vor.u32 1.1754944e-38, %v2788
        %v2790 = vsel %vm2787, %v2789, %v2785
        %v2791 = vmul.f32 1.0, %v2790
        %v2792 = vrcp.pop %v2580
        %v2793 = vmul.f32 %v2580, %v2792
        %v2794 = vsub.f32 1.0, %v2793
        %v2795 = vmul.f32 %v2792, %v2794
        %v2796 = vadd.f32 %v2792, %v2795
        %vm2797 = vweird.f32 %v2580
        %vm2798 = vweird.f32 %v2792
        %vm2799 = vmor %vm2797, %vm2798
        %v2800 = vsel %vm2799, %v2792, %v2796
        %v2801 = vand.u32 2147483647, %v2580
        %vm2802 = vcmp.eq.f32.partialorder %v2801, 8.507059e+37
        %v2803 = vand.u32 %v2580, 2147483648
        %v2804 = vor.u32 1.1754944e-38, %v2803
        %v2805 = vsel %vm2802, %v2804, %v2800
        %v2806 = vmul.f32 1.0, %v2805
        %v2807 = vrcp.pop %v2581
        %v2808 = vmul.f32 %v2581, %v2807
        %v2809 = vsub.f32 1.0, %v2808
        %v2810 = vmul.f32 %v2807, %v2809
        %v2811 = vadd.f32 %v2807, %v2810
        %vm2812 = vweird.f32 %v2581
        %vm2813 = vweird.f32 %v2807
        %vm2814 = vmor %vm2812, %vm2813
        %v2815 = vsel %vm2814, %v2807, %v2811
        %v2816 = vand.u32 2147483647, %v2581
        %vm2817 = vcmp.eq.f32.partialorder %v2816, 8.507059e+37
        %v2818 = vand.u32 %v2581, 2147483648
        %v2819 = vor.u32 1.1754944e-38, %v2818
        %v2820 = vsel %vm2817, %v2819, %v2815
        %v2821 = vmul.f32 1.0, %v2820
        %v2822 = vmul.f32 %v2436, %v2596
        %v2823 = vmul.f32 %v2455, %v2611
        %v2824 = vmul.f32 %v2474, %v2626
        %v2825 = vmul.f32 %v2493, %v2641
        %v2826 = vmul.f32 %v2438, %v2656
        %v2827 = vmul.f32 %v2457, %v2671
        %v2828 = vmul.f32 %v2476, %v2686
        %v2829 = vmul.f32 %v2495, %v2701
        %v2830 = vmul.f32 %v2441, %v2716
        %v2831 = vmul.f32 %v2460, %v2731
        %v2832 = vmul.f32 %v2479, %v2746
        %v2833 = vmul.f32 %v2498, %v2761
        %v2834 = vmul.f32 %v2443, %v2776
        %v2835 = vmul.f32 %v2462, %v2791
        %v2836 = vmul.f32 %v2481, %v2806
        %v2837 = vmul.f32 %v2500, %v2821
        %v2838 = vpack.c.bf16 %v2826, %v2822
        %v2839 = vpack.c.bf16 %v2827, %v2823
        %v2840 = vpack.c.bf16 %v2828, %v2824
        %v2841 = vpack.c.bf16 %v2829, %v2825
        %v2842 = vpack.c.bf16 %v2834, %v2830
        %v2843 = vpack.c.bf16 %v2835, %v2831
        %v2844 = vpack.c.bf16 %v2836, %v2832
        %v2845 = vpack.c.bf16 %v2837, %v2833
        %v2846 = vld [vmem:[%s661] sm:$0xf]
        %v2847 = vld [vmem:[%s661 + $0x4] sm:$0xf]
        %v2848 = vld [vmem:[%s661 + $0x8] sm:$0xf]
        %v2849 = vld [vmem:[%s661 + $0xc] sm:$0xf]
        %v2850 = vld [vmem:[%s661 + $0x10] sm:$0xf]
        %v2851 = vld [vmem:[%s661 + $0x14] sm:$0xf]
        %v2852 = vld [vmem:[%s661 + $0x18] sm:$0xf]
        %v2853 = vld [vmem:[%s661 + $0x1c] sm:$0xf]
        %v2854 = vld [vmem:[%s661 + $0x20] sm:$0xf]
        %v2855 = vld [vmem:[%s661 + $0x24] sm:$0xf]
        %v2856 = vld [vmem:[%s661 + $0x28] sm:$0xf]
        %v2857 = vld [vmem:[%s661 + $0x2c] sm:$0xf]
        %v2858 = vld [vmem:[%s661 + $0x30] sm:$0xf]
        %v2859 = vld [vmem:[%s661 + $0x34] sm:$0xf]
        %v2860 = vld [vmem:[%s661 + $0x38] sm:$0xf]
        %v2861 = vld [vmem:[%s661 + $0x3c] sm:$0xf]
        %v2862 = vld [vmem:[%s661 + $0x40] sm:$0xf]
        %v2863 = vld [vmem:[%s661 + $0x44] sm:$0xf]
        %v2864 = vld [vmem:[%s661 + $0x48] sm:$0xf]
        %v2865 = vld [vmem:[%s661 + $0x4c] sm:$0xf]
        %v2866 = vld [vmem:[%s661 + $0x50] sm:$0xf]
        %v2867 = vld [vmem:[%s661 + $0x54] sm:$0xf]
        %v2868 = vld [vmem:[%s661 + $0x58] sm:$0xf]
        %v2869 = vld [vmem:[%s661 + $0x5c] sm:$0xf]
        %v2870 = vld [vmem:[%s661 + $0x60] sm:$0xf]
        %v2871 = vld [vmem:[%s661 + $0x64] sm:$0xf]
        %v2872 = vld [vmem:[%s661 + $0x68] sm:$0xf]
        %v2873 = vld [vmem:[%s661 + $0x6c] sm:$0xf]
        %v2874 = vld [vmem:[%s661 + $0x70] sm:$0xf]
        %v2875 = vld [vmem:[%s661 + $0x74] sm:$0xf]
        %v2876 = vld [vmem:[%s661 + $0x78] sm:$0xf]
        %v2877 = vld [vmem:[%s661 + $0x7c] sm:$0xf]
        %v2878 = vld [vmem:[%s661 + $0x80] sm:$0xf]
        %v2879 = vld [vmem:[%s661 + $0x84] sm:$0xf]
        %v2880 = vld [vmem:[%s661 + $0x88] sm:$0xf]
        %v2881 = vld [vmem:[%s661 + $0x8c] sm:$0xf]
        %v2882 = vld [vmem:[%s661 + $0x90] sm:$0xf]
        %v2883 = vld [vmem:[%s661 + $0x94] sm:$0xf]
        %v2884 = vld [vmem:[%s661 + $0x98] sm:$0xf]
        %v2885 = vld [vmem:[%s661 + $0x9c] sm:$0xf]
        %v2886 = vld [vmem:[%s661 + $0xa0] sm:$0xf]
        %v2887 = vld [vmem:[%s661 + $0xa4] sm:$0xf]
        %v2888 = vld [vmem:[%s661 + $0xa8] sm:$0xf]
        %v2889 = vld [vmem:[%s661 + $0xac] sm:$0xf]
        %v2890 = vld [vmem:[%s661 + $0xb0] sm:$0xf]
        %v2891 = vld [vmem:[%s661 + $0xb4] sm:$0xf]
        %v2892 = vld [vmem:[%s661 + $0xb8] sm:$0xf]
        %v2893 = vld [vmem:[%s661 + $0xbc] sm:$0xf]
        %v2894 = vld [vmem:[%s661 + $0xc0] sm:$0xf]
        %v2895 = vld [vmem:[%s661 + $0xc4] sm:$0xf]
        %v2896 = vld [vmem:[%s661 + $0xc8] sm:$0xf]
        %v2897 = vld [vmem:[%s661 + $0xcc] sm:$0xf]
        %v2898 = vld [vmem:[%s661 + $0xd0] sm:$0xf]
        %v2899 = vld [vmem:[%s661 + $0xd4] sm:$0xf]
        %v2900 = vld [vmem:[%s661 + $0xd8] sm:$0xf]
        %v2901 = vld [vmem:[%s661 + $0xdc] sm:$0xf]
        %v2902 = vld [vmem:[%s661 + $0xe0] sm:$0xf]
        %v2903 = vld [vmem:[%s661 + $0xe4] sm:$0xf]
        %v2904 = vld [vmem:[%s661 + $0xe8] sm:$0xf]
        %v2905 = vld [vmem:[%s661 + $0xec] sm:$0xf]
        %v2906 = vld [vmem:[%s661 + $0xf0] sm:$0xf]
        %v2907 = vld [vmem:[%s661 + $0xf4] sm:$0xf]
        %v2908 = vld [vmem:[%s661 + $0xf8] sm:$0xf]
        %v2909 = vld [vmem:[%s661 + $0xfc] sm:$0xf]
        %v2910 = vld [vmem:[%s790] sm:$0x1]
        %v2912 = vperm.slane %v2910, 0
        %v2978 = vunpack.c.l.b16 %v2846
        %v2979 = vunpack.c.l.b16 %v2847
        %v2980 = vunpack.c.l.b16 %v2848
        %v2981 = vunpack.c.l.b16 %v2849
        %v2982 = vunpack.c.l.b16 %v2850
        %v2983 = vunpack.c.l.b16 %v2851
        %v2984 = vunpack.c.l.b16 %v2852
        %v2985 = vunpack.c.l.b16 %v2853
        %v2986 = vunpack.c.l.b16 %v2854
        %v2987 = vunpack.c.l.b16 %v2855
        %v2988 = vunpack.c.l.b16 %v2856
        %v2989 = vunpack.c.l.b16 %v2857
        %v2990 = vunpack.c.l.b16 %v2858
        %v2991 = vunpack.c.l.b16 %v2859
        %v2992 = vunpack.c.l.b16 %v2860
        %v2993 = vunpack.c.l.b16 %v2861
        %v2994 = vunpack.c.l.b16 %v2862
        %v2995 = vunpack.c.l.b16 %v2863
        %v2996 = vunpack.c.l.b16 %v2864
        %v2997 = vunpack.c.l.b16 %v2865
        %v2998 = vunpack.c.l.b16 %v2866
        %v2999 = vunpack.c.l.b16 %v2867
        %v3000 = vunpack.c.l.b16 %v2868
        %v3001 = vunpack.c.l.b16 %v2869
        %v3002 = vunpack.c.l.b16 %v2870
        %v3003 = vunpack.c.l.b16 %v2871
        %v3004 = vunpack.c.l.b16 %v2872
        %v3005 = vunpack.c.l.b16 %v2873
        %v3006 = vunpack.c.l.b16 %v2874
        %v3007 = vunpack.c.l.b16 %v2875
        %v3008 = vunpack.c.l.b16 %v2876
        %v3009 = vunpack.c.l.b16 %v2877
        %v3010 = vunpack.c.l.b16 %v2878
        %v3011 = vunpack.c.l.b16 %v2879
        %v3012 = vunpack.c.l.b16 %v2880
        %v3013 = vunpack.c.l.b16 %v2881
        %v3014 = vunpack.c.l.b16 %v2882
        %v3015 = vunpack.c.l.b16 %v2883
        %v3016 = vunpack.c.l.b16 %v2884
        %v3017 = vunpack.c.l.b16 %v2885
        %v3018 = vunpack.c.l.b16 %v2886
        %v3019 = vunpack.c.l.b16 %v2887
        %v3020 = vunpack.c.l.b16 %v2888
        %v3021 = vunpack.c.l.b16 %v2889
        %v3022 = vunpack.c.l.b16 %v2890
        %v3023 = vunpack.c.l.b16 %v2891
        %v3024 = vunpack.c.l.b16 %v2892
        %v3025 = vunpack.c.l.b16 %v2893
        %v3026 = vunpack.c.l.b16 %v2894
        %v3027 = vunpack.c.l.b16 %v2895
        %v3028 = vunpack.c.l.b16 %v2896
        %v3029 = vunpack.c.l.b16 %v2897
        %v3030 = vunpack.c.l.b16 %v2898
        %v3031 = vunpack.c.l.b16 %v2899
        %v3032 = vunpack.c.l.b16 %v2900
        %v3033 = vunpack.c.l.b16 %v2901
        %v3034 = vunpack.c.l.b16 %v2902
        %v3035 = vunpack.c.l.b16 %v2903
        %v3036 = vunpack.c.l.b16 %v2904
        %v3037 = vunpack.c.l.b16 %v2905
        %v3038 = vunpack.c.l.b16 %v2906
        %v3039 = vunpack.c.l.b16 %v2907
        %v3040 = vunpack.c.l.b16 %v2908
        %v3041 = vunpack.c.l.b16 %v2909
        %v3042 = vpack.c.b16 %v2979, %v2978
        %v3043 = vpack.c.b16 %v2981, %v2980
        %v3044 = vpack.c.b16 %v2983, %v2982
        %v3045 = vpack.c.b16 %v2985, %v2984
        %v3046 = vpack.c.b16 %v2987, %v2986
        %v3047 = vpack.c.b16 %v2989, %v2988
        %v3048 = vpack.c.b16 %v2991, %v2990
        %v3049 = vpack.c.b16 %v2993, %v2992
        %v3050 = vpack.c.b16 %v2995, %v2994
        %v3051 = vpack.c.b16 %v2997, %v2996
        %v3052 = vpack.c.b16 %v2999, %v2998
        %v3053 = vpack.c.b16 %v3001, %v3000
        %v3054 = vpack.c.b16 %v3003, %v3002
        %v3055 = vpack.c.b16 %v3005, %v3004
        %v3056 = vpack.c.b16 %v3007, %v3006
        %v3057 = vpack.c.b16 %v3009, %v3008
        %v3058 = vpack.c.b16 %v3011, %v3010
        %v3059 = vpack.c.b16 %v3013, %v3012
        %v3060 = vpack.c.b16 %v3015, %v3014
        %v3061 = vpack.c.b16 %v3017, %v3016
        %v3062 = vpack.c.b16 %v3019, %v3018
        %v3063 = vpack.c.b16 %v3021, %v3020
        %v3064 = vpack.c.b16 %v3023, %v3022
        %v3065 = vpack.c.b16 %v3025, %v3024
        %v3066 = vpack.c.b16 %v3027, %v3026
        %v3067 = vpack.c.b16 %v3029, %v3028
        %v3068 = vpack.c.b16 %v3031, %v3030
        %v3069 = vpack.c.b16 %v3033, %v3032
        %v3070 = vpack.c.b16 %v3035, %v3034
        %v3071 = vpack.c.b16 %v3037, %v3036
        %v3072 = vpack.c.b16 %v3039, %v3038
        %v3073 = vpack.c.b16 %v3041, %v3040
        %3106 = vmatpush.bf16.msra.mxu0 %v3049
        %3107 = vmatpush.bf16.msra.mxu0 %v3048
        %3108 = vmatpush.bf16.msra.mxu0 %v3047
        %3109 = vmatpush.bf16.msra.mxu0 %v3046
        %3110 = vmatpush.bf16.msra.mxu0 %v3045
        %3111 = vmatpush.bf16.msra.mxu0 %v3044
        %3112 = vmatpush.bf16.msra.mxu0 %v3043
        %3113 = vmatpush.bf16.msra.mxu0 %v3042
        %3114 = vmatmul.bf16.gmra.mxu0 %v2838
        %v3115 = vpop.f32.mrf.mxu0
        %v3116 = vadd.f32 %v2912, %v3115
        %v3117 = vpop.f32.mrf.mxu0
        %v3118 = vadd.f32 %v2912, %v3117
        %3119 = vmatmul.bf16.gmra.mxu0 %v2842
        %v3120 = vpop.f32.mrf.mxu0
        %v3121 = vadd.f32 %v2912, %v3120
        %v3122 = vpop.f32.mrf.mxu0
        %v3123 = vadd.f32 %v2912, %v3122
        %3124 = vdwg.mxu0
        %3125 = vmatpush.bf16.msra.mxu0 %v3057
        %3126 = vmatpush.bf16.msra.mxu0 %v3056
        %3127 = vmatpush.bf16.msra.mxu0 %v3055
        %3128 = vmatpush.bf16.msra.mxu0 %v3054
        %3129 = vmatpush.bf16.msra.mxu0 %v3053
        %3130 = vmatpush.bf16.msra.mxu0 %v3052
        %3131 = vmatpush.bf16.msra.mxu0 %v3051
        %3132 = vmatpush.bf16.msra.mxu0 %v3050
        %3133 = vmatmul.bf16.gmra.mxu0 %v2839
        %v3134 = vpop.f32.mrf.mxu0
        %v3135 = vadd.f32 %v3116, %v3134
        %v3136 = vpop.f32.mrf.mxu0
        %v3137 = vadd.f32 %v3118, %v3136
        %3138 = vmatmul.bf16.gmra.mxu0 %v2843
        %v3139 = vpop.f32.mrf.mxu0
        %v3140 = vadd.f32 %v3121, %v3139
        %v3141 = vpop.f32.mrf.mxu0
        %v3142 = vadd.f32 %v3123, %v3141
        %3143 = vdwg.mxu0
        %3144 = vmatpush.bf16.msra.mxu0 %v3065
        %3145 = vmatpush.bf16.msra.mxu0 %v3064
        %3146 = vmatpush.bf16.msra.mxu0 %v3063
        %3147 = vmatpush.bf16.msra.mxu0 %v3062
        %3148 = vmatpush.bf16.msra.mxu0 %v3061
        %3149 = vmatpush.bf16.msra.mxu0 %v3060
        %3150 = vmatpush.bf16.msra.mxu0 %v3059
        %3151 = vmatpush.bf16.msra.mxu0 %v3058
        %3152 = vmatmul.bf16.gmra.mxu0 %v2840
        %v3153 = vpop.f32.mrf.mxu0
        %v3154 = vadd.f32 %v3135, %v3153
        %v3155 = vpop.f32.mrf.mxu0
        %v3156 = vadd.f32 %v3137, %v3155
        %3157 = vmatmul.bf16.gmra.mxu0 %v2844
        %v3158 = vpop.f32.mrf.mxu0
        %v3159 = vadd.f32 %v3140, %v3158
        %v3160 = vpop.f32.mrf.mxu0
        %v3161 = vadd.f32 %v3142, %v3160
        %3162 = vdwg.mxu0
        %3163 = vmatpush.bf16.msra.mxu0 %v3073
        %3164 = vmatpush.bf16.msra.mxu0 %v3072
        %3165 = vmatpush.bf16.msra.mxu0 %v3071
        %3166 = vmatpush.bf16.msra.mxu0 %v3070
        %3167 = vmatpush.bf16.msra.mxu0 %v3069
        %3168 = vmatpush.bf16.msra.mxu0 %v3068
        %3169 = vmatpush.bf16.msra.mxu0 %v3067
        %3170 = vmatpush.bf16.msra.mxu0 %v3066
        %3171 = vmatmul.bf16.gmra.mxu0 %v2841
        %v3172 = vpop.f32.mrf.mxu0
        %v3173 = vadd.f32 %v3154, %v3172
        %v3174 = vpop.f32.mrf.mxu0
        %v3175 = vadd.f32 %v3156, %v3174
        %3176 = vmatmul.bf16.gmra.mxu0 %v2845
        %v3177 = vpop.f32.mrf.mxu0
        %v3178 = vadd.f32 %v3159, %v3177
        %v3179 = vpop.f32.mrf.mxu0
        %v3180 = vadd.f32 %v3161, %v3179
        %3181 = vdwg.mxu0
        %v3182 = vadd.f32 %v3173, %v2218
        %v3183 = vadd.f32 %v3175, %v2219
        %v3184 = vadd.f32 %v3178, %v2220
        %v3185 = vadd.f32 %v3180, %v2221
        %3186 = vst [vmem:[#allocation2] sm:$0xff] %v3182
        %3187 = vst [vmem:[#allocation2 + $0x8] sm:$0xff] %v3183
        %3188 = vst [vmem:[#allocation2 + $0x10] sm:$0xff] %v3184
        %3189 = vst [vmem:[#allocation2 + $0x18] sm:$0xff] %v3185
        %p3190 = scmp.eq.s32.totalorder %s39, 1
        // Predicated region
        $region101: #{clip_forward.1} parent=83 // pred_check
          %p3191 = pneg %p3190
        $region102: #{clip_forward.1} parent=83 // pred_check_branch
          %3193 = sbr.rel (%p3191) target = $region104
        $region103: #{clip_forward.1} parent=83 // pred_region
          %v3194 = vld [vmem:[%s14] sm:$0x1]
          %v3195 = vld [vmem:[%s15] sm:$0x1]
          %3196 = vadd.xlane.f32.xlu0 %v3182
          %v3197 = vpop.xlane.xlu0 %3196
          %3198 = vadd.xlane.f32.xlu0 %v3183
          %v3199 = vpop.xlane.xlu0 %3198
          %3200 = vadd.xlane.f32.xlu0 %v3184
          %v3201 = vpop.xlane.xlu0 %3200
          %3202 = vadd.xlane.f32.xlu0 %v3185
          %v3203 = vpop.xlane.xlu0 %3202
          %v3204 = vmul.f32 %v3197, %v825
          %v3205 = vmul.f32 %v3199, %v825
          %v3206 = vmul.f32 %v3201, %v825
          %v3207 = vmul.f32 %v3203, %v825
          %v3208 = vsub.f32 %v3182, %v3204
          %v3209 = vsub.f32 %v3183, %v3205
          %v3210 = vsub.f32 %v3184, %v3206
          %v3211 = vsub.f32 %v3185, %v3207
          %v3212 = vmul.f32 %v3208, %v3208
          %v3213 = vmul.f32 %v3209, %v3209
          %v3214 = vmul.f32 %v3210, %v3210
          %v3215 = vmul.f32 %v3211, %v3211
          %3216 = vadd.xlane.f32.xlu0 %v3212
          %v3217 = vpop.xlane.xlu0 %3216
          %3218 = vadd.xlane.f32.xlu0 %v3213
          %v3219 = vpop.xlane.xlu0 %3218
          %3220 = vadd.xlane.f32.xlu0 %v3214
          %v3221 = vpop.xlane.xlu0 %3220
          %3222 = vadd.xlane.f32.xlu0 %v3215
          %v3223 = vpop.xlane.xlu0 %3222
          %v3224 = vmul.f32 %v3217, %v825
          %v3225 = vmul.f32 %v3219, %v825
          %v3226 = vmul.f32 %v3221, %v825
          %v3227 = vmul.f32 %v3223, %v825
          %v3228 = vadd.f32 %v3224, 1e-05
          %v3229 = vadd.f32 %v3225, 1e-05
          %v3230 = vadd.f32 %v3226, 1e-05
          %v3231 = vadd.f32 %v3227, 1e-05
          %v3232 = vrsqrt.pop %v3228
          %v3233 = vmul.f32 %v3232, %v3228
          %v3234 = vmul.f32 %v3233, %v3232
          %v3235 = vmul.f32 0.5, %v3234
          %v3236 = vsub.f32 1.5, %v3235
          %v3237 = vmul.f32 %v3232, %v3236
          %vm3238 = vweird.f32 %v3228
          %vm3239 = vweird.f32 %v3232
          %vm3240 = vmor %vm3238, %vm3239
          %v3241 = vsel %vm3240, %v3232, %v3237
          %v3242 = vrsqrt.pop %v3229
          %v3243 = vmul.f32 %v3242, %v3229
          %v3244 = vmul.f32 %v3243, %v3242
          %v3245 = vmul.f32 0.5, %v3244
          %v3246 = vsub.f32 1.5, %v3245
          %v3247 = vmul.f32 %v3242, %v3246
          %vm3248 = vweird.f32 %v3229
          %vm3249 = vweird.f32 %v3242
          %vm3250 = vmor %vm3248, %vm3249
          %v3251 = vsel %vm3250, %v3242, %v3247
          %v3252 = vrsqrt.pop %v3230
          %v3253 = vmul.f32 %v3252, %v3230
          %v3254 = vmul.f32 %v3253, %v3252
          %v3255 = vmul.f32 0.5, %v3254
          %v3256 = vsub.f32 1.5, %v3255
          %v3257 = vmul.f32 %v3252, %v3256
          %vm3258 = vweird.f32 %v3230
          %vm3259 = vweird.f32 %v3252
          %vm3260 = vmor %vm3258, %vm3259
          %v3261 = vsel %vm3260, %v3252, %v3257
          %v3262 = vrsqrt.pop %v3231
          %v3263 = vmul.f32 %v3262, %v3231
          %v3264 = vmul.f32 %v3263, %v3262
          %v3265 = vmul.f32 0.5, %v3264
          %v3266 = vsub.f32 1.5, %v3265
          %v3267 = vmul.f32 %v3262, %v3266
          %vm3268 = vweird.f32 %v3231
          %vm3269 = vweird.f32 %v3262
          %vm3270 = vmor %vm3268, %vm3269
          %v3271 = vsel %vm3270, %v3262, %v3267
          %v3272 = vmul.f32 %v3208, %v3241
          %v3273 = vmul.f32 %v3209, %v3251
          %v3274 = vmul.f32 %v3210, %v3261
          %v3275 = vmul.f32 %v3211, %v3271
          %v3277 = vperm.slane %v3194, 0
          %v3279 = vmul.f32 %v3272, %v3277
          %v3280 = vmul.f32 %v3273, %v3277
          %v3281 = vmul.f32 %v3274, %v3277
          %v3282 = vmul.f32 %v3275, %v3277
          %v3284 = vperm.slane %v3195, 0
          %v3286 = vadd.f32 %v3279, %v3284
          %v3287 = vadd.f32 %v3280, %v3284
          %v3288 = vadd.f32 %v3281, %v3284
          %v3289 = vadd.f32 %v3282, %v3284
          %3290 = vst [vmem:[#allocation9] sm:$0xff] %v3286
          %3291 = vst [vmem:[#allocation9 + $0x8] sm:$0xff] %v3287
          %3292 = vst [vmem:[#allocation9 + $0x10] sm:$0xff] %v3288
          %3293 = vst [vmem:[#allocation9 + $0x18] sm:$0xff] %v3289
        $region104: #{clip_forward.1} parent=83 // pred_fallthru
          _
        // Predicated region
        $region105: #{clip_forward.1} parent=83 // pred_check
          %p3294 = pneg %p465
        $region106: #{clip_forward.1} parent=83 // pred_check_branch
          %3296 = sbr.rel (%p3294) target = $region108
        $region107: #{clip_forward.1} parent=83 // pred_region
          %s3297 = smul.u32 2, %s38
          %3299 = vsyncadd [#allocation5], 0
          %s3300 = smul.addr %s3297, 2
          %s3301 = smul.addr %s3300, 8
          %s3302 = scalar_lea.hbm %s16, %s3301
          %s3303 = sshll.u32 [#allocation9], 4
          %s3304 = int_to_ptr.vmem [resolvable:$true] %s3303
          %s3305 = sshll.u32 %s3302, 4
          %s3306 = int_to_ptr.hbm [resolvable:$true] %s3305
          %3311 = dma.vmem_to_hbm [thread:$0]  %s3304, 512, %s3306, [#allocation5], 128, 128, 8
        $region108: #{clip_forward.1} parent=83 // pred_fallthru
          _
        // Predicated region
        $region109: #{clip_forward.1} parent=83 // pred_check
          %p3312 = pneg %p465
        $region110: #{clip_forward.1} parent=83 // pred_check_branch
          %3314 = sbr.rel (%p3312) target = $region112
        $region111: #{clip_forward.1} parent=83 // pred_region
          %3316 = dma.done [#allocation5], 512
        $region112: #{clip_forward.1} parent=83 // pred_fallthru
          _
      $region84: #{clip_forward.1} parent=5 // pred_fallthru
        _
      %p3317 = scmp.le.s32.totalorder 2, %s29
      // Predicated region
      $region113: #{clip_forward.1} parent=5 // pred_check
        %p3318 = pneg %p3317
      $region114: #{clip_forward.1} parent=5 // pred_check_branch
        %3320 = sbr.rel (%p3318) target = $region116
      $region115: #{clip_forward.1} parent=5 // pred_region
        %s3321 = ssub.s32 %s29, 2
      $region116: #{clip_forward.1} parent=5 // pred_fallthru
        _
    $region6: #{clip_forward.1} parent=1 // loop_footer
      %s33 = sadd.s32 1, %s29
    $region7: #{clip_forward.1} parent=1 // loop_footer_branch
      %28 = sbr.rel target = $region3
    $region8: #{clip_forward.1} parent=1 // loop_exit
      _
    %3322 = vsyncpa [#allocation4], 1
    %s3323 = scalar_lea.sflag [#allocation4], 1
    %3324 = vsyncpa %s3323, 1
    %3325 = vsyncpa [#allocation7], 1
    %s3326 = scalar_lea.sflag [#allocation7], 1
    %3327 = vsyncpa %s3326, 1
    %3328 = vsyncpa [#allocation5], 1
    %s3329 = scalar_lea.sflag [#allocation5], 1
    %3330 = vsyncpa %s3329, 1

</llo_original>
